<compile_context>
chip_gen: v7x
topology: tpu7x:2x2x1
jax: 0.10.0
libtpu: 0.0.40
codegen_flags: <defaults>
</compile_context>

<pallas_src>
import jax
import jax.numpy as jnp
from jax.experimental import pallas as pl
from jax.experimental.pallas import tpu as pltpu

# ---- model hyper-params (small, consistent with the module) ----
HID = 32            # hid_dim
N_HEADS = 4         # n_heads
HEAD_DIM = HID // N_HEADS
PF = 64             # pf_dim
B = 2               # batch
LT = 8              # target sequence length
LS = 8              # source sequence length

NEG_INF = -1e10
LN_EPS = 1e-5
INV_SCALE = 1.0 / (HEAD_DIM ** 0.5)

# ---- packed-parameter layout ----
SLAB_W = 128                        # lane width of both parameter slabs
R_SA_QKV = 0                        # (HID, 3*HID) self-attn fused QKV (Q pre-scaled)
R_SA_O = R_SA_QKV + HID             # (HID, HID)
R_CA_Q = R_SA_O + HID               # (HID, HID)   cross-attn Q (pre-scaled)
R_CA_KV = R_CA_Q + HID              # (HID, 2*HID) cross-attn fused KV
R_CA_O = R_CA_KV + HID              # (HID, HID)
R_FF_1 = R_CA_O + HID               # (HID, PF)
R_FF_2 = R_FF_1 + HID               # (PF, HID)
W_ROWS = R_FF_2 + PF                # 256 rows total

(V_SA_BQKV, V_SA_BO, V_LN1_G, V_LN1_B,
 V_CA_BQ, V_CA_BKV, V_CA_BO, V_LN2_G, V_LN2_B,
 V_FF_B1, V_FF_B2, V_LN3_G, V_LN3_B) = range(13)
V_ROWS = 16                         # padded to a multiple of 8 sublanes


# ---------------------------------------------------------------------------
# The fused DecoderLayer kernel (whole batch in one invocation)
# ---------------------------------------------------------------------------
def decoder_layer_kernel(xt_ref, xs_ref, smask_ref, cmask_ref, w_ref, v_ref, out_ref):
    f32 = jnp.float32

    def wmat(row, k, n):            # static slice of the packed weight slab (free view + load)
        return w_ref[row:row + k, :n]

    def vrow(row, n):               # static (1, n) row of the bias/LN slab
        return v_ref[row:row + 1, :n]

    def layer_norm(x, g, b):
        mu = jnp.mean(x, axis=-1, keepdims=True)
        var = jnp.mean((x - mu) ** 2, axis=-1, keepdims=True)
        return (x - mu) * jax.lax.rsqrt(var + LN_EPS) * g + b

    def mha(q, k, v, mask_add, wo, bo, attn_col0=None):
        """Multi-head attention over flattened token slabs.

        q: (T, HID) (scale folded into weights), k/v: (S, HID),
        mask_add: (T, S) additive mask (0 keep / -1e10 masked).
        If attn_col0 is given, head h's probabilities go directly into
        out_ref[:, attn_col0 + h*S : attn_col0 + (h+1)*S] (no concat).
        Head outputs are accumulated via row-blocks of W_o (no head concat).
        """
        s_len = k.shape[0]
        out = None
        for h in range(N_HEADS):    # n_heads is tiny; static unroll
            sl = slice(h * HEAD_DIM, (h + 1) * HEAD_DIM)
            energy = jax.lax.dot_general(
                q[:, sl], k[:, sl],
                dimension_numbers=(((1,), (1,)), ((), ())),   # contract head dims, no K.T
                preferred_element_type=f32)
            energy = energy + mask_add
            e = jnp.exp(energy - jnp.max(energy, axis=-1, keepdims=True))
            attn = e / jnp.sum(e, axis=-1, keepdims=True)     # exact softmax
            if attn_col0 is not None:
                out_ref[:, attn_col0 + h * s_len: attn_col0 + (h + 1) * s_len] = attn
            oh = jnp.dot(attn, v[:, sl], preferred_element_type=f32)
            contrib = jnp.dot(oh, wo[sl, :], preferred_element_type=f32)
            out = contrib if out is None else out + contrib
        return out + bo

    xt = xt_ref[...]                # (B*Lt, HID)
    xs = xs_ref[...]                # (B*Ls, HID)
    smask = smask_ref[...]          # (B*Lt, B*Lt) additive block-diag causal mask
    cmask = cmask_ref[...]          # (B*Lt, B*Ls) additive block-diag padding mask

    # ---- self attention + residual + LayerNorm (all tokens at once) ----
    qkv = jnp.dot(xt, wmat(R_SA_QKV, HID, 3 * HID),
                  preferred_element_type=f32) + vrow(V_SA_BQKV, 3 * HID)
    sa = mha(qkv[:, :HID], qkv[:, HID:2 * HID], qkv[:, 2 * HID:],
             smask, wmat(R_SA_O, HID, HID), vrow(V_SA_BO, HID))
    x1 = layer_norm(xt + sa, vrow(V_LN1_G, HID), vrow(V_LN1_B, HID))

    # ---- encoder (cross) attention + residual + LayerNorm ----
    q = jnp.dot(x1, wmat(R_CA_Q, HID, HID),
                preferred_element_type=f32) + vrow(V_CA_BQ, HID)
    kv = jnp.dot(xs, wmat(R_CA_KV, HID, 2 * HID),
                 preferred_element_type=f32) + vrow(V_CA_BKV, 2 * HID)
    ca = mha(q, kv[:, :HID], kv[:, HID:], cmask,
             wmat(R_CA_O, HID, HID), vrow(V_CA_BO, HID),
             attn_col0=HID)
    x2 = layer_norm(x1 + ca, vrow(V_LN2_G, HID), vrow(V_LN2_B, HID))

    # ---- positionwise feedforward + residual + LayerNorm ----
    hdn = jnp.maximum(
        jnp.dot(x2, wmat(R_FF_1, HID, PF), preferred_element_type=f32)
        + vrow(V_FF_B1, PF), 0.0)
    ff = jnp.dot(hdn, wmat(R_FF_2, PF, HID),
                 preferred_element_type=f32) + vrow(V_FF_B2, HID)
    x3 = layer_norm(x2 + ff, vrow(V_LN3_G, HID), vrow(V_LN3_B, HID))

    out_ref[:, :HID] = x3


# ---------------------------------------------------------------------------
# Wrapper: parameter packing, mask precompute, pallas_call
# ---------------------------------------------------------------------------
def _pack_params(params):
    """Fuse QKV/KV, fold the attention scale into Q, pack into 2 slabs."""
    (sa_wq, sa_bq, sa_wk, sa_bk, sa_wv, sa_bv, sa_wo, sa_bo,
     ln1_g, ln1_b,
     ca_wq, ca_bq, ca_wk, ca_bk, ca_wv, ca_bv, ca_wo, ca_bo,
     ln2_g, ln2_b,
     ff_w1, ff_b1, ff_w2, ff_b2,
     ln3_g, ln3_b) = params

    sa_wqkv = jnp.concatenate([sa_wq * INV_SCALE, sa_wk, sa_wv], axis=1)   # (H, 3H)
    sa_bqkv = jnp.concatenate([sa_bq * INV_SCALE, sa_bk, sa_bv], axis=1)   # (1, 3H)
    ca_wkv = jnp.concatenate([ca_wk, ca_wv], axis=1)                       # (H, 2H)
    ca_bkv = jnp.concatenate([ca_bk, ca_bv], axis=1)                       # (1, 2H)

    def pad_cols(a):
        return jnp.pad(a.astype(jnp.float32), ((0, 0), (0, SLAB_W - a.shape[1])))

    w_slab = jnp.concatenate(
        [pad_cols(w) for w in
         (sa_wqkv, sa_wo, ca_wq * INV_SCALE, ca_wkv, ca_wo, ff_w1, ff_w2)], axis=0)
    v_rows = [sa_bqkv, sa_bo, ln1_g, ln1_b,
              ca_bq * INV_SCALE, ca_bkv, ca_bo, ln2_g, ln2_b,
              ff_b1, ff_b2, ln3_g, ln3_b]
    v_slab = jnp.concatenate([pad_cols(v) for v in v_rows], axis=0)
    v_slab = jnp.pad(v_slab, ((0, V_ROWS - v_slab.shape[0]), (0, 0)))
    return w_slab, v_slab            # (W_ROWS, 128), (V_ROWS, 128)


def _block_diag_masks(trg_mask, src_mask, b, lt, ls):
    """Additive (0 / -1e10) block-diagonal masks for the flattened token slabs."""
    keep_t = trg_mask[:, 0] != 0              # (B, Lt, Lt)
    keep_s = src_mask[:, 0, 0] != 0           # (B, Ls)
    smask = jnp.full((b * lt, b * lt), NEG_INF, jnp.float32)
    cmask = jnp.full((b * lt, b * ls), NEG_INF, jnp.float32)
    for i in range(b):                        # static Python loop; B is tiny and static
        smask = smask.at[i * lt:(i + 1) * lt, i * lt:(i + 1) * lt].set(
            jnp.where(keep_t[i], 0.0, NEG_INF).astype(jnp.float32))
        cmask = cmask.at[i * lt:(i + 1) * lt, i * ls:(i + 1) * ls].set(
            jnp.where(keep_s[i][None, :], 0.0, NEG_INF).astype(jnp.float32))
    return smask, cmask


def decoder_layer(trg, enc_src, trg_mask, src_mask, params):
    b, lt, hid = trg.shape
    ls = enc_src.shape[1]
    bt, bs = b * lt, b * ls

    w_slab, v_slab = _pack_params(params)
    smask, cmask = _block_diag_masks(trg_mask, src_mask, b, lt, ls)

    xt = trg.reshape(bt, hid).astype(jnp.float32)
    xs = enc_src.reshape(bs, hid).astype(jnp.float32)

    out_cols = hid + N_HEADS * bs     # fused output: [ trg_out | per-head cross-attn probs ]
    inputs = (xt, xs, smask, cmask, w_slab, v_slab)

    def full_spec(shape):
        nd = len(shape)
        return pl.BlockSpec(shape, lambda i, _nd=nd: (0,) * _nd)

    slab = pl.pallas_call(
        decoder_layer_kernel,
        grid=(1,),                                   # whole (tiny) problem in one grid step
        in_specs=[full_spec(a.shape) for a in inputs],
        out_specs=full_spec((bt, out_cols)),
        out_shape=jax.ShapeDtypeStruct((bt, out_cols), jnp.float32),
        compiler_params=pltpu.CompilerParams(dimension_semantics=("arbitrary",)),
    )(*inputs)

    out = slab[:, :hid].reshape(b, lt, hid)
    # (B*Lt, n_heads*B*Ls) -> take per-batch diagonal blocks -> (B, n_heads, Lt, Ls)
    attn_parts = slab[:, hid:].reshape(b, lt, N_HEADS, b, ls)
    attn = jnp.stack([attn_parts[i, :, :, i, :] for i in range(b)], axis=0)
    attn = attn.transpose(0, 2, 1, 3)
    return out, attn


# ---------------------------------------------------------------------------
# Deterministic parameter construction + pure-JAX reference
# ---------------------------------------------------------------------------
def make_params(key):
    keys = iter(jax.random.split(key, 32))

    def linear(in_dim, out_dim):
        w = jax.random.normal(next(keys), (in_dim, out_dim), jnp.float32) / jnp.sqrt(in_dim)
        bb = jax.random.normal(next(keys), (1, out_dim), jnp.float32) * 0.01
        return w, bb

    def attn_block():
        ps = []
        for _ in range(4):            # q, k, v, o projections
            w, bb = linear(HID, HID)
            ps += [w, bb]
        return ps

    ln = lambda: [jnp.ones((1, HID), jnp.float32), jnp.zeros((1, HID), jnp.float32)]

    params = []
    params += attn_block()            # self attention
    params += ln()                    # self_attn_layer_norm
    params += attn_block()            # encoder attention
    params += ln()                    # enc_attn_layer_norm
    w1, b1 = linear(HID, PF)
    w2, b2 = linear(PF, HID)
    params += [w1, b1, w2, b2]        # positionwise feedforward
    params += ln()                    # ff_layer_norm
    return params


def reference(trg, enc_src, trg_mask, src_mask, params):
    (sa_wq, sa_bq, sa_wk, sa_bk, sa_wv, sa_bv, sa_wo, sa_bo,
     ln1_g, ln1_b,
     ca_wq, ca_bq, ca_wk, ca_bk, ca_wv, ca_bv, ca_wo, ca_bo,
     ln2_g, ln2_b,
     ff_w1, ff_b1, ff_w2, ff_b2,
     ln3_g, ln3_b) = params

    def mha(xq, xkv, mask, wq, bq, wk, bk, wv, bv, wo, bo):
        bsz, lq, _ = xq.shape
        lk = xkv.shape[1]
        q = (xq @ wq + bq).reshape(bsz, lq, N_HEADS, HEAD_DIM).transpose(0, 2, 1, 3)
        k = (xkv @ wk + bk).reshape(bsz, lk, N_HEADS, HEAD_DIM).transpose(0, 2, 1, 3)
        v = (xkv @ wv + bv).reshape(bsz, lk, N_HEADS, HEAD_DIM).transpose(0, 2, 1, 3)
        energy = jnp.einsum("bhqd,bhkd->bhqk", q, k) / jnp.sqrt(jnp.float32(HEAD_DIM))
        energy = jnp.where(mask == 0, NEG_INF, energy)
        attn = jax.nn.softmax(energy, axis=-1)
        x = jnp.einsum("bhqk,bhkd->bhqd", attn, v)
        x = x.transpose(0, 2, 1, 3).reshape(bsz, lq, HID)
        return x @ wo + bo, attn

    def ln(x, g, bb):
        mu = x.mean(-1, keepdims=True)
        var = ((x - mu) ** 2).mean(-1, keepdims=True)
        return (x - mu) / jnp.sqrt(var + LN_EPS) * g + bb

    # Full-f32 matmuls so the reference is a stable gold value on TPU.
    with jax.default_matmul_precision("float32"):
        sa, _ = mha(trg, trg, trg_mask, sa_wq, sa_bq, sa_wk, sa_bk, sa_wv, sa_bv, sa_wo, sa_bo)
        t1 = ln(trg + sa, ln1_g, ln1_b)
        ca, attn = mha(t1, enc_src, src_mask, ca_wq, ca_bq, ca_wk, ca_bk, ca_wv, ca_bv, ca_wo, ca_bo)
        t2 = ln(t1 + ca, ln2_g, ln2_b)
        ff = jnp.maximum(t2 @ ff_w1 + ff_b1, 0.0) @ ff_w2 + ff_b2
        t3 = ln(t2 + ff, ln3_g, ln3_b)
    return t3, attn


# ---------------------------------------------------------------------------
if __name__ == "__main__":
    key = jax.random.PRNGKey(0)
    k_trg, k_enc, k_par = jax.random.split(key, 3)

    trg = jax.random.normal(k_trg, (B, LT, HID), jnp.float32)
    enc_src = jax.random.normal(k_enc, (B, LS, HID), jnp.float32)

    # causal target mask, full source mask (nonzero = keep), matching the PyTorch convention
    trg_mask = jnp.broadcast_to(
        jnp.tril(jnp.ones((LT, LT), jnp.float32))[None, None], (B, 1, LT, LT))
    src_mask = jnp.ones((B, 1, 1, LS), jnp.float32)

    params = make_params(k_par)

    out, attn = decoder_layer(trg, enc_src, trg_mask, src_mask, params)
    out = jax.block_until_ready(out)
    attn = jax.block_until_ready(attn)

    ref_out, ref_attn = reference(trg, enc_src, trg_mask, src_mask, params)

    assert out.shape == (B, LT, HID) and attn.shape == (B, N_HEADS, LT, LS)
    # Tolerance covers MXU f32 multi-pass matmul differences between Mosaic and XLA;
    # a real logic bug would produce O(0.1-1) errors on these LayerNorm-scaled outputs.
    assert jnp.allclose(out, ref_out, atol=2e-2, rtol=2e-2), "output mismatch vs reference"
    assert jnp.allclose(attn, ref_attn, atol=2e-2, rtol=2e-2), "attention mismatch vs reference"

    print("KERNEL_OK")
</pallas_src>

<mosaic_0001>
module attributes {stable_mosaic.version = 11 : i64} {
  func.func @decoder_layer_kernel(%arg0: i32, %arg1: memref<16x32xf32, #tpu.memory_space<vmem>>, %arg2: memref<16x32xf32, #tpu.memory_space<vmem>>, %arg3: memref<16x16xf32, #tpu.memory_space<vmem>>, %arg4: memref<16x16xf32, #tpu.memory_space<vmem>>, %arg5: memref<256x128xf32, #tpu.memory_space<vmem>>, %arg6: memref<16x128xf32, #tpu.memory_space<vmem>>, %arg7: memref<16x96xf32, #tpu.memory_space<vmem>>) attributes {dimension_semantics = [#tpu.dimension_semantics<arbitrary>], iteration_bounds = array<i64: 1>, scalar_prefetch = 0 : i64, scratch_operands = 0 : i64, tpu.core_type = #tpu.core_type<tc>, window_params = [{pipeline_mode = #tpu.pipeline_mode<synchronous>, transform_indices = @transform_0, window_bounds = array<i64: 16, 32>}, {pipeline_mode = #tpu.pipeline_mode<synchronous>, transform_indices = @transform_1, window_bounds = array<i64: 16, 32>}, {pipeline_mode = #tpu.pipeline_mode<synchronous>, transform_indices = @transform_2, window_bounds = array<i64: 16, 16>}, {pipeline_mode = #tpu.pipeline_mode<synchronous>, transform_indices = @transform_3, window_bounds = array<i64: 16, 16>}, {pipeline_mode = #tpu.pipeline_mode<synchronous>, transform_indices = @transform_4, window_bounds = array<i64: 256, 128>}, {pipeline_mode = #tpu.pipeline_mode<synchronous>, transform_indices = @transform_5, window_bounds = array<i64: 16, 128>}, {pipeline_mode = #tpu.pipeline_mode<synchronous>, transform_indices = @transform_6, window_bounds = array<i64: 16, 96>}]} {
    %c0 = arith.constant 0 : index
    %c0_0 = arith.constant 0 : index
    %0 = vector.load %arg1[%c0, %c0_0] : memref<16x32xf32, #tpu.memory_space<vmem>>, vector<16x32xf32>
    %c0_1 = arith.constant 0 : index
    %c0_2 = arith.constant 0 : index
    %1 = vector.load %arg2[%c0_1, %c0_2] : memref<16x32xf32, #tpu.memory_space<vmem>>, vector<16x32xf32>
    %c0_3 = arith.constant 0 : index
    %c0_4 = arith.constant 0 : index
    %2 = vector.load %arg3[%c0_3, %c0_4] : memref<16x16xf32, #tpu.memory_space<vmem>>, vector<16x16xf32>
    %c0_5 = arith.constant 0 : index
    %c0_6 = arith.constant 0 : index
    %3 = vector.load %arg4[%c0_5, %c0_6] : memref<16x16xf32, #tpu.memory_space<vmem>>, vector<16x16xf32>
    %c0_7 = arith.constant 0 : index
    %c0_8 = arith.constant 0 : index
    %4 = vector.load %arg5[%c0_7, %c0_8] : memref<256x128xf32, #tpu.memory_space<vmem>>, vector<32x96xf32>
    %cst = arith.constant dense<0.000000e+00> : vector<16x96xf32>
    %5 = tpu.matmul %0, %4, %cst {dimension_numbers = #tpu.dot_dimension_numbers<[1], [0], [0], [1], [0, 0, 1, 1], [], []>} : vector<16x32xf32>, vector<32x96xf32>, vector<16x96xf32> -> vector<16x96xf32>
    %c0_9 = arith.constant 0 : index
    %c0_10 = arith.constant 0 : index
    %6 = vector.load %arg6[%c0_9, %c0_10] : memref<16x128xf32, #tpu.memory_space<vmem>>, vector<1x96xf32>
    %7 = vector.broadcast %6 : vector<1x96xf32> to vector<16x96xf32>
    %8 = arith.addf %5, %7 : vector<16x96xf32>
    %9 = vector.extract_strided_slice %8 {offsets = [0, 0], sizes = [16, 32], strides = [1, 1]} : vector<16x96xf32> to vector<16x32xf32>
    %10 = vector.extract_strided_slice %8 {offsets = [0, 32], sizes = [16, 32], strides = [1, 1]} : vector<16x96xf32> to vector<16x32xf32>
    %11 = vector.extract_strided_slice %8 {offsets = [0, 64], sizes = [16, 32], strides = [1, 1]} : vector<16x96xf32> to vector<16x32xf32>
    %c32 = arith.constant 32 : index
    %c0_11 = arith.constant 0 : index
    %12 = vector.load %arg5[%c32, %c0_11] : memref<256x128xf32, #tpu.memory_space<vmem>>, vector<32x32xf32>
    %c1 = arith.constant 1 : index
    %c0_12 = arith.constant 0 : index
    %13 = vector.load %arg6[%c1, %c0_12] : memref<16x128xf32, #tpu.memory_space<vmem>>, vector<1x32xf32>
    %14 = vector.extract_strided_slice %9 {offsets = [0, 0], sizes = [16, 8], strides = [1, 1]} : vector<16x32xf32> to vector<16x8xf32>
    %15 = vector.extract_strided_slice %10 {offsets = [0, 0], sizes = [16, 8], strides = [1, 1]} : vector<16x32xf32> to vector<16x8xf32>
    %cst_13 = arith.constant dense<0.000000e+00> : vector<16x16xf32>
    %16 = tpu.matmul %14, %15, %cst_13 {dimension_numbers = #tpu.dot_dimension_numbers<[1], [1], [0], [0], [0, 0, 1, 0], [], []>} : vector<16x8xf32>, vector<16x8xf32>, vector<16x16xf32> -> vector<16x16xf32>
    %17 = arith.addf %16, %2 : vector<16x16xf32>
    %cst_14 = arith.constant dense<0xFF800000> : vector<16xf32>
    %18 = vector.multi_reduction <maximumf>, %17, %cst_14 [1] : vector<16x16xf32> to vector<16xf32>
    %19 = vector.shape_cast %18 : vector<16xf32> to vector<16x1xf32>
    %20 = vector.broadcast %19 : vector<16x1xf32> to vector<16x16xf32>
    %21 = arith.subf %17, %20 : vector<16x16xf32>
    %22 = math.exp %21 : vector<16x16xf32>
    %cst_15 = arith.constant dense<0.000000e+00> : vector<16xf32>
    %23 = vector.multi_reduction <add>, %22, %cst_15 [1] : vector<16x16xf32> to vector<16xf32>
    %24 = vector.shape_cast %23 : vector<16xf32> to vector<16x1xf32>
    %25 = vector.broadcast %24 : vector<16x1xf32> to vector<16x16xf32>
    %26 = arith.divf %22, %25 : vector<16x16xf32>
    %27 = vector.extract_strided_slice %11 {offsets = [0, 0], sizes = [16, 8], strides = [1, 1]} : vector<16x32xf32> to vector<16x8xf32>
    %cst_16 = arith.constant dense<0.000000e+00> : vector<16x8xf32>
    %28 = tpu.matmul %26, %27, %cst_16 {dimension_numbers = #tpu.dot_dimension_numbers<[1], [0], [0], [1], [0, 0, 1, 1], [], []>} : vector<16x16xf32>, vector<16x8xf32>, vector<16x8xf32> -> vector<16x8xf32>
    %29 = vector.extract_strided_slice %12 {offsets = [0, 0], sizes = [8, 32], strides = [1, 1]} : vector<32x32xf32> to vector<8x32xf32>
    %cst_17 = arith.constant dense<0.000000e+00> : vector<16x32xf32>
    %30 = tpu.matmul %28, %29, %cst_17 {dimension_numbers = #tpu.dot_dimension_numbers<[1], [0], [0], [1], [0, 0, 1, 1], [], []>} : vector<16x8xf32>, vector<8x32xf32>, vector<16x32xf32> -> vector<16x32xf32>
    %31 = vector.extract_strided_slice %9 {offsets = [0, 8], sizes = [16, 8], strides = [1, 1]} : vector<16x32xf32> to vector<16x8xf32>
    %32 = vector.extract_strided_slice %10 {offsets = [0, 8], sizes = [16, 8], strides = [1, 1]} : vector<16x32xf32> to vector<16x8xf32>
    %cst_18 = arith.constant dense<0.000000e+00> : vector<16x16xf32>
    %33 = tpu.matmul %31, %32, %cst_18 {dimension_numbers = #tpu.dot_dimension_numbers<[1], [1], [0], [0], [0, 0, 1, 0], [], []>} : vector<16x8xf32>, vector<16x8xf32>, vector<16x16xf32> -> vector<16x16xf32>
    %34 = arith.addf %33, %2 : vector<16x16xf32>
    %cst_19 = arith.constant dense<0xFF800000> : vector<16xf32>
    %35 = vector.multi_reduction <maximumf>, %34, %cst_19 [1] : vector<16x16xf32> to vector<16xf32>
    %36 = vector.shape_cast %35 : vector<16xf32> to vector<16x1xf32>
    %37 = vector.broadcast %36 : vector<16x1xf32> to vector<16x16xf32>
    %38 = arith.subf %34, %37 : vector<16x16xf32>
    %39 = math.exp %38 : vector<16x16xf32>
    %cst_20 = arith.constant dense<0.000000e+00> : vector<16xf32>
    %40 = vector.multi_reduction <add>, %39, %cst_20 [1] : vector<16x16xf32> to vector<16xf32>
    %41 = vector.shape_cast %40 : vector<16xf32> to vector<16x1xf32>
    %42 = vector.broadcast %41 : vector<16x1xf32> to vector<16x16xf32>
    %43 = arith.divf %39, %42 : vector<16x16xf32>
    %44 = vector.extract_strided_slice %11 {offsets = [0, 8], sizes = [16, 8], strides = [1, 1]} : vector<16x32xf32> to vector<16x8xf32>
    %cst_21 = arith.constant dense<0.000000e+00> : vector<16x8xf32>
    %45 = tpu.matmul %43, %44, %cst_21 {dimension_numbers = #tpu.dot_dimension_numbers<[1], [0], [0], [1], [0, 0, 1, 1], [], []>} : vector<16x16xf32>, vector<16x8xf32>, vector<16x8xf32> -> vector<16x8xf32>
    %46 = vector.extract_strided_slice %12 {offsets = [8, 0], sizes = [8, 32], strides = [1, 1]} : vector<32x32xf32> to vector<8x32xf32>
    %cst_22 = arith.constant dense<0.000000e+00> : vector<16x32xf32>
    %47 = tpu.matmul %45, %46, %cst_22 {dimension_numbers = #tpu.dot_dimension_numbers<[1], [0], [0], [1], [0, 0, 1, 1], [], []>} : vector<16x8xf32>, vector<8x32xf32>, vector<16x32xf32> -> vector<16x32xf32>
    %48 = arith.addf %30, %47 : vector<16x32xf32>
    %49 = vector.extract_strided_slice %9 {offsets = [0, 16], sizes = [16, 8], strides = [1, 1]} : vector<16x32xf32> to vector<16x8xf32>
    %50 = vector.extract_strided_slice %10 {offsets = [0, 16], sizes = [16, 8], strides = [1, 1]} : vector<16x32xf32> to vector<16x8xf32>
    %cst_23 = arith.constant dense<0.000000e+00> : vector<16x16xf32>
    %51 = tpu.matmul %49, %50, %cst_23 {dimension_numbers = #tpu.dot_dimension_numbers<[1], [1], [0], [0], [0, 0, 1, 0], [], []>} : vector<16x8xf32>, vector<16x8xf32>, vector<16x16xf32> -> vector<16x16xf32>
    %52 = arith.addf %51, %2 : vector<16x16xf32>
    %cst_24 = arith.constant dense<0xFF800000> : vector<16xf32>
    %53 = vector.multi_reduction <maximumf>, %52, %cst_24 [1] : vector<16x16xf32> to vector<16xf32>
    %54 = vector.shape_cast %53 : vector<16xf32> to vector<16x1xf32>
    %55 = vector.broadcast %54 : vector<16x1xf32> to vector<16x16xf32>
    %56 = arith.subf %52, %55 : vector<16x16xf32>
    %57 = math.exp %56 : vector<16x16xf32>
    %cst_25 = arith.constant dense<0.000000e+00> : vector<16xf32>
    %58 = vector.multi_reduction <add>, %57, %cst_25 [1] : vector<16x16xf32> to vector<16xf32>
    %59 = vector.shape_cast %58 : vector<16xf32> to vector<16x1xf32>
    %60 = vector.broadcast %59 : vector<16x1xf32> to vector<16x16xf32>
    %61 = arith.divf %57, %60 : vector<16x16xf32>
    %62 = vector.extract_strided_slice %11 {offsets = [0, 16], sizes = [16, 8], strides = [1, 1]} : vector<16x32xf32> to vector<16x8xf32>
    %cst_26 = arith.constant dense<0.000000e+00> : vector<16x8xf32>
    %63 = tpu.matmul %61, %62, %cst_26 {dimension_numbers = #tpu.dot_dimension_numbers<[1], [0], [0], [1], [0, 0, 1, 1], [], []>} : vector<16x16xf32>, vector<16x8xf32>, vector<16x8xf32> -> vector<16x8xf32>
    %64 = vector.extract_strided_slice %12 {offsets = [16, 0], sizes = [8, 32], strides = [1, 1]} : vector<32x32xf32> to vector<8x32xf32>
    %cst_27 = arith.constant dense<0.000000e+00> : vector<16x32xf32>
    %65 = tpu.matmul %63, %64, %cst_27 {dimension_numbers = #tpu.dot_dimension_numbers<[1], [0], [0], [1], [0, 0, 1, 1], [], []>} : vector<16x8xf32>, vector<8x32xf32>, vector<16x32xf32> -> vector<16x32xf32>
    %66 = arith.addf %48, %65 : vector<16x32xf32>
    %67 = vector.extract_strided_slice %9 {offsets = [0, 24], sizes = [16, 8], strides = [1, 1]} : vector<16x32xf32> to vector<16x8xf32>
    %68 = vector.extract_strided_slice %10 {offsets = [0, 24], sizes = [16, 8], strides = [1, 1]} : vector<16x32xf32> to vector<16x8xf32>
    %cst_28 = arith.constant dense<0.000000e+00> : vector<16x16xf32>
    %69 = tpu.matmul %67, %68, %cst_28 {dimension_numbers = #tpu.dot_dimension_numbers<[1], [1], [0], [0], [0, 0, 1, 0], [], []>} : vector<16x8xf32>, vector<16x8xf32>, vector<16x16xf32> -> vector<16x16xf32>
    %70 = arith.addf %69, %2 : vector<16x16xf32>
    %cst_29 = arith.constant dense<0xFF800000> : vector<16xf32>
    %71 = vector.multi_reduction <maximumf>, %70, %cst_29 [1] : vector<16x16xf32> to vector<16xf32>
    %72 = vector.shape_cast %71 : vector<16xf32> to vector<16x1xf32>
    %73 = vector.broadcast %72 : vector<16x1xf32> to vector<16x16xf32>
    %74 = arith.subf %70, %73 : vector<16x16xf32>
    %75 = math.exp %74 : vector<16x16xf32>
    %cst_30 = arith.constant dense<0.000000e+00> : vector<16xf32>
    %76 = vector.multi_reduction <add>, %75, %cst_30 [1] : vector<16x16xf32> to vector<16xf32>
    %77 = vector.shape_cast %76 : vector<16xf32> to vector<16x1xf32>
    %78 = vector.broadcast %77 : vector<16x1xf32> to vector<16x16xf32>
    %79 = arith.divf %75, %78 : vector<16x16xf32>
    %80 = vector.extract_strided_slice %11 {offsets = [0, 24], sizes = [16, 8], strides = [1, 1]} : vector<16x32xf32> to vector<16x8xf32>
    %cst_31 = arith.constant dense<0.000000e+00> : vector<16x8xf32>
    %81 = tpu.matmul %79, %80, %cst_31 {dimension_numbers = #tpu.dot_dimension_numbers<[1], [0], [0], [1], [0, 0, 1, 1], [], []>} : vector<16x16xf32>, vector<16x8xf32>, vector<16x8xf32> -> vector<16x8xf32>
    %82 = vector.extract_strided_slice %12 {offsets = [24, 0], sizes = [8, 32], strides = [1, 1]} : vector<32x32xf32> to vector<8x32xf32>
    %cst_32 = arith.constant dense<0.000000e+00> : vector<16x32xf32>
    %83 = tpu.matmul %81, %82, %cst_32 {dimension_numbers = #tpu.dot_dimension_numbers<[1], [0], [0], [1], [0, 0, 1, 1], [], []>} : vector<16x8xf32>, vector<8x32xf32>, vector<16x32xf32> -> vector<16x32xf32>
    %84 = arith.addf %66, %83 : vector<16x32xf32>
    %85 = vector.broadcast %13 : vector<1x32xf32> to vector<16x32xf32>
    %86 = arith.addf %84, %85 : vector<16x32xf32>
    %87 = arith.addf %0, %86 : vector<16x32xf32>
    %c2 = arith.constant 2 : index
    %c0_33 = arith.constant 0 : index
    %88 = vector.load %arg6[%c2, %c0_33] : memref<16x128xf32, #tpu.memory_space<vmem>>, vector<1x32xf32>
    %c3 = arith.constant 3 : index
    %c0_34 = arith.constant 0 : index
    %89 = vector.load %arg6[%c3, %c0_34] : memref<16x128xf32, #tpu.memory_space<vmem>>, vector<1x32xf32>
    %cst_35 = arith.constant dense<0.000000e+00> : vector<16xf32>
    %90 = vector.multi_reduction <add>, %87, %cst_35 [1] : vector<16x32xf32> to vector<16xf32>
    %91 = vector.shape_cast %90 : vector<16xf32> to vector<16x1xf32>
    %cst_36 = arith.constant 3.200000e+01 : f32
    %92 = vector.broadcast %cst_36 : f32 to vector<16x1xf32>
    %93 = arith.divf %91, %92 : vector<16x1xf32>
    %94 = vector.broadcast %93 : vector<16x1xf32> to vector<16x32xf32>
    %95 = arith.subf %87, %94 : vector<16x32xf32>
    %96 = arith.mulf %95, %95 : vector<16x32xf32>
    %cst_37 = arith.constant dense<0.000000e+00> : vector<16xf32>
    %97 = vector.multi_reduction <add>, %96, %cst_37 [1] : vector<16x32xf32> to vector<16xf32>
    %98 = vector.shape_cast %97 : vector<16xf32> to vector<16x1xf32>
    %cst_38 = arith.constant 3.200000e+01 : f32
    %99 = vector.broadcast %cst_38 : f32 to vector<16x1xf32>
    %100 = arith.divf %98, %99 : vector<16x1xf32>
    %101 = vector.broadcast %93 : vector<16x1xf32> to vector<16x32xf32>
    %102 = arith.subf %87, %101 : vector<16x32xf32>
    %cst_39 = arith.constant 9.99999974E-6 : f32
    %103 = vector.broadcast %cst_39 : f32 to vector<16x1xf32>
    %104 = arith.addf %100, %103 : vector<16x1xf32>
    %105 = math.rsqrt %104 : vector<16x1xf32>
    %106 = vector.broadcast %105 : vector<16x1xf32> to vector<16x32xf32>
    %107 = arith.mulf %102, %106 : vector<16x32xf32>
    %108 = vector.broadcast %88 : vector<1x32xf32> to vector<16x32xf32>
    %109 = arith.mulf %107, %108 : vector<16x32xf32>
    %110 = vector.broadcast %89 : vector<1x32xf32> to vector<16x32xf32>
    %111 = arith.addf %109, %110 : vector<16x32xf32>
    %c64 = arith.constant 64 : index
    %c0_40 = arith.constant 0 : index
    %112 = vector.load %arg5[%c64, %c0_40] : memref<256x128xf32, #tpu.memory_space<vmem>>, vector<32x32xf32>
    %cst_41 = arith.constant dense<0.000000e+00> : vector<16x32xf32>
    %113 = tpu.matmul %111, %112, %cst_41 {dimension_numbers = #tpu.dot_dimension_numbers<[1], [0], [0], [1], [0, 0, 1, 1], [], []>} : vector<16x32xf32>, vector<32x32xf32>, vector<16x32xf32> -> vector<16x32xf32>
    %c4 = arith.constant 4 : index
    %c0_42 = arith.constant 0 : index
    %114 = vector.load %arg6[%c4, %c0_42] : memref<16x128xf32, #tpu.memory_space<vmem>>, vector<1x32xf32>
    %115 = vector.broadcast %114 : vector<1x32xf32> to vector<16x32xf32>
    %116 = arith.addf %113, %115 : vector<16x32xf32>
    %c96 = arith.constant 96 : index
    %c0_43 = arith.constant 0 : index
    %117 = vector.load %arg5[%c96, %c0_43] : memref<256x128xf32, #tpu.memory_space<vmem>>, vector<32x64xf32>
    %cst_44 = arith.constant dense<0.000000e+00> : vector<16x64xf32>
    %118 = tpu.matmul %1, %117, %cst_44 {dimension_numbers = #tpu.dot_dimension_numbers<[1], [0], [0], [1], [0, 0, 1, 1], [], []>} : vector<16x32xf32>, vector<32x64xf32>, vector<16x64xf32> -> vector<16x64xf32>
    %c5 = arith.constant 5 : index
    %c0_45 = arith.constant 0 : index
    %119 = vector.load %arg6[%c5, %c0_45] : memref<16x128xf32, #tpu.memory_space<vmem>>, vector<1x64xf32>
    %120 = vector.broadcast %119 : vector<1x64xf32> to vector<16x64xf32>
    %121 = arith.addf %118, %120 : vector<16x64xf32>
    %122 = vector.extract_strided_slice %121 {offsets = [0, 0], sizes = [16, 32], strides = [1, 1]} : vector<16x64xf32> to vector<16x32xf32>
    %123 = vector.extract_strided_slice %121 {offsets = [0, 32], sizes = [16, 32], strides = [1, 1]} : vector<16x64xf32> to vector<16x32xf32>
    %c128 = arith.constant 128 : index
    %c0_46 = arith.constant 0 : index
    %124 = vector.load %arg5[%c128, %c0_46] : memref<256x128xf32, #tpu.memory_space<vmem>>, vector<32x32xf32>
    %c6 = arith.constant 6 : index
    %c0_47 = arith.constant 0 : index
    %125 = vector.load %arg6[%c6, %c0_47] : memref<16x128xf32, #tpu.memory_space<vmem>>, vector<1x32xf32>
    %126 = vector.extract_strided_slice %116 {offsets = [0, 0], sizes = [16, 8], strides = [1, 1]} : vector<16x32xf32> to vector<16x8xf32>
    %127 = vector.extract_strided_slice %122 {offsets = [0, 0], sizes = [16, 8], strides = [1, 1]} : vector<16x32xf32> to vector<16x8xf32>
    %cst_48 = arith.constant dense<0.000000e+00> : vector<16x16xf32>
    %128 = tpu.matmul %126, %127, %cst_48 {dimension_numbers = #tpu.dot_dimension_numbers<[1], [1], [0], [0], [0, 0, 1, 0], [], []>} : vector<16x8xf32>, vector<16x8xf32>, vector<16x16xf32> -> vector<16x16xf32>
    %129 = arith.addf %128, %3 : vector<16x16xf32>
    %cst_49 = arith.constant dense<0xFF800000> : vector<16xf32>
    %130 = vector.multi_reduction <maximumf>, %129, %cst_49 [1] : vector<16x16xf32> to vector<16xf32>
    %131 = vector.shape_cast %130 : vector<16xf32> to vector<16x1xf32>
    %132 = vector.broadcast %131 : vector<16x1xf32> to vector<16x16xf32>
    %133 = arith.subf %129, %132 : vector<16x16xf32>
    %134 = math.exp %133 : vector<16x16xf32>
    %cst_50 = arith.constant dense<0.000000e+00> : vector<16xf32>
    %135 = vector.multi_reduction <add>, %134, %cst_50 [1] : vector<16x16xf32> to vector<16xf32>
    %136 = vector.shape_cast %135 : vector<16xf32> to vector<16x1xf32>
    %137 = vector.broadcast %136 : vector<16x1xf32> to vector<16x16xf32>
    %138 = arith.divf %134, %137 : vector<16x16xf32>
    %c0_51 = arith.constant 0 : index
    %c32_52 = arith.constant 32 : index
    %139 = vector.load %arg7[%c0_51, %c32_52] : memref<16x96xf32, #tpu.memory_space<vmem>>, vector<16x16xf32>
    tpu.vector_store %arg7[%c0_51, %c32_52], %138 {strides = array<i32>} : memref<16x96xf32, #tpu.memory_space<vmem>>, vector<16x16xf32>,
    %140 = vector.extract_strided_slice %123 {offsets = [0, 0], sizes = [16, 8], strides = [1, 1]} : vector<16x32xf32> to vector<16x8xf32>
    %cst_53 = arith.constant dense<0.000000e+00> : vector<16x8xf32>
    %141 = tpu.matmul %138, %140, %cst_53 {dimension_numbers = #tpu.dot_dimension_numbers<[1], [0], [0], [1], [0, 0, 1, 1], [], []>} : vector<16x16xf32>, vector<16x8xf32>, vector<16x8xf32> -> vector<16x8xf32>
    %142 = vector.extract_strided_slice %124 {offsets = [0, 0], sizes = [8, 32], strides = [1, 1]} : vector<32x32xf32> to vector<8x32xf32>
    %cst_54 = arith.constant dense<0.000000e+00> : vector<16x32xf32>
    %143 = tpu.matmul %141, %142, %cst_54 {dimension_numbers = #tpu.dot_dimension_numbers<[1], [0], [0], [1], [0, 0, 1, 1], [], []>} : vector<16x8xf32>, vector<8x32xf32>, vector<16x32xf32> -> vector<16x32xf32>
    %144 = vector.extract_strided_slice %116 {offsets = [0, 8], sizes = [16, 8], strides = [1, 1]} : vector<16x32xf32> to vector<16x8xf32>
    %145 = vector.extract_strided_slice %122 {offsets = [0, 8], sizes = [16, 8], strides = [1, 1]} : vector<16x32xf32> to vector<16x8xf32>
    %cst_55 = arith.constant dense<0.000000e+00> : vector<16x16xf32>
    %146 = tpu.matmul %144, %145, %cst_55 {dimension_numbers = #tpu.dot_dimension_numbers<[1], [1], [0], [0], [0, 0, 1, 0], [], []>} : vector<16x8xf32>, vector<16x8xf32>, vector<16x16xf32> -> vector<16x16xf32>
    %147 = arith.addf %146, %3 : vector<16x16xf32>
    %cst_56 = arith.constant dense<0xFF800000> : vector<16xf32>
    %148 = vector.multi_reduction <maximumf>, %147, %cst_56 [1] : vector<16x16xf32> to vector<16xf32>
    %149 = vector.shape_cast %148 : vector<16xf32> to vector<16x1xf32>
    %150 = vector.broadcast %149 : vector<16x1xf32> to vector<16x16xf32>
    %151 = arith.subf %147, %150 : vector<16x16xf32>
    %152 = math.exp %151 : vector<16x16xf32>
    %cst_57 = arith.constant dense<0.000000e+00> : vector<16xf32>
    %153 = vector.multi_reduction <add>, %152, %cst_57 [1] : vector<16x16xf32> to vector<16xf32>
    %154 = vector.shape_cast %153 : vector<16xf32> to vector<16x1xf32>
    %155 = vector.broadcast %154 : vector<16x1xf32> to vector<16x16xf32>
    %156 = arith.divf %152, %155 : vector<16x16xf32>
    %c0_58 = arith.constant 0 : index
    %c48 = arith.constant 48 : index
    %157 = vector.load %arg7[%c0_58, %c48] : memref<16x96xf32, #tpu.memory_space<vmem>>, vector<16x16xf32>
    tpu.vector_store %arg7[%c0_58, %c48], %156 {strides = array<i32>} : memref<16x96xf32, #tpu.memory_space<vmem>>, vector<16x16xf32>,
    %158 = vector.extract_strided_slice %123 {offsets = [0, 8], sizes = [16, 8], strides = [1, 1]} : vector<16x32xf32> to vector<16x8xf32>
    %cst_59 = arith.constant dense<0.000000e+00> : vector<16x8xf32>
    %159 = tpu.matmul %156, %158, %cst_59 {dimension_numbers = #tpu.dot_dimension_numbers<[1], [0], [0], [1], [0, 0, 1, 1], [], []>} : vector<16x16xf32>, vector<16x8xf32>, vector<16x8xf32> -> vector<16x8xf32>
    %160 = vector.extract_strided_slice %124 {offsets = [8, 0], sizes = [8, 32], strides = [1, 1]} : vector<32x32xf32> to vector<8x32xf32>
    %cst_60 = arith.constant dense<0.000000e+00> : vector<16x32xf32>
    %161 = tpu.matmul %159, %160, %cst_60 {dimension_numbers = #tpu.dot_dimension_numbers<[1], [0], [0], [1], [0, 0, 1, 1], [], []>} : vector<16x8xf32>, vector<8x32xf32>, vector<16x32xf32> -> vector<16x32xf32>
    %162 = arith.addf %143, %161 : vector<16x32xf32>
    %163 = vector.extract_strided_slice %116 {offsets = [0, 16], sizes = [16, 8], strides = [1, 1]} : vector<16x32xf32> to vector<16x8xf32>
    %164 = vector.extract_strided_slice %122 {offsets = [0, 16], sizes = [16, 8], strides = [1, 1]} : vector<16x32xf32> to vector<16x8xf32>
    %cst_61 = arith.constant dense<0.000000e+00> : vector<16x16xf32>
    %165 = tpu.matmul %163, %164, %cst_61 {dimension_numbers = #tpu.dot_dimension_numbers<[1], [1], [0], [0], [0, 0, 1, 0], [], []>} : vector<16x8xf32>, vector<16x8xf32>, vector<16x16xf32> -> vector<16x16xf32>
    %166 = arith.addf %165, %3 : vector<16x16xf32>
    %cst_62 = arith.constant dense<0xFF800000> : vector<16xf32>
    %167 = vector.multi_reduction <maximumf>, %166, %cst_62 [1] : vector<16x16xf32> to vector<16xf32>
    %168 = vector.shape_cast %167 : vector<16xf32> to vector<16x1xf32>
    %169 = vector.broadcast %168 : vector<16x1xf32> to vector<16x16xf32>
    %170 = arith.subf %166, %169 : vector<16x16xf32>
    %171 = math.exp %170 : vector<16x16xf32>
    %cst_63 = arith.constant dense<0.000000e+00> : vector<16xf32>
    %172 = vector.multi_reduction <add>, %171, %cst_63 [1] : vector<16x16xf32> to vector<16xf32>
    %173 = vector.shape_cast %172 : vector<16xf32> to vector<16x1xf32>
    %174 = vector.broadcast %173 : vector<16x1xf32> to vector<16x16xf32>
    %175 = arith.divf %171, %174 : vector<16x16xf32>
    %c0_64 = arith.constant 0 : index
    %c64_65 = arith.constant 64 : index
    %176 = vector.load %arg7[%c0_64, %c64_65] : memref<16x96xf32, #tpu.memory_space<vmem>>, vector<16x16xf32>
    tpu.vector_store %arg7[%c0_64, %c64_65], %175 {strides = array<i32>} : memref<16x96xf32, #tpu.memory_space<vmem>>, vector<16x16xf32>,
    %177 = vector.extract_strided_slice %123 {offsets = [0, 16], sizes = [16, 8], strides = [1, 1]} : vector<16x32xf32> to vector<16x8xf32>
    %cst_66 = arith.constant dense<0.000000e+00> : vector<16x8xf32>
    %178 = tpu.matmul %175, %177, %cst_66 {dimension_numbers = #tpu.dot_dimension_numbers<[1], [0], [0], [1], [0, 0, 1, 1], [], []>} : vector<16x16xf32>, vector<16x8xf32>, vector<16x8xf32> -> vector<16x8xf32>
    %179 = vector.extract_strided_slice %124 {offsets = [16, 0], sizes = [8, 32], strides = [1, 1]} : vector<32x32xf32> to vector<8x32xf32>
    %cst_67 = arith.constant dense<0.000000e+00> : vector<16x32xf32>
    %180 = tpu.matmul %178, %179, %cst_67 {dimension_numbers = #tpu.dot_dimension_numbers<[1], [0], [0], [1], [0, 0, 1, 1], [], []>} : vector<16x8xf32>, vector<8x32xf32>, vector<16x32xf32> -> vector<16x32xf32>
    %181 = arith.addf %162, %180 : vector<16x32xf32>
    %182 = vector.extract_strided_slice %116 {offsets = [0, 24], sizes = [16, 8], strides = [1, 1]} : vector<16x32xf32> to vector<16x8xf32>
    %183 = vector.extract_strided_slice %122 {offsets = [0, 24], sizes = [16, 8], strides = [1, 1]} : vector<16x32xf32> to vector<16x8xf32>
    %cst_68 = arith.constant dense<0.000000e+00> : vector<16x16xf32>
    %184 = tpu.matmul %182, %183, %cst_68 {dimension_numbers = #tpu.dot_dimension_numbers<[1], [1], [0], [0], [0, 0, 1, 0], [], []>} : vector<16x8xf32>, vector<16x8xf32>, vector<16x16xf32> -> vector<16x16xf32>
    %185 = arith.addf %184, %3 : vector<16x16xf32>
    %cst_69 = arith.constant dense<0xFF800000> : vector<16xf32>
    %186 = vector.multi_reduction <maximumf>, %185, %cst_69 [1] : vector<16x16xf32> to vector<16xf32>
    %187 = vector.shape_cast %186 : vector<16xf32> to vector<16x1xf32>
    %188 = vector.broadcast %187 : vector<16x1xf32> to vector<16x16xf32>
    %189 = arith.subf %185, %188 : vector<16x16xf32>
    %190 = math.exp %189 : vector<16x16xf32>
    %cst_70 = arith.constant dense<0.000000e+00> : vector<16xf32>
    %191 = vector.multi_reduction <add>, %190, %cst_70 [1] : vector<16x16xf32> to vector<16xf32>
    %192 = vector.shape_cast %191 : vector<16xf32> to vector<16x1xf32>
    %193 = vector.broadcast %192 : vector<16x1xf32> to vector<16x16xf32>
    %194 = arith.divf %190, %193 : vector<16x16xf32>
    %c0_71 = arith.constant 0 : index
    %c80 = arith.constant 80 : index
    %195 = vector.load %arg7[%c0_71, %c80] : memref<16x96xf32, #tpu.memory_space<vmem>>, vector<16x16xf32>
    tpu.vector_store %arg7[%c0_71, %c80], %194 {strides = array<i32>} : memref<16x96xf32, #tpu.memory_space<vmem>>, vector<16x16xf32>,
    %196 = vector.extract_strided_slice %123 {offsets = [0, 24], sizes = [16, 8], strides = [1, 1]} : vector<16x32xf32> to vector<16x8xf32>
    %cst_72 = arith.constant dense<0.000000e+00> : vector<16x8xf32>
    %197 = tpu.matmul %194, %196, %cst_72 {dimension_numbers = #tpu.dot_dimension_numbers<[1], [0], [0], [1], [0, 0, 1, 1], [], []>} : vector<16x16xf32>, vector<16x8xf32>, vector<16x8xf32> -> vector<16x8xf32>
    %198 = vector.extract_strided_slice %124 {offsets = [24, 0], sizes = [8, 32], strides = [1, 1]} : vector<32x32xf32> to vector<8x32xf32>
    %cst_73 = arith.constant dense<0.000000e+00> : vector<16x32xf32>
    %199 = tpu.matmul %197, %198, %cst_73 {dimension_numbers = #tpu.dot_dimension_numbers<[1], [0], [0], [1], [0, 0, 1, 1], [], []>} : vector<16x8xf32>, vector<8x32xf32>, vector<16x32xf32> -> vector<16x32xf32>
    %200 = arith.addf %181, %199 : vector<16x32xf32>
    %201 = vector.broadcast %125 : vector<1x32xf32> to vector<16x32xf32>
    %202 = arith.addf %200, %201 : vector<16x32xf32>
    %203 = arith.addf %111, %202 : vector<16x32xf32>
    %c7 = arith.constant 7 : index
    %c0_74 = arith.constant 0 : index
    %204 = vector.load %arg6[%c7, %c0_74] : memref<16x128xf32, #tpu.memory_space<vmem>>, vector<1x32xf32>
    %c8 = arith.constant 8 : index
    %c0_75 = arith.constant 0 : index
    %205 = vector.load %arg6[%c8, %c0_75] : memref<16x128xf32, #tpu.memory_space<vmem>>, vector<1x32xf32>
    %cst_76 = arith.constant dense<0.000000e+00> : vector<16xf32>
    %206 = vector.multi_reduction <add>, %203, %cst_76 [1] : vector<16x32xf32> to vector<16xf32>
    %207 = vector.shape_cast %206 : vector<16xf32> to vector<16x1xf32>
    %cst_77 = arith.constant 3.200000e+01 : f32
    %208 = vector.broadcast %cst_77 : f32 to vector<16x1xf32>
    %209 = arith.divf %207, %208 : vector<16x1xf32>
    %210 = vector.broadcast %209 : vector<16x1xf32> to vector<16x32xf32>
    %211 = arith.subf %203, %210 : vector<16x32xf32>
    %212 = arith.mulf %211, %211 : vector<16x32xf32>
    %cst_78 = arith.constant dense<0.000000e+00> : vector<16xf32>
    %213 = vector.multi_reduction <add>, %212, %cst_78 [1] : vector<16x32xf32> to vector<16xf32>
    %214 = vector.shape_cast %213 : vector<16xf32> to vector<16x1xf32>
    %cst_79 = arith.constant 3.200000e+01 : f32
    %215 = vector.broadcast %cst_79 : f32 to vector<16x1xf32>
    %216 = arith.divf %214, %215 : vector<16x1xf32>
    %217 = vector.broadcast %209 : vector<16x1xf32> to vector<16x32xf32>
    %218 = arith.subf %203, %217 : vector<16x32xf32>
    %cst_80 = arith.constant 9.99999974E-6 : f32
    %219 = vector.broadcast %cst_80 : f32 to vector<16x1xf32>
    %220 = arith.addf %216, %219 : vector<16x1xf32>
    %221 = math.rsqrt %220 : vector<16x1xf32>
    %222 = vector.broadcast %221 : vector<16x1xf32> to vector<16x32xf32>
    %223 = arith.mulf %218, %222 : vector<16x32xf32>
    %224 = vector.broadcast %204 : vector<1x32xf32> to vector<16x32xf32>
    %225 = arith.mulf %223, %224 : vector<16x32xf32>
    %226 = vector.broadcast %205 : vector<1x32xf32> to vector<16x32xf32>
    %227 = arith.addf %225, %226 : vector<16x32xf32>
    %c160 = arith.constant 160 : index
    %c0_81 = arith.constant 0 : index
    %228 = vector.load %arg5[%c160, %c0_81] : memref<256x128xf32, #tpu.memory_space<vmem>>, vector<32x64xf32>
    %cst_82 = arith.constant dense<0.000000e+00> : vector<16x64xf32>
    %229 = tpu.matmul %227, %228, %cst_82 {dimension_numbers = #tpu.dot_dimension_numbers<[1], [0], [0], [1], [0, 0, 1, 1], [], []>} : vector<16x32xf32>, vector<32x64xf32>, vector<16x64xf32> -> vector<16x64xf32>
    %c9 = arith.constant 9 : index
    %c0_83 = arith.constant 0 : index
    %230 = vector.load %arg6[%c9, %c0_83] : memref<16x128xf32, #tpu.memory_space<vmem>>, vector<1x64xf32>
    %231 = vector.broadcast %230 : vector<1x64xf32> to vector<16x64xf32>
    %232 = arith.addf %229, %231 : vector<16x64xf32>
    %cst_84 = arith.constant 0.000000e+00 : f32
    %233 = vector.broadcast %cst_84 : f32 to vector<16x64xf32>
    %234 = arith.maximumf %232, %233 : vector<16x64xf32>
    %c192 = arith.constant 192 : index
    %c0_85 = arith.constant 0 : index
    %235 = vector.load %arg5[%c192, %c0_85] : memref<256x128xf32, #tpu.memory_space<vmem>>, vector<64x32xf32>
    %cst_86 = arith.constant dense<0.000000e+00> : vector<16x32xf32>
    %236 = tpu.matmul %234, %235, %cst_86 {dimension_numbers = #tpu.dot_dimension_numbers<[1], [0], [0], [1], [0, 0, 1, 1], [], []>} : vector<16x64xf32>, vector<64x32xf32>, vector<16x32xf32> -> vector<16x32xf32>
    %c10 = arith.constant 10 : index
    %c0_87 = arith.constant 0 : index
    %237 = vector.load %arg6[%c10, %c0_87] : memref<16x128xf32, #tpu.memory_space<vmem>>, vector<1x32xf32>
    %238 = vector.broadcast %237 : vector<1x32xf32> to vector<16x32xf32>
    %239 = arith.addf %236, %238 : vector<16x32xf32>
    %240 = arith.addf %227, %239 : vector<16x32xf32>
    %c11 = arith.constant 11 : index
    %c0_88 = arith.constant 0 : index
    %241 = vector.load %arg6[%c11, %c0_88] : memref<16x128xf32, #tpu.memory_space<vmem>>, vector<1x32xf32>
    %c12 = arith.constant 12 : index
    %c0_89 = arith.constant 0 : index
    %242 = vector.load %arg6[%c12, %c0_89] : memref<16x128xf32, #tpu.memory_space<vmem>>, vector<1x32xf32>
    %cst_90 = arith.constant dense<0.000000e+00> : vector<16xf32>
    %243 = vector.multi_reduction <add>, %240, %cst_90 [1] : vector<16x32xf32> to vector<16xf32>
    %244 = vector.shape_cast %243 : vector<16xf32> to vector<16x1xf32>
    %cst_91 = arith.constant 3.200000e+01 : f32
    %245 = vector.broadcast %cst_91 : f32 to vector<16x1xf32>
    %246 = arith.divf %244, %245 : vector<16x1xf32>
    %247 = vector.broadcast %246 : vector<16x1xf32> to vector<16x32xf32>
    %248 = arith.subf %240, %247 : vector<16x32xf32>
    %249 = arith.mulf %248, %248 : vector<16x32xf32>
    %cst_92 = arith.constant dense<0.000000e+00> : vector<16xf32>
    %250 = vector.multi_reduction <add>, %249, %cst_92 [1] : vector<16x32xf32> to vector<16xf32>
    %251 = vector.shape_cast %250 : vector<16xf32> to vector<16x1xf32>
    %cst_93 = arith.constant 3.200000e+01 : f32
    %252 = vector.broadcast %cst_93 : f32 to vector<16x1xf32>
    %253 = arith.divf %251, %252 : vector<16x1xf32>
    %254 = vector.broadcast %246 : vector<16x1xf32> to vector<16x32xf32>
    %255 = arith.subf %240, %254 : vector<16x32xf32>
    %cst_94 = arith.constant 9.99999974E-6 : f32
    %256 = vector.broadcast %cst_94 : f32 to vector<16x1xf32>
    %257 = arith.addf %253, %256 : vector<16x1xf32>
    %258 = math.rsqrt %257 : vector<16x1xf32>
    %259 = vector.broadcast %258 : vector<16x1xf32> to vector<16x32xf32>
    %260 = arith.mulf %255, %259 : vector<16x32xf32>
    %261 = vector.broadcast %241 : vector<1x32xf32> to vector<16x32xf32>
    %262 = arith.mulf %260, %261 : vector<16x32xf32>
    %263 = vector.broadcast %242 : vector<1x32xf32> to vector<16x32xf32>
    %264 = arith.addf %262, %263 : vector<16x32xf32>
    %c0_95 = arith.constant 0 : index
    %c0_96 = arith.constant 0 : index
    %265 = vector.load %arg7[%c0_95, %c0_96] : memref<16x96xf32, #tpu.memory_space<vmem>>, vector<16x32xf32>
    tpu.vector_store %arg7[%c0_95, %c0_96], %264 {strides = array<i32>} : memref<16x96xf32, #tpu.memory_space<vmem>>, vector<16x32xf32>,
    return
  }
  func.func @transform_0(%arg0: i32) -> (i32, i32) {
    %c0_i32 = arith.constant 0 : i32
    %c0_i32_0 = arith.constant 0 : i32
    %c0_i32_1 = arith.constant 0 : i32
    return %c0_i32, %c0_i32_0 : i32, i32
  }
  func.func @transform_1(%arg0: i32) -> (i32, i32) {
    %c0_i32 = arith.constant 0 : i32
    %c0_i32_0 = arith.constant 0 : i32
    %c0_i32_1 = arith.constant 0 : i32
    return %c0_i32, %c0_i32_0 : i32, i32
  }
  func.func @transform_2(%arg0: i32) -> (i32, i32) {
    %c0_i32 = arith.constant 0 : i32
    %c0_i32_0 = arith.constant 0 : i32
    %c0_i32_1 = arith.constant 0 : i32
    return %c0_i32, %c0_i32_0 : i32, i32
  }
  func.func @transform_3(%arg0: i32) -> (i32, i32) {
    %c0_i32 = arith.constant 0 : i32
    %c0_i32_0 = arith.constant 0 : i32
    %c0_i32_1 = arith.constant 0 : i32
    return %c0_i32, %c0_i32_0 : i32, i32
  }
  func.func @transform_4(%arg0: i32) -> (i32, i32) {
    %c0_i32 = arith.constant 0 : i32
    %c0_i32_0 = arith.constant 0 : i32
    %c0_i32_1 = arith.constant 0 : i32
    return %c0_i32, %c0_i32_0 : i32, i32
  }
  func.func @transform_5(%arg0: i32) -> (i32, i32) {
    %c0_i32 = arith.constant 0 : i32
    %c0_i32_0 = arith.constant 0 : i32
    %c0_i32_1 = arith.constant 0 : i32
    return %c0_i32, %c0_i32_0 : i32, i32
  }
  func.func @transform_6(%arg0: i32) -> (i32, i32) {
    %c0_i32 = arith.constant 0 : i32
    %c0_i32_0 = arith.constant 0 : i32
    %c0_i32_1 = arith.constant 0 : i32
    return %c0_i32, %c0_i32_0 : i32, i32
  }
}

</mosaic_0001>

<llo_original>
// kernel: tpu_custom_call.1
$region0: #{tpu_custom_call.1}
  #allocation0 [shape = 'u32[]', space=smem, size = 0x4, offset = 0x4, fixed_abs, tag = 'smem constant byte address 0x4 - core index']
  #allocation1 [shape = 'u32[144,128]{1,0:T(1,128)}', space=vmem, size = 0x12000, scoped, tag = 'internal scratch']
  %s0 = inlined_call_operand.hbm [shape: f32[16,32], index: 0, kind: input, shape index: {}]
  %s1 = inlined_call_operand.hbm [shape: f32[16,32], index: 1, kind: input, shape index: {}]
  %s2 = inlined_call_operand.hbm [shape: f32[16,16], index: 2, kind: input, shape index: {}]
  %s3 = inlined_call_operand.hbm [shape: f32[16,16], index: 3, kind: input, shape index: {}]
  %s4 = inlined_call_operand.hbm [shape: f32[256,128], index: 4, kind: input, shape index: {}]
  %s5 = inlined_call_operand.vmem [shape: f32[16,128], index: 5, kind: input, shape index: {}]
  %s6 = inlined_call_operand.hbm [shape: f32[16,96], index: 6, kind: output, shape index: {}]
  %s7 = sld [smem:[#allocation0]]
  $region54: #{tpu_custom_call.1} parent=0
    _
  %s9 = ssub.s32 1, %s7
  %s10 = scalar_select 0, %s9, %s7
  $region1: #{tpu_custom_call.1} parent=0
    #allocation2 [shape = 'u8[8192]{0}', space=vmem, size = 0x2000, scoped, tag = 'input window, operand 0, single buffered']
    #allocation3 [shape = 's32[1]{0}', space=sflag, size = 0x4, scoped, tag = 'scoped memory for tpu_custom_call.1']
    #allocation4 [shape = 's32[1]{0}', space=sflag, size = 0x4, scoped, tag = 'scoped memory for tpu_custom_call.1']
    #allocation5 [shape = 'u8[8192]{0}', space=vmem, size = 0x2000, scoped, tag = 'input window, operand 1, single buffered']
    #allocation6 [shape = 's32[1]{0}', space=sflag, size = 0x4, scoped, tag = 'scoped memory for tpu_custom_call.1']
    #allocation7 [shape = 'u8[8192]{0}', space=vmem, size = 0x2000, scoped, tag = 'input window, operand 2, single buffered']
    #allocation8 [shape = 'u8[8192]{0}', space=vmem, size = 0x2000, scoped, tag = 'input window, operand 3, single buffered']
    #allocation9 [shape = 's32[1]{0}', space=sflag, size = 0x4, scoped, tag = 'scoped memory for tpu_custom_call.1']
    #allocation10 [shape = 'u8[131072]{0}', space=vmem, size = 0x20000, scoped, tag = 'input window, operand 4, single buffered']
    #allocation11 [shape = 'u8[8192]{0}', space=vmem, size = 0x2000, scoped, tag = 'output window, operand 0, single buffered']
    %11 = vsyncpa [#allocation3], 0
    %12 = vsyncpa [#allocation6], 0
    %13 = vsyncpa [#allocation9], 0
    %14 = vsyncpa [#allocation4], 0
    // Predicated region
    $region2: #{tpu_custom_call.1} parent=1 // pred_check
      _
    $region3: #{tpu_custom_call.1} parent=1 // pred_check_branch
      %16 = sbr.rel (0) target = $region5
    $region4: #{tpu_custom_call.1} parent=1 // pred_region
      %s18 = ssub.s32 256, 256
      %19 = vsyncadd [#allocation3], %s18
      %s20 = sshll.u32 [#allocation2], 4
      %s21 = int_to_ptr.vmem [resolvable:$true] %s20
      %26 = dma.hbm_to_vmem [thread:$0]  %s0, 256, %s21, [#allocation3], 128, 128, 8
    $region5: #{tpu_custom_call.1} parent=1 // pred_fallthru
      _
    // Predicated region
    $region6: #{tpu_custom_call.1} parent=1 // pred_check
      _
    $region7: #{tpu_custom_call.1} parent=1 // pred_check_branch
      %28 = sbr.rel (0) target = $region9
    $region8: #{tpu_custom_call.1} parent=1 // pred_region
      %s30 = ssub.s32 256, 256
      %31 = vsyncadd [#allocation6], %s30
      %s32 = sshll.u32 [#allocation5], 4
      %s33 = int_to_ptr.vmem [resolvable:$true] %s32
      %38 = dma.hbm_to_vmem [thread:$0]  %s1, 256, %s33, [#allocation6], 128, 128, 8
    $region9: #{tpu_custom_call.1} parent=1 // pred_fallthru
      _
    // Predicated region
    $region10: #{tpu_custom_call.1} parent=1 // pred_check
      _
    $region11: #{tpu_custom_call.1} parent=1 // pred_check_branch
      %40 = sbr.rel (0) target = $region13
    $region12: #{tpu_custom_call.1} parent=1 // pred_region
      %s42 = ssub.s32 256, 256
      %43 = vsyncadd [#allocation6], %s42
      %s44 = sshll.u32 [#allocation7], 4
      %s45 = int_to_ptr.vmem [resolvable:$true] %s44
      %50 = dma.hbm_to_vmem [thread:$0]  %s2, 256, %s45, [#allocation6], 128, 128, 8
    $region13: #{tpu_custom_call.1} parent=1 // pred_fallthru
      _
    // Predicated region
    $region14: #{tpu_custom_call.1} parent=1 // pred_check
      _
    $region15: #{tpu_custom_call.1} parent=1 // pred_check_branch
      %52 = sbr.rel (0) target = $region17
    $region16: #{tpu_custom_call.1} parent=1 // pred_region
      %s54 = ssub.s32 256, 256
      %55 = vsyncadd [#allocation9], %s54
      %s56 = sshll.u32 [#allocation8], 4
      %s57 = int_to_ptr.vmem [resolvable:$true] %s56
      %62 = dma.hbm_to_vmem [thread:$0]  %s3, 256, %s57, [#allocation9], 128, 128, 8
    $region17: #{tpu_custom_call.1} parent=1 // pred_fallthru
      _
    // Predicated region
    $region18: #{tpu_custom_call.1} parent=1 // pred_check
      _
    $region19: #{tpu_custom_call.1} parent=1 // pred_check_branch
      %64 = sbr.rel (0) target = $region21
    $region20: #{tpu_custom_call.1} parent=1 // pred_region
      %s66 = ssub.s32 4096, 4096
      %67 = vsyncadd [#allocation9], %s66
      %s68 = sshll.u32 [#allocation10], 4
      %s69 = int_to_ptr.vmem [resolvable:$true] %s68
      %74 = dma.hbm_to_vmem [thread:$0]  %s4, 4096, %s69, [#allocation9], 128, 128, 8
    $region21: #{tpu_custom_call.1} parent=1 // pred_fallthru
      _
    // Predicated region
    $region22: #{tpu_custom_call.1} parent=1 // pred_check
      _
    $region23: #{tpu_custom_call.1} parent=1 // pred_check_branch
      %76 = sbr.rel (0) target = $region25
    $region24: #{tpu_custom_call.1} parent=1 // pred_region
      _
    $region25: #{tpu_custom_call.1} parent=1 // pred_fallthru
      _
    // Predicated region
    $region26: #{tpu_custom_call.1} parent=1 // pred_check
      _
    $region27: #{tpu_custom_call.1} parent=1 // pred_check_branch
      %78 = sbr.rel (0) target = $region29
    $region28: #{tpu_custom_call.1} parent=1 // pred_region
      %79 = dma.done [#allocation3], 256
    $region29: #{tpu_custom_call.1} parent=1 // pred_fallthru
      _
    // Predicated region
    $region30: #{tpu_custom_call.1} parent=1 // pred_check
      _
    $region31: #{tpu_custom_call.1} parent=1 // pred_check_branch
      %81 = sbr.rel (0) target = $region33
    $region32: #{tpu_custom_call.1} parent=1 // pred_region
      %82 = dma.done [#allocation6], 256
    $region33: #{tpu_custom_call.1} parent=1 // pred_fallthru
      _
    // Predicated region
    $region34: #{tpu_custom_call.1} parent=1 // pred_check
      _
    $region35: #{tpu_custom_call.1} parent=1 // pred_check_branch
      %84 = sbr.rel (0) target = $region37
    $region36: #{tpu_custom_call.1} parent=1 // pred_region
      %85 = dma.done [#allocation6], 256
    $region37: #{tpu_custom_call.1} parent=1 // pred_fallthru
      _
    // Predicated region
    $region38: #{tpu_custom_call.1} parent=1 // pred_check
      _
    $region39: #{tpu_custom_call.1} parent=1 // pred_check_branch
      %87 = sbr.rel (0) target = $region41
    $region40: #{tpu_custom_call.1} parent=1 // pred_region
      %88 = dma.done [#allocation9], 256
    $region41: #{tpu_custom_call.1} parent=1 // pred_fallthru
      _
    // Predicated region
    $region42: #{tpu_custom_call.1} parent=1 // pred_check
      _
    $region43: #{tpu_custom_call.1} parent=1 // pred_check_branch
      %90 = sbr.rel (0) target = $region45
    $region44: #{tpu_custom_call.1} parent=1 // pred_region
      %91 = dma.done [#allocation9], 4096
    $region45: #{tpu_custom_call.1} parent=1 // pred_fallthru
      _
    %v92 = vld [vmem:[#allocation2] sm:$0xff]
    %v93 = vld [vmem:[#allocation2 + $0x8] sm:$0xff]
    %v94 = vld [vmem:[#allocation5] sm:$0xff]
    %v95 = vld [vmem:[#allocation5 + $0x8] sm:$0xff]
    %v96 = vld [vmem:[#allocation7] sm:$0xff]
    %v97 = vld [vmem:[#allocation7 + $0x8] sm:$0xff]
    %v98 = vld [vmem:[#allocation8] sm:$0xff]
    %v99 = vld [vmem:[#allocation8 + $0x8] sm:$0xff]
    %v100 = vld [vmem:[#allocation10] sm:$0xff]
    %v101 = vld [vmem:[#allocation10 + $0x8] sm:$0xff]
    %v102 = vld [vmem:[#allocation10 + $0x10] sm:$0xff]
    %v103 = vld [vmem:[#allocation10 + $0x18] sm:$0xff]
    %v104 = vld [vmem:[%s5] sm:$0x1]
    %v105 = vlaneseq
    %v106 = vshrl.u32 %v105, 7
    %v107 = vsub.s32 0, %v106
    %v108 = vrot.slane %v104, %v107
    %vm109 = vcmask 261120
    %v111 = vsel %vm109, %v92, 0
    %v114 = vsel %vm109, %v93, 0
    %116 = vmatprep.subr.mxu0 0.0
    %117 = vmatpush1.msra.mxu0 %v100
    %118 = vmatprep.subr.mxu0 0.0
    %119 = vmatpush1.msra.mxu0 %v101
    %120 = vmatprep.subr.mxu0 0.0
    %121 = vmatpush1.msra.mxu0 %v102
    %122 = vmatprep.subr.mxu0 0.0
    %123 = vmatpush1.msra.mxu0 %v103
    %124 = vmatprep.subr.mxu0 0.0
    %125 = vmatpush1.msra.mxu0 0.0
    %126 = vmatprep.subr.mxu0 0.0
    %127 = vmatpush1.msra.mxu0 0.0
    %128 = vmatprep.subr.mxu0 0.0
    %129 = vmatpush1.msra.mxu0 0.0
    %130 = vmatprep.subr.mxu0 0.0
    %131 = vmatpush1.msra.mxu0 0.0
    %132 = vmatprep.subr.mxu0 0.0
    %133 = vmatpush1.msra.mxu0 0.0
    %134 = vmatprep.subr.mxu0 0.0
    %135 = vmatpush1.msra.mxu0 0.0
    %136 = vmatprep.subr.mxu0 0.0
    %137 = vmatpush1.msra.mxu0 0.0
    %138 = vmatprep.subr.mxu0 0.0
    %139 = vmatpush1.msra.mxu0 0.0
    %140 = vmatprep.subr.mxu0 0.0
    %141 = vmatpush1.msra.mxu0 0.0
    %142 = vmatprep.subr.mxu0 0.0
    %143 = vmatpush1.msra.mxu0 0.0
    %144 = vmatprep.subr.mxu0 0.0
    %145 = vmatpush1.msra.mxu0 0.0
    %146 = vmatprep.subr.mxu0 0.0
    %147 = vmatpush1.msra.mxu0 0.0
    %148 = vmatprep.subr.mxu0 0.0
    %149 = vmatpush1.msra.mxu0 0.0
    %150 = vmatprep.subr.mxu0 0.0
    %151 = vmatpush1.msra.mxu0 0.0
    %152 = vmatprep.subr.mxu0 0.0
    %153 = vmatpush1.msra.mxu0 0.0
    %154 = vmatprep.subr.mxu0 0.0
    %155 = vmatpush1.msra.mxu0 0.0
    %156 = vmatprep.subr.mxu0 0.0
    %157 = vmatpush1.msra.mxu0 0.0
    %158 = vmatprep.subr.mxu0 0.0
    %159 = vmatpush1.msra.mxu0 0.0
    %160 = vmatprep.subr.mxu0 0.0
    %161 = vmatpush1.msra.mxu0 0.0
    %162 = vmatprep.subr.mxu0 0.0
    %163 = vmatpush1.msra.mxu0 0.0
    %164 = vmatprep.subr.mxu0 0.0
    %165 = vmatpush1.msra.mxu0 0.0
    %166 = vmatprep.subr.mxu0 0.0
    %167 = vmatpush1.msra.mxu0 0.0
    %168 = vmatprep.subr.mxu0 0.0
    %169 = vmatpush1.msra.mxu0 0.0
    %170 = vmatprep.subr.mxu0 0.0
    %171 = vmatpush1.msra.mxu0 0.0
    %172 = vmatprep.subr.mxu0 0.0
    %173 = vmatpush1.msra.mxu0 0.0
    %174 = vmatprep.subr.mxu0 0.0
    %175 = vmatpush1.msra.mxu0 0.0
    %176 = vmatprep.subr.mxu0 0.0
    %177 = vmatpush1.msra.mxu0 0.0
    %178 = vmatprep.subr.mxu0 0.0
    %179 = vmatpush1.msra.mxu0 0.0
    %180 = vmatprep.mubr.f32.mxu0 0.0
    %181 = vmatmul.mubr.f32.gmra.mrb[0].mxu0 %v111
    %v182 = vpop.f32.mrb[0].mxu0
    %v183 = vadd.f32 %v108, %v182
    %v184 = vpop.f32.mrb[0].mxu0
    %185 = vmatprep.mubr.f32.mxu0 0.0
    %186 = vmatmul.mubr.f32.gmra.mrb[0].mxu0 %v114
    %v187 = vpop.f32.mrb[0].mxu0
    %v188 = vadd.f32 %v108, %v187
    %v189 = vpop.f32.mrb[0].mxu0
    %190 = vdwg.mxu0
    %v191 = vld [vmem:[#allocation10 + $0x20] sm:$0xff]
    %v192 = vld [vmem:[#allocation10 + $0x28] sm:$0xff]
    %v193 = vld [vmem:[#allocation10 + $0x30] sm:$0xff]
    %v194 = vld [vmem:[#allocation10 + $0x38] sm:$0xff]
    %v195 = vld [vmem:[%s5 + $0x1] sm:$0x1]
    %198 = vrot.lane.b32.xlu0 %v183, 96
    %v199 = vpop.permute.xlu0 %198
    %200 = vrot.lane.b32.xlu0 %v188, 96
    %v201 = vpop.permute.xlu0 %200
    %vm202 = vcmask 64512
    %v203 = vsel %vm202, %v183, 0
    %v205 = vsel %vm202, %v188, 0
    %v207 = vsel %vm202, %v199, 0
    %v209 = vsel %vm202, %v201, 0
    %211 = vmatprep.subr.mxu0 0.0
    %212 = vmatpush1.xpose.msra.mxu0 %v207
    %213 = vmatprep.subr.mxu0 0.0
    %214 = vmatpush1.xpose.msra.mxu0 %v209
    %215 = vmatprep.subr.mxu0 0.0
    %216 = vmatpush1.xpose.msra.mxu0 0.0
    %217 = vmatprep.subr.mxu0 0.0
    %218 = vmatpush1.xpose.msra.mxu0 0.0
    %219 = vmatprep.subr.mxu0 0.0
    %220 = vmatpush1.xpose.msra.mxu0 0.0
    %221 = vmatprep.subr.mxu0 0.0
    %222 = vmatpush1.xpose.msra.mxu0 0.0
    %223 = vmatprep.subr.mxu0 0.0
    %224 = vmatpush1.xpose.msra.mxu0 0.0
    %225 = vmatprep.subr.mxu0 0.0
    %226 = vmatpush1.xpose.msra.mxu0 0.0
    %227 = vmatprep.subr.mxu0 0.0
    %228 = vmatpush1.xpose.msra.mxu0 0.0
    %229 = vmatprep.subr.mxu0 0.0
    %230 = vmatpush1.xpose.msra.mxu0 0.0
    %231 = vmatprep.subr.mxu0 0.0
    %232 = vmatpush1.xpose.msra.mxu0 0.0
    %233 = vmatprep.subr.mxu0 0.0
    %234 = vmatpush1.xpose.msra.mxu0 0.0
    %235 = vmatprep.subr.mxu0 0.0
    %236 = vmatpush1.xpose.msra.mxu0 0.0
    %237 = vmatprep.subr.mxu0 0.0
    %238 = vmatpush1.xpose.msra.mxu0 0.0
    %239 = vmatprep.subr.mxu0 0.0
    %240 = vmatpush1.xpose.msra.mxu0 0.0
    %241 = vmatprep.subr.mxu0 0.0
    %242 = vmatpush1.xpose.msra.mxu0 0.0
    %243 = vmatprep.subr.mxu0 0.0
    %244 = vmatpush1.xpose.msra.mxu0 0.0
    %245 = vmatprep.subr.mxu0 0.0
    %246 = vmatpush1.xpose.msra.mxu0 0.0
    %247 = vmatprep.subr.mxu0 0.0
    %248 = vmatpush1.xpose.msra.mxu0 0.0
    %249 = vmatprep.subr.mxu0 0.0
    %250 = vmatpush1.xpose.msra.mxu0 0.0
    %251 = vmatprep.subr.mxu0 0.0
    %252 = vmatpush1.xpose.msra.mxu0 0.0
    %253 = vmatprep.subr.mxu0 0.0
    %254 = vmatpush1.xpose.msra.mxu0 0.0
    %255 = vmatprep.subr.mxu0 0.0
    %256 = vmatpush1.xpose.msra.mxu0 0.0
    %257 = vmatprep.subr.mxu0 0.0
    %258 = vmatpush1.xpose.msra.mxu0 0.0
    %259 = vmatprep.subr.mxu0 0.0
    %260 = vmatpush1.xpose.msra.mxu0 0.0
    %261 = vmatprep.subr.mxu0 0.0
    %262 = vmatpush1.xpose.msra.mxu0 0.0
    %263 = vmatprep.subr.mxu0 0.0
    %264 = vmatpush1.xpose.msra.mxu0 0.0
    %265 = vmatprep.subr.mxu0 0.0
    %266 = vmatpush1.xpose.msra.mxu0 0.0
    %267 = vmatprep.subr.mxu0 0.0
    %268 = vmatpush1.xpose.msra.mxu0 0.0
    %269 = vmatprep.subr.mxu0 0.0
    %270 = vmatpush1.xpose.msra.mxu0 0.0
    %271 = vmatprep.subr.mxu0 0.0
    %272 = vmatpush1.xpose.msra.mxu0 0.0
    %273 = vmatprep.subr.mxu0 0.0
    %274 = vmatpush1.xpose.msra.mxu0 0.0
    %275 = vmatprep.mubr.f32.mxu0 0.0
    %276 = vmatmul.mubr.f32.gmra.mrb[0].mxu0 %v203
    %v277 = vpop.f32.mrb[0].mxu0
    %v278 = vadd.f32 %v96, %v277
    %v279 = vpop.f32.mrb[0].mxu0
    %280 = vmatprep.mubr.f32.mxu0 0.0
    %281 = vmatmul.mubr.f32.gmra.mrb[0].mxu0 %v205
    %v282 = vpop.f32.mrb[0].mxu0
    %v283 = vadd.f32 %v97, %v282
    %v284 = vpop.f32.mrb[0].mxu0
    %285 = vdwg.mxu0
    %vm286 = vcmask 130048
    %v287 = vsel %vm286, %v278, -inf
    %288 = vmax.xlane.f32.xlu0 %v287
    %v289 = vpop.xlane.xlu0 %288
    %v290 = vsel %vm286, %v283, -inf
    %291 = vmax.xlane.f32.xlu0 %v290
    %v292 = vpop.xlane.xlu0 %291
    %v293 = vsub.f32 %v278, %v289
    %v294 = vsub.f32 %v283, %v292
    %v295 = vmul.f32 %v293, 1.442695
    %v296 = vpow.pop %v295
    %v297 = vmul.f32 %v294, 1.442695
    %v298 = vpow.pop %v297
    %v299 = vsel %vm286, %v296, 0.0
    %300 = vadd.xlane.f32.xlu0 %v299
    %v301 = vpop.xlane.xlu0 %300
    %v302 = vsel %vm286, %v298, 0.0
    %303 = vadd.xlane.f32.xlu0 %v302
    %v304 = vpop.xlane.xlu0 %303
    %v305 = vrcp.pop %v301
    %v306 = vmul.f32 %v296, %v305
    %v307 = vrcp.pop %v304
    %v308 = vmul.f32 %v298, %v307
    %309 = vrot.lane.b32.xlu0 %v183, 64
    %v310 = vpop.permute.xlu0 %309
    %311 = vrot.lane.b32.xlu0 %v188, 64
    %v312 = vpop.permute.xlu0 %311
    %v316 = vsel %vm286, %v306, 0
    %v319 = vsel %vm286, %v308, 0
    %321 = vmatprep.subr.mxu0 0.0
    %322 = vmatpush1.msra.mxu0 %v310
    %323 = vmatprep.subr.mxu0 0.0
    %324 = vmatpush1.msra.mxu0 %v312
    %325 = vmatprep.subr.mxu0 0.0
    %326 = vmatpush1.msra.mxu0 0.0
    %327 = vmatprep.subr.mxu0 0.0
    %328 = vmatpush1.msra.mxu0 0.0
    %329 = vmatprep.subr.mxu0 0.0
    %330 = vmatpush1.msra.mxu0 0.0
    %331 = vmatprep.subr.mxu0 0.0
    %332 = vmatpush1.msra.mxu0 0.0
    %333 = vmatprep.subr.mxu0 0.0
    %334 = vmatpush1.msra.mxu0 0.0
    %335 = vmatprep.subr.mxu0 0.0
    %336 = vmatpush1.msra.mxu0 0.0
    %337 = vmatprep.subr.mxu0 0.0
    %338 = vmatpush1.msra.mxu0 0.0
    %339 = vmatprep.subr.mxu0 0.0
    %340 = vmatpush1.msra.mxu0 0.0
    %341 = vmatprep.subr.mxu0 0.0
    %342 = vmatpush1.msra.mxu0 0.0
    %343 = vmatprep.subr.mxu0 0.0
    %344 = vmatpush1.msra.mxu0 0.0
    %345 = vmatprep.subr.mxu0 0.0
    %346 = vmatpush1.msra.mxu0 0.0
    %347 = vmatprep.subr.mxu0 0.0
    %348 = vmatpush1.msra.mxu0 0.0
    %349 = vmatprep.subr.mxu0 0.0
    %350 = vmatpush1.msra.mxu0 0.0
    %351 = vmatprep.subr.mxu0 0.0
    %352 = vmatpush1.msra.mxu0 0.0
    %353 = vmatprep.subr.mxu0 0.0
    %354 = vmatpush1.msra.mxu0 0.0
    %355 = vmatprep.subr.mxu0 0.0
    %356 = vmatpush1.msra.mxu0 0.0
    %357 = vmatprep.subr.mxu0 0.0
    %358 = vmatpush1.msra.mxu0 0.0
    %359 = vmatprep.subr.mxu0 0.0
    %360 = vmatpush1.msra.mxu0 0.0
    %361 = vmatprep.subr.mxu0 0.0
    %362 = vmatpush1.msra.mxu0 0.0
    %363 = vmatprep.subr.mxu0 0.0
    %364 = vmatpush1.msra.mxu0 0.0
    %365 = vmatprep.subr.mxu0 0.0
    %366 = vmatpush1.msra.mxu0 0.0
    %367 = vmatprep.subr.mxu0 0.0
    %368 = vmatpush1.msra.mxu0 0.0
    %369 = vmatprep.subr.mxu0 0.0
    %370 = vmatpush1.msra.mxu0 0.0
    %371 = vmatprep.subr.mxu0 0.0
    %372 = vmatpush1.msra.mxu0 0.0
    %373 = vmatprep.subr.mxu0 0.0
    %374 = vmatpush1.msra.mxu0 0.0
    %375 = vmatprep.subr.mxu0 0.0
    %376 = vmatpush1.msra.mxu0 0.0
    %377 = vmatprep.subr.mxu0 0.0
    %378 = vmatpush1.msra.mxu0 0.0
    %379 = vmatprep.subr.mxu0 0.0
    %380 = vmatpush1.msra.mxu0 0.0
    %381 = vmatprep.subr.mxu0 0.0
    %382 = vmatpush1.msra.mxu0 0.0
    %383 = vmatprep.subr.mxu0 0.0
    %384 = vmatpush1.msra.mxu0 0.0
    %385 = vmatprep.mubr.f32.mxu0 0.0
    %386 = vmatmul.mubr.f32.gmra.mrb[0].mxu0 %v316
    %v387 = vpop.f32.mrb[0].mxu0
    %v388 = vadd.f32 0.0, %v387
    %v389 = vpop.f32.mrb[0].mxu0
    %390 = vmatprep.mubr.f32.mxu0 0.0
    %391 = vmatmul.mubr.f32.gmra.mrb[0].mxu0 %v319
    %v392 = vpop.f32.mrb[0].mxu0
    %v393 = vadd.f32 0.0, %v392
    %v394 = vpop.f32.mrb[0].mxu0
    %395 = vdwg.mxu0
    %396 = vrot.lane.b32.xlu0 %v183, 120
    %v397 = vpop.permute.xlu0 %396
    %398 = vrot.lane.b32.xlu0 %v188, 120
    %v399 = vpop.permute.xlu0 %398
    %400 = vrot.lane.b32.xlu0 %v183, 88
    %v401 = vpop.permute.xlu0 %400
    %402 = vrot.lane.b32.xlu0 %v188, 88
    %v403 = vpop.permute.xlu0 %402
    %v404 = vsel %vm202, %v397, 0
    %v406 = vsel %vm202, %v399, 0
    %v408 = vsel %vm202, %v401, 0
    %v410 = vsel %vm202, %v403, 0
    %412 = vmatprep.subr.mxu0 0.0
    %413 = vmatpush1.xpose.msra.mxu0 %v408
    %414 = vmatprep.subr.mxu0 0.0
    %415 = vmatpush1.xpose.msra.mxu0 %v410
    %416 = vmatprep.subr.mxu0 0.0
    %417 = vmatpush1.xpose.msra.mxu0 0.0
    %418 = vmatprep.subr.mxu0 0.0
    %419 = vmatpush1.xpose.msra.mxu0 0.0
    %420 = vmatprep.subr.mxu0 0.0
    %421 = vmatpush1.xpose.msra.mxu0 0.0
    %422 = vmatprep.subr.mxu0 0.0
    %423 = vmatpush1.xpose.msra.mxu0 0.0
    %424 = vmatprep.subr.mxu0 0.0
    %425 = vmatpush1.xpose.msra.mxu0 0.0
    %426 = vmatprep.subr.mxu0 0.0
    %427 = vmatpush1.xpose.msra.mxu0 0.0
    %428 = vmatprep.subr.mxu0 0.0
    %429 = vmatpush1.xpose.msra.mxu0 0.0
    %430 = vmatprep.subr.mxu0 0.0
    %431 = vmatpush1.xpose.msra.mxu0 0.0
    %432 = vmatprep.subr.mxu0 0.0
    %433 = vmatpush1.xpose.msra.mxu0 0.0
    %434 = vmatprep.subr.mxu0 0.0
    %435 = vmatpush1.xpose.msra.mxu0 0.0
    %436 = vmatprep.subr.mxu0 0.0
    %437 = vmatpush1.xpose.msra.mxu0 0.0
    %438 = vmatprep.subr.mxu0 0.0
    %439 = vmatpush1.xpose.msra.mxu0 0.0
    %440 = vmatprep.subr.mxu0 0.0
    %441 = vmatpush1.xpose.msra.mxu0 0.0
    %442 = vmatprep.subr.mxu0 0.0
    %443 = vmatpush1.xpose.msra.mxu0 0.0
    %444 = vmatprep.subr.mxu0 0.0
    %445 = vmatpush1.xpose.msra.mxu0 0.0
    %446 = vmatprep.subr.mxu0 0.0
    %447 = vmatpush1.xpose.msra.mxu0 0.0
    %448 = vmatprep.subr.mxu0 0.0
    %449 = vmatpush1.xpose.msra.mxu0 0.0
    %450 = vmatprep.subr.mxu0 0.0
    %451 = vmatpush1.xpose.msra.mxu0 0.0
    %452 = vmatprep.subr.mxu0 0.0
    %453 = vmatpush1.xpose.msra.mxu0 0.0
    %454 = vmatprep.subr.mxu0 0.0
    %455 = vmatpush1.xpose.msra.mxu0 0.0
    %456 = vmatprep.subr.mxu0 0.0
    %457 = vmatpush1.xpose.msra.mxu0 0.0
    %458 = vmatprep.subr.mxu0 0.0
    %459 = vmatpush1.xpose.msra.mxu0 0.0
    %460 = vmatprep.subr.mxu0 0.0
    %461 = vmatpush1.xpose.msra.mxu0 0.0
    %462 = vmatprep.subr.mxu0 0.0
    %463 = vmatpush1.xpose.msra.mxu0 0.0
    %464 = vmatprep.subr.mxu0 0.0
    %465 = vmatpush1.xpose.msra.mxu0 0.0
    %466 = vmatprep.subr.mxu0 0.0
    %467 = vmatpush1.xpose.msra.mxu0 0.0
    %468 = vmatprep.subr.mxu0 0.0
    %469 = vmatpush1.xpose.msra.mxu0 0.0
    %470 = vmatprep.subr.mxu0 0.0
    %471 = vmatpush1.xpose.msra.mxu0 0.0
    %472 = vmatprep.subr.mxu0 0.0
    %473 = vmatpush1.xpose.msra.mxu0 0.0
    %474 = vmatprep.subr.mxu0 0.0
    %475 = vmatpush1.xpose.msra.mxu0 0.0
    %476 = vmatprep.mubr.f32.mxu0 0.0
    %477 = vmatmul.mubr.f32.gmra.mrb[0].mxu0 %v404
    %v478 = vpop.f32.mrb[0].mxu0
    %v479 = vadd.f32 %v96, %v478
    %v480 = vpop.f32.mrb[0].mxu0
    %481 = vmatprep.mubr.f32.mxu0 0.0
    %482 = vmatmul.mubr.f32.gmra.mrb[0].mxu0 %v406
    %v483 = vpop.f32.mrb[0].mxu0
    %v484 = vadd.f32 %v97, %v483
    %v485 = vpop.f32.mrb[0].mxu0
    %486 = vdwg.mxu0
    %v487 = vsel %vm286, %v479, -inf
    %488 = vmax.xlane.f32.xlu0 %v487
    %v489 = vpop.xlane.xlu0 %488
    %v490 = vsel %vm286, %v484, -inf
    %491 = vmax.xlane.f32.xlu0 %v490
    %v492 = vpop.xlane.xlu0 %491
    %v493 = vsub.f32 %v479, %v489
    %v494 = vsub.f32 %v484, %v492
    %v495 = vmul.f32 %v493, 1.442695
    %v496 = vpow.pop %v495
    %v497 = vmul.f32 %v494, 1.442695
    %v498 = vpow.pop %v497
    %v499 = vsel %vm286, %v496, 0.0
    %500 = vadd.xlane.f32.xlu0 %v499
    %v501 = vpop.xlane.xlu0 %500
    %v502 = vsel %vm286, %v498, 0.0
    %503 = vadd.xlane.f32.xlu0 %v502
    %v504 = vpop.xlane.xlu0 %503
    %v505 = vrcp.pop %v501
    %v506 = vmul.f32 %v496, %v505
    %v507 = vrcp.pop %v504
    %v508 = vmul.f32 %v498, %v507
    %509 = vrot.lane.b32.xlu0 %v183, 56
    %v510 = vpop.permute.xlu0 %509
    %511 = vrot.lane.b32.xlu0 %v188, 56
    %v512 = vpop.permute.xlu0 %511
    %v516 = vsel %vm286, %v506, 0
    %v519 = vsel %vm286, %v508, 0
    %521 = vmatprep.subr.mxu0 0.0
    %522 = vmatpush1.msra.mxu0 %v510
    %523 = vmatprep.subr.mxu0 0.0
    %524 = vmatpush1.msra.mxu0 %v512
    %525 = vmatprep.subr.mxu0 0.0
    %526 = vmatpush1.msra.mxu0 0.0
    %527 = vmatprep.subr.mxu0 0.0
    %528 = vmatpush1.msra.mxu0 0.0
    %529 = vmatprep.subr.mxu0 0.0
    %530 = vmatpush1.msra.mxu0 0.0
    %531 = vmatprep.subr.mxu0 0.0
    %532 = vmatpush1.msra.mxu0 0.0
    %533 = vmatprep.subr.mxu0 0.0
    %534 = vmatpush1.msra.mxu0 0.0
    %535 = vmatprep.subr.mxu0 0.0
    %536 = vmatpush1.msra.mxu0 0.0
    %537 = vmatprep.subr.mxu0 0.0
    %538 = vmatpush1.msra.mxu0 0.0
    %539 = vmatprep.subr.mxu0 0.0
    %540 = vmatpush1.msra.mxu0 0.0
    %541 = vmatprep.subr.mxu0 0.0
    %542 = vmatpush1.msra.mxu0 0.0
    %543 = vmatprep.subr.mxu0 0.0
    %544 = vmatpush1.msra.mxu0 0.0
    %545 = vmatprep.subr.mxu0 0.0
    %546 = vmatpush1.msra.mxu0 0.0
    %547 = vmatprep.subr.mxu0 0.0
    %548 = vmatpush1.msra.mxu0 0.0
    %549 = vmatprep.subr.mxu0 0.0
    %550 = vmatpush1.msra.mxu0 0.0
    %551 = vmatprep.subr.mxu0 0.0
    %552 = vmatpush1.msra.mxu0 0.0
    %553 = vmatprep.subr.mxu0 0.0
    %554 = vmatpush1.msra.mxu0 0.0
    %555 = vmatprep.subr.mxu0 0.0
    %556 = vmatpush1.msra.mxu0 0.0
    %557 = vmatprep.subr.mxu0 0.0
    %558 = vmatpush1.msra.mxu0 0.0
    %559 = vmatprep.subr.mxu0 0.0
    %560 = vmatpush1.msra.mxu0 0.0
    %561 = vmatprep.subr.mxu0 0.0
    %562 = vmatpush1.msra.mxu0 0.0
    %563 = vmatprep.subr.mxu0 0.0
    %564 = vmatpush1.msra.mxu0 0.0
    %565 = vmatprep.subr.mxu0 0.0
    %566 = vmatpush1.msra.mxu0 0.0
    %567 = vmatprep.subr.mxu0 0.0
    %568 = vmatpush1.msra.mxu0 0.0
    %569 = vmatprep.subr.mxu0 0.0
    %570 = vmatpush1.msra.mxu0 0.0
    %571 = vmatprep.subr.mxu0 0.0
    %572 = vmatpush1.msra.mxu0 0.0
    %573 = vmatprep.subr.mxu0 0.0
    %574 = vmatpush1.msra.mxu0 0.0
    %575 = vmatprep.subr.mxu0 0.0
    %576 = vmatpush1.msra.mxu0 0.0
    %577 = vmatprep.subr.mxu0 0.0
    %578 = vmatpush1.msra.mxu0 0.0
    %579 = vmatprep.subr.mxu0 0.0
    %580 = vmatpush1.msra.mxu0 0.0
    %581 = vmatprep.subr.mxu0 0.0
    %582 = vmatpush1.msra.mxu0 0.0
    %583 = vmatprep.subr.mxu0 0.0
    %584 = vmatpush1.msra.mxu0 0.0
    %585 = vmatprep.mubr.f32.mxu0 0.0
    %586 = vmatmul.mubr.f32.gmra.mrb[0].mxu0 %v516
    %v587 = vpop.f32.mrb[0].mxu0
    %v588 = vadd.f32 0.0, %v587
    %v589 = vpop.f32.mrb[0].mxu0
    %590 = vmatprep.mubr.f32.mxu0 0.0
    %591 = vmatmul.mubr.f32.gmra.mrb[0].mxu0 %v519
    %v592 = vpop.f32.mrb[0].mxu0
    %v593 = vadd.f32 0.0, %v592
    %v594 = vpop.f32.mrb[0].mxu0
    %595 = vdwg.mxu0
    %v597 = vsel %vm202, %v588, 0
    %v600 = vsel %vm202, %v593, 0
    %602 = vmatprep.subr.mxu0 0.0
    %603 = vmatpush1.msra.mxu0 %v192
    %604 = vmatprep.subr.mxu0 0.0
    %605 = vmatpush1.msra.mxu0 0.0
    %606 = vmatprep.subr.mxu0 0.0
    %607 = vmatpush1.msra.mxu0 0.0
    %608 = vmatprep.subr.mxu0 0.0
    %609 = vmatpush1.msra.mxu0 0.0
    %610 = vmatprep.subr.mxu0 0.0
    %611 = vmatpush1.msra.mxu0 0.0
    %612 = vmatprep.subr.mxu0 0.0
    %613 = vmatpush1.msra.mxu0 0.0
    %614 = vmatprep.subr.mxu0 0.0
    %615 = vmatpush1.msra.mxu0 0.0
    %616 = vmatprep.subr.mxu0 0.0
    %617 = vmatpush1.msra.mxu0 0.0
    %618 = vmatprep.subr.mxu0 0.0
    %619 = vmatpush1.msra.mxu0 0.0
    %620 = vmatprep.subr.mxu0 0.0
    %621 = vmatpush1.msra.mxu0 0.0
    %622 = vmatprep.subr.mxu0 0.0
    %623 = vmatpush1.msra.mxu0 0.0
    %624 = vmatprep.subr.mxu0 0.0
    %625 = vmatpush1.msra.mxu0 0.0
    %626 = vmatprep.subr.mxu0 0.0
    %627 = vmatpush1.msra.mxu0 0.0
    %628 = vmatprep.subr.mxu0 0.0
    %629 = vmatpush1.msra.mxu0 0.0
    %630 = vmatprep.subr.mxu0 0.0
    %631 = vmatpush1.msra.mxu0 0.0
    %632 = vmatprep.subr.mxu0 0.0
    %633 = vmatpush1.msra.mxu0 0.0
    %634 = vmatprep.subr.mxu0 0.0
    %635 = vmatpush1.msra.mxu0 0.0
    %636 = vmatprep.subr.mxu0 0.0
    %637 = vmatpush1.msra.mxu0 0.0
    %638 = vmatprep.subr.mxu0 0.0
    %639 = vmatpush1.msra.mxu0 0.0
    %640 = vmatprep.subr.mxu0 0.0
    %641 = vmatpush1.msra.mxu0 0.0
    %642 = vmatprep.subr.mxu0 0.0
    %643 = vmatpush1.msra.mxu0 0.0
    %644 = vmatprep.subr.mxu0 0.0
    %645 = vmatpush1.msra.mxu0 0.0
    %646 = vmatprep.subr.mxu0 0.0
    %647 = vmatpush1.msra.mxu0 0.0
    %648 = vmatprep.subr.mxu0 0.0
    %649 = vmatpush1.msra.mxu0 0.0
    %650 = vmatprep.subr.mxu0 0.0
    %651 = vmatpush1.msra.mxu0 0.0
    %652 = vmatprep.subr.mxu0 0.0
    %653 = vmatpush1.msra.mxu0 0.0
    %654 = vmatprep.subr.mxu0 0.0
    %655 = vmatpush1.msra.mxu0 0.0
    %656 = vmatprep.subr.mxu0 0.0
    %657 = vmatpush1.msra.mxu0 0.0
    %658 = vmatprep.subr.mxu0 0.0
    %659 = vmatpush1.msra.mxu0 0.0
    %660 = vmatprep.subr.mxu0 0.0
    %661 = vmatpush1.msra.mxu0 0.0
    %662 = vmatprep.subr.mxu0 0.0
    %663 = vmatpush1.msra.mxu0 0.0
    %664 = vmatprep.subr.mxu0 0.0
    %665 = vmatpush1.msra.mxu0 0.0
    %666 = vmatprep.mubr.f32.mxu0 0.0
    %667 = vmatmul.mubr.f32.gmra.mrb[0].mxu0 %v597
    %v668 = vpop.f32.mrb[0].mxu0
    %v669 = vadd.f32 0.0, %v668
    %v670 = vpop.f32.mrb[0].mxu0
    %671 = vmatprep.mubr.f32.mxu0 0.0
    %672 = vmatmul.mubr.f32.gmra.mrb[0].mxu0 %v600
    %v673 = vpop.f32.mrb[0].mxu0
    %v674 = vadd.f32 0.0, %v673
    %v675 = vpop.f32.mrb[0].mxu0
    %676 = vdwg.mxu0
    %v678 = vsel %vm202, %v388, 0
    %v681 = vsel %vm202, %v393, 0
    %683 = vmatprep.subr.mxu0 0.0
    %684 = vmatpush1.msra.mxu0 %v191
    %685 = vmatprep.subr.mxu0 0.0
    %686 = vmatpush1.msra.mxu0 0.0
    %687 = vmatprep.subr.mxu0 0.0
    %688 = vmatpush1.msra.mxu0 0.0
    %689 = vmatprep.subr.mxu0 0.0
    %690 = vmatpush1.msra.mxu0 0.0
    %691 = vmatprep.subr.mxu0 0.0
    %692 = vmatpush1.msra.mxu0 0.0
    %693 = vmatprep.subr.mxu0 0.0
    %694 = vmatpush1.msra.mxu0 0.0
    %695 = vmatprep.subr.mxu0 0.0
    %696 = vmatpush1.msra.mxu0 0.0
    %697 = vmatprep.subr.mxu0 0.0
    %698 = vmatpush1.msra.mxu0 0.0
    %699 = vmatprep.subr.mxu0 0.0
    %700 = vmatpush1.msra.mxu0 0.0
    %701 = vmatprep.subr.mxu0 0.0
    %702 = vmatpush1.msra.mxu0 0.0
    %703 = vmatprep.subr.mxu0 0.0
    %704 = vmatpush1.msra.mxu0 0.0
    %705 = vmatprep.subr.mxu0 0.0
    %706 = vmatpush1.msra.mxu0 0.0
    %707 = vmatprep.subr.mxu0 0.0
    %708 = vmatpush1.msra.mxu0 0.0
    %709 = vmatprep.subr.mxu0 0.0
    %710 = vmatpush1.msra.mxu0 0.0
    %711 = vmatprep.subr.mxu0 0.0
    %712 = vmatpush1.msra.mxu0 0.0
    %713 = vmatprep.subr.mxu0 0.0
    %714 = vmatpush1.msra.mxu0 0.0
    %715 = vmatprep.subr.mxu0 0.0
    %716 = vmatpush1.msra.mxu0 0.0
    %717 = vmatprep.subr.mxu0 0.0
    %718 = vmatpush1.msra.mxu0 0.0
    %719 = vmatprep.subr.mxu0 0.0
    %720 = vmatpush1.msra.mxu0 0.0
    %721 = vmatprep.subr.mxu0 0.0
    %722 = vmatpush1.msra.mxu0 0.0
    %723 = vmatprep.subr.mxu0 0.0
    %724 = vmatpush1.msra.mxu0 0.0
    %725 = vmatprep.subr.mxu0 0.0
    %726 = vmatpush1.msra.mxu0 0.0
    %727 = vmatprep.subr.mxu0 0.0
    %728 = vmatpush1.msra.mxu0 0.0
    %729 = vmatprep.subr.mxu0 0.0
    %730 = vmatpush1.msra.mxu0 0.0
    %731 = vmatprep.subr.mxu0 0.0
    %732 = vmatpush1.msra.mxu0 0.0
    %733 = vmatprep.subr.mxu0 0.0
    %734 = vmatpush1.msra.mxu0 0.0
    %735 = vmatprep.subr.mxu0 0.0
    %736 = vmatpush1.msra.mxu0 0.0
    %737 = vmatprep.subr.mxu0 0.0
    %738 = vmatpush1.msra.mxu0 0.0
    %739 = vmatprep.subr.mxu0 0.0
    %740 = vmatpush1.msra.mxu0 0.0
    %741 = vmatprep.subr.mxu0 0.0
    %742 = vmatpush1.msra.mxu0 0.0
    %743 = vmatprep.subr.mxu0 0.0
    %744 = vmatpush1.msra.mxu0 0.0
    %745 = vmatprep.subr.mxu0 0.0
    %746 = vmatpush1.msra.mxu0 0.0
    %747 = vmatprep.mubr.f32.mxu0 0.0
    %748 = vmatmul.mubr.f32.gmra.mrb[0].mxu0 %v678
    %v749 = vpop.f32.mrb[0].mxu0
    %v750 = vadd.f32 %v669, %v749
    %v751 = vpop.f32.mrb[0].mxu0
    %752 = vmatprep.mubr.f32.mxu0 0.0
    %753 = vmatmul.mubr.f32.gmra.mrb[0].mxu0 %v681
    %v754 = vpop.f32.mrb[0].mxu0
    %v755 = vadd.f32 %v674, %v754
    %v756 = vpop.f32.mrb[0].mxu0
    %757 = vdwg.mxu0
    %758 = vrot.lane.b32.xlu0 %v183, 112
    %v759 = vpop.permute.xlu0 %758
    %760 = vrot.lane.b32.xlu0 %v188, 112
    %v761 = vpop.permute.xlu0 %760
    %762 = vrot.lane.b32.xlu0 %v183, 80
    %v763 = vpop.permute.xlu0 %762
    %764 = vrot.lane.b32.xlu0 %v188, 80
    %v765 = vpop.permute.xlu0 %764
    %v766 = vsel %vm202, %v759, 0
    %v768 = vsel %vm202, %v761, 0
    %v770 = vsel %vm202, %v763, 0
    %v772 = vsel %vm202, %v765, 0
    %774 = vmatprep.subr.mxu0 0.0
    %775 = vmatpush1.xpose.msra.mxu0 %v770
    %776 = vmatprep.subr.mxu0 0.0
    %777 = vmatpush1.xpose.msra.mxu0 %v772
    %778 = vmatprep.subr.mxu0 0.0
    %779 = vmatpush1.xpose.msra.mxu0 0.0
    %780 = vmatprep.subr.mxu0 0.0
    %781 = vmatpush1.xpose.msra.mxu0 0.0
    %782 = vmatprep.subr.mxu0 0.0
    %783 = vmatpush1.xpose.msra.mxu0 0.0
    %784 = vmatprep.subr.mxu0 0.0
    %785 = vmatpush1.xpose.msra.mxu0 0.0
    %786 = vmatprep.subr.mxu0 0.0
    %787 = vmatpush1.xpose.msra.mxu0 0.0
    %788 = vmatprep.subr.mxu0 0.0
    %789 = vmatpush1.xpose.msra.mxu0 0.0
    %790 = vmatprep.subr.mxu0 0.0
    %791 = vmatpush1.xpose.msra.mxu0 0.0
    %792 = vmatprep.subr.mxu0 0.0
    %793 = vmatpush1.xpose.msra.mxu0 0.0
    %794 = vmatprep.subr.mxu0 0.0
    %795 = vmatpush1.xpose.msra.mxu0 0.0
    %796 = vmatprep.subr.mxu0 0.0
    %797 = vmatpush1.xpose.msra.mxu0 0.0
    %798 = vmatprep.subr.mxu0 0.0
    %799 = vmatpush1.xpose.msra.mxu0 0.0
    %800 = vmatprep.subr.mxu0 0.0
    %801 = vmatpush1.xpose.msra.mxu0 0.0
    %802 = vmatprep.subr.mxu0 0.0
    %803 = vmatpush1.xpose.msra.mxu0 0.0
    %804 = vmatprep.subr.mxu0 0.0
    %805 = vmatpush1.xpose.msra.mxu0 0.0
    %806 = vmatprep.subr.mxu0 0.0
    %807 = vmatpush1.xpose.msra.mxu0 0.0
    %808 = vmatprep.subr.mxu0 0.0
    %809 = vmatpush1.xpose.msra.mxu0 0.0
    %810 = vmatprep.subr.mxu0 0.0
    %811 = vmatpush1.xpose.msra.mxu0 0.0
    %812 = vmatprep.subr.mxu0 0.0
    %813 = vmatpush1.xpose.msra.mxu0 0.0
    %814 = vmatprep.subr.mxu0 0.0
    %815 = vmatpush1.xpose.msra.mxu0 0.0
    %816 = vmatprep.subr.mxu0 0.0
    %817 = vmatpush1.xpose.msra.mxu0 0.0
    %818 = vmatprep.subr.mxu0 0.0
    %819 = vmatpush1.xpose.msra.mxu0 0.0
    %820 = vmatprep.subr.mxu0 0.0
    %821 = vmatpush1.xpose.msra.mxu0 0.0
    %822 = vmatprep.subr.mxu0 0.0
    %823 = vmatpush1.xpose.msra.mxu0 0.0
    %824 = vmatprep.subr.mxu0 0.0
    %825 = vmatpush1.xpose.msra.mxu0 0.0
    %826 = vmatprep.subr.mxu0 0.0
    %827 = vmatpush1.xpose.msra.mxu0 0.0
    %828 = vmatprep.subr.mxu0 0.0
    %829 = vmatpush1.xpose.msra.mxu0 0.0
    %830 = vmatprep.subr.mxu0 0.0
    %831 = vmatpush1.xpose.msra.mxu0 0.0
    %832 = vmatprep.subr.mxu0 0.0
    %833 = vmatpush1.xpose.msra.mxu0 0.0
    %834 = vmatprep.subr.mxu0 0.0
    %835 = vmatpush1.xpose.msra.mxu0 0.0
    %836 = vmatprep.subr.mxu0 0.0
    %837 = vmatpush1.xpose.msra.mxu0 0.0
    %838 = vmatprep.mubr.f32.mxu0 0.0
    %839 = vmatmul.mubr.f32.gmra.mrb[0].mxu0 %v766
    %v840 = vpop.f32.mrb[0].mxu0
    %v841 = vadd.f32 %v96, %v840
    %v842 = vpop.f32.mrb[0].mxu0
    %843 = vmatprep.mubr.f32.mxu0 0.0
    %844 = vmatmul.mubr.f32.gmra.mrb[0].mxu0 %v768
    %v845 = vpop.f32.mrb[0].mxu0
    %v846 = vadd.f32 %v97, %v845
    %v847 = vpop.f32.mrb[0].mxu0
    %848 = vdwg.mxu0
    %v849 = vsel %vm286, %v841, -inf
    %850 = vmax.xlane.f32.xlu0 %v849
    %v851 = vpop.xlane.xlu0 %850
    %v852 = vsel %vm286, %v846, -inf
    %853 = vmax.xlane.f32.xlu0 %v852
    %v854 = vpop.xlane.xlu0 %853
    %v855 = vsub.f32 %v841, %v851
    %v856 = vsub.f32 %v846, %v854
    %v857 = vmul.f32 %v855, 1.442695
    %v858 = vpow.pop %v857
    %v859 = vmul.f32 %v856, 1.442695
    %v860 = vpow.pop %v859
    %v861 = vsel %vm286, %v858, 0.0
    %862 = vadd.xlane.f32.xlu0 %v861
    %v863 = vpop.xlane.xlu0 %862
    %v864 = vsel %vm286, %v860, 0.0
    %865 = vadd.xlane.f32.xlu0 %v864
    %v866 = vpop.xlane.xlu0 %865
    %v867 = vrcp.pop %v863
    %v868 = vmul.f32 %v858, %v867
    %v869 = vrcp.pop %v866
    %v870 = vmul.f32 %v860, %v869
    %871 = vrot.lane.b32.xlu0 %v183, 48
    %v872 = vpop.permute.xlu0 %871
    %873 = vrot.lane.b32.xlu0 %v188, 48
    %v874 = vpop.permute.xlu0 %873
    %v878 = vsel %vm286, %v868, 0
    %v881 = vsel %vm286, %v870, 0
    %883 = vmatprep.subr.mxu0 0.0
    %884 = vmatpush1.msra.mxu0 %v872
    %885 = vmatprep.subr.mxu0 0.0
    %886 = vmatpush1.msra.mxu0 %v874
    %887 = vmatprep.subr.mxu0 0.0
    %888 = vmatpush1.msra.mxu0 0.0
    %889 = vmatprep.subr.mxu0 0.0
    %890 = vmatpush1.msra.mxu0 0.0
    %891 = vmatprep.subr.mxu0 0.0
    %892 = vmatpush1.msra.mxu0 0.0
    %893 = vmatprep.subr.mxu0 0.0
    %894 = vmatpush1.msra.mxu0 0.0
    %895 = vmatprep.subr.mxu0 0.0
    %896 = vmatpush1.msra.mxu0 0.0
    %897 = vmatprep.subr.mxu0 0.0
    %898 = vmatpush1.msra.mxu0 0.0
    %899 = vmatprep.subr.mxu0 0.0
    %900 = vmatpush1.msra.mxu0 0.0
    %901 = vmatprep.subr.mxu0 0.0
    %902 = vmatpush1.msra.mxu0 0.0
    %903 = vmatprep.subr.mxu0 0.0
    %904 = vmatpush1.msra.mxu0 0.0
    %905 = vmatprep.subr.mxu0 0.0
    %906 = vmatpush1.msra.mxu0 0.0
    %907 = vmatprep.subr.mxu0 0.0
    %908 = vmatpush1.msra.mxu0 0.0
    %909 = vmatprep.subr.mxu0 0.0
    %910 = vmatpush1.msra.mxu0 0.0
    %911 = vmatprep.subr.mxu0 0.0
    %912 = vmatpush1.msra.mxu0 0.0
    %913 = vmatprep.subr.mxu0 0.0
    %914 = vmatpush1.msra.mxu0 0.0
    %915 = vmatprep.subr.mxu0 0.0
    %916 = vmatpush1.msra.mxu0 0.0
    %917 = vmatprep.subr.mxu0 0.0
    %918 = vmatpush1.msra.mxu0 0.0
    %919 = vmatprep.subr.mxu0 0.0
    %920 = vmatpush1.msra.mxu0 0.0
    %921 = vmatprep.subr.mxu0 0.0
    %922 = vmatpush1.msra.mxu0 0.0
    %923 = vmatprep.subr.mxu0 0.0
    %924 = vmatpush1.msra.mxu0 0.0
    %925 = vmatprep.subr.mxu0 0.0
    %926 = vmatpush1.msra.mxu0 0.0
    %927 = vmatprep.subr.mxu0 0.0
    %928 = vmatpush1.msra.mxu0 0.0
    %929 = vmatprep.subr.mxu0 0.0
    %930 = vmatpush1.msra.mxu0 0.0
    %931 = vmatprep.subr.mxu0 0.0
    %932 = vmatpush1.msra.mxu0 0.0
    %933 = vmatprep.subr.mxu0 0.0
    %934 = vmatpush1.msra.mxu0 0.0
    %935 = vmatprep.subr.mxu0 0.0
    %936 = vmatpush1.msra.mxu0 0.0
    %937 = vmatprep.subr.mxu0 0.0
    %938 = vmatpush1.msra.mxu0 0.0
    %939 = vmatprep.subr.mxu0 0.0
    %940 = vmatpush1.msra.mxu0 0.0
    %941 = vmatprep.subr.mxu0 0.0
    %942 = vmatpush1.msra.mxu0 0.0
    %943 = vmatprep.subr.mxu0 0.0
    %944 = vmatpush1.msra.mxu0 0.0
    %945 = vmatprep.subr.mxu0 0.0
    %946 = vmatpush1.msra.mxu0 0.0
    %947 = vmatprep.mubr.f32.mxu0 0.0
    %948 = vmatmul.mubr.f32.gmra.mrb[0].mxu0 %v878
    %v949 = vpop.f32.mrb[0].mxu0
    %v950 = vadd.f32 0.0, %v949
    %v951 = vpop.f32.mrb[0].mxu0
    %952 = vmatprep.mubr.f32.mxu0 0.0
    %953 = vmatmul.mubr.f32.gmra.mrb[0].mxu0 %v881
    %v954 = vpop.f32.mrb[0].mxu0
    %v955 = vadd.f32 0.0, %v954
    %v956 = vpop.f32.mrb[0].mxu0
    %957 = vdwg.mxu0
    %v959 = vsel %vm202, %v950, 0
    %v962 = vsel %vm202, %v955, 0
    %964 = vmatprep.subr.mxu0 0.0
    %965 = vmatpush1.msra.mxu0 %v193
    %966 = vmatprep.subr.mxu0 0.0
    %967 = vmatpush1.msra.mxu0 0.0
    %968 = vmatprep.subr.mxu0 0.0
    %969 = vmatpush1.msra.mxu0 0.0
    %970 = vmatprep.subr.mxu0 0.0
    %971 = vmatpush1.msra.mxu0 0.0
    %972 = vmatprep.subr.mxu0 0.0
    %973 = vmatpush1.msra.mxu0 0.0
    %974 = vmatprep.subr.mxu0 0.0
    %975 = vmatpush1.msra.mxu0 0.0
    %976 = vmatprep.subr.mxu0 0.0
    %977 = vmatpush1.msra.mxu0 0.0
    %978 = vmatprep.subr.mxu0 0.0
    %979 = vmatpush1.msra.mxu0 0.0
    %980 = vmatprep.subr.mxu0 0.0
    %981 = vmatpush1.msra.mxu0 0.0
    %982 = vmatprep.subr.mxu0 0.0
    %983 = vmatpush1.msra.mxu0 0.0
    %984 = vmatprep.subr.mxu0 0.0
    %985 = vmatpush1.msra.mxu0 0.0
    %986 = vmatprep.subr.mxu0 0.0
    %987 = vmatpush1.msra.mxu0 0.0
    %988 = vmatprep.subr.mxu0 0.0
    %989 = vmatpush1.msra.mxu0 0.0
    %990 = vmatprep.subr.mxu0 0.0
    %991 = vmatpush1.msra.mxu0 0.0
    %992 = vmatprep.subr.mxu0 0.0
    %993 = vmatpush1.msra.mxu0 0.0
    %994 = vmatprep.subr.mxu0 0.0
    %995 = vmatpush1.msra.mxu0 0.0
    %996 = vmatprep.subr.mxu0 0.0
    %997 = vmatpush1.msra.mxu0 0.0
    %998 = vmatprep.subr.mxu0 0.0
    %999 = vmatpush1.msra.mxu0 0.0
    %1000 = vmatprep.subr.mxu0 0.0
    %1001 = vmatpush1.msra.mxu0 0.0
    %1002 = vmatprep.subr.mxu0 0.0
    %1003 = vmatpush1.msra.mxu0 0.0
    %1004 = vmatprep.subr.mxu0 0.0
    %1005 = vmatpush1.msra.mxu0 0.0
    %1006 = vmatprep.subr.mxu0 0.0
    %1007 = vmatpush1.msra.mxu0 0.0
    %1008 = vmatprep.subr.mxu0 0.0
    %1009 = vmatpush1.msra.mxu0 0.0
    %1010 = vmatprep.subr.mxu0 0.0
    %1011 = vmatpush1.msra.mxu0 0.0
    %1012 = vmatprep.subr.mxu0 0.0
    %1013 = vmatpush1.msra.mxu0 0.0
    %1014 = vmatprep.subr.mxu0 0.0
    %1015 = vmatpush1.msra.mxu0 0.0
    %1016 = vmatprep.subr.mxu0 0.0
    %1017 = vmatpush1.msra.mxu0 0.0
    %1018 = vmatprep.subr.mxu0 0.0
    %1019 = vmatpush1.msra.mxu0 0.0
    %1020 = vmatprep.subr.mxu0 0.0
    %1021 = vmatpush1.msra.mxu0 0.0
    %1022 = vmatprep.subr.mxu0 0.0
    %1023 = vmatpush1.msra.mxu0 0.0
    %1024 = vmatprep.subr.mxu0 0.0
    %1025 = vmatpush1.msra.mxu0 0.0
    %1026 = vmatprep.subr.mxu0 0.0
    %1027 = vmatpush1.msra.mxu0 0.0
    %1028 = vmatprep.mubr.f32.mxu0 0.0
    %1029 = vmatmul.mubr.f32.gmra.mrb[0].mxu0 %v959
    %v1030 = vpop.f32.mrb[0].mxu0
    %v1031 = vadd.f32 0.0, %v1030
    %v1032 = vpop.f32.mrb[0].mxu0
    %1033 = vmatprep.mubr.f32.mxu0 0.0
    %1034 = vmatmul.mubr.f32.gmra.mrb[0].mxu0 %v962
    %v1035 = vpop.f32.mrb[0].mxu0
    %v1036 = vadd.f32 0.0, %v1035
    %v1037 = vpop.f32.mrb[0].mxu0
    %1038 = vdwg.mxu0
    %v1039 = vadd.f32 %v750, %v1031
    %v1040 = vadd.f32 %v755, %v1036
    %1041 = vrot.lane.b32.xlu0 %v183, 104
    %v1042 = vpop.permute.xlu0 %1041
    %1043 = vrot.lane.b32.xlu0 %v188, 104
    %v1044 = vpop.permute.xlu0 %1043
    %1045 = vrot.lane.b32.xlu0 %v183, 72
    %v1046 = vpop.permute.xlu0 %1045
    %1047 = vrot.lane.b32.xlu0 %v188, 72
    %v1048 = vpop.permute.xlu0 %1047
    %v1049 = vsel %vm202, %v1042, 0
    %v1051 = vsel %vm202, %v1044, 0
    %v1053 = vsel %vm202, %v1046, 0
    %v1055 = vsel %vm202, %v1048, 0
    %1057 = vmatprep.subr.mxu0 0.0
    %1058 = vmatpush1.xpose.msra.mxu0 %v1053
    %1059 = vmatprep.subr.mxu0 0.0
    %1060 = vmatpush1.xpose.msra.mxu0 %v1055
    %1061 = vmatprep.subr.mxu0 0.0
    %1062 = vmatpush1.xpose.msra.mxu0 0.0
    %1063 = vmatprep.subr.mxu0 0.0
    %1064 = vmatpush1.xpose.msra.mxu0 0.0
    %1065 = vmatprep.subr.mxu0 0.0
    %1066 = vmatpush1.xpose.msra.mxu0 0.0
    %1067 = vmatprep.subr.mxu0 0.0
    %1068 = vmatpush1.xpose.msra.mxu0 0.0
    %1069 = vmatprep.subr.mxu0 0.0
    %1070 = vmatpush1.xpose.msra.mxu0 0.0
    %1071 = vmatprep.subr.mxu0 0.0
    %1072 = vmatpush1.xpose.msra.mxu0 0.0
    %1073 = vmatprep.subr.mxu0 0.0
    %1074 = vmatpush1.xpose.msra.mxu0 0.0
    %1075 = vmatprep.subr.mxu0 0.0
    %1076 = vmatpush1.xpose.msra.mxu0 0.0
    %1077 = vmatprep.subr.mxu0 0.0
    %1078 = vmatpush1.xpose.msra.mxu0 0.0
    %1079 = vmatprep.subr.mxu0 0.0
    %1080 = vmatpush1.xpose.msra.mxu0 0.0
    %1081 = vmatprep.subr.mxu0 0.0
    %1082 = vmatpush1.xpose.msra.mxu0 0.0
    %1083 = vmatprep.subr.mxu0 0.0
    %1084 = vmatpush1.xpose.msra.mxu0 0.0
    %1085 = vmatprep.subr.mxu0 0.0
    %1086 = vmatpush1.xpose.msra.mxu0 0.0
    %1087 = vmatprep.subr.mxu0 0.0
    %1088 = vmatpush1.xpose.msra.mxu0 0.0
    %1089 = vmatprep.subr.mxu0 0.0
    %1090 = vmatpush1.xpose.msra.mxu0 0.0
    %1091 = vmatprep.subr.mxu0 0.0
    %1092 = vmatpush1.xpose.msra.mxu0 0.0
    %1093 = vmatprep.subr.mxu0 0.0
    %1094 = vmatpush1.xpose.msra.mxu0 0.0
    %1095 = vmatprep.subr.mxu0 0.0
    %1096 = vmatpush1.xpose.msra.mxu0 0.0
    %1097 = vmatprep.subr.mxu0 0.0
    %1098 = vmatpush1.xpose.msra.mxu0 0.0
    %1099 = vmatprep.subr.mxu0 0.0
    %1100 = vmatpush1.xpose.msra.mxu0 0.0
    %1101 = vmatprep.subr.mxu0 0.0
    %1102 = vmatpush1.xpose.msra.mxu0 0.0
    %1103 = vmatprep.subr.mxu0 0.0
    %1104 = vmatpush1.xpose.msra.mxu0 0.0
    %1105 = vmatprep.subr.mxu0 0.0
    %1106 = vmatpush1.xpose.msra.mxu0 0.0
    %1107 = vmatprep.subr.mxu0 0.0
    %1108 = vmatpush1.xpose.msra.mxu0 0.0
    %1109 = vmatprep.subr.mxu0 0.0
    %1110 = vmatpush1.xpose.msra.mxu0 0.0
    %1111 = vmatprep.subr.mxu0 0.0
    %1112 = vmatpush1.xpose.msra.mxu0 0.0
    %1113 = vmatprep.subr.mxu0 0.0
    %1114 = vmatpush1.xpose.msra.mxu0 0.0
    %1115 = vmatprep.subr.mxu0 0.0
    %1116 = vmatpush1.xpose.msra.mxu0 0.0
    %1117 = vmatprep.subr.mxu0 0.0
    %1118 = vmatpush1.xpose.msra.mxu0 0.0
    %1119 = vmatprep.subr.mxu0 0.0
    %1120 = vmatpush1.xpose.msra.mxu0 0.0
    %1121 = vmatprep.mubr.f32.mxu0 0.0
    %1122 = vmatmul.mubr.f32.gmra.mrb[0].mxu0 %v1049
    %v1123 = vpop.f32.mrb[0].mxu0
    %v1124 = vadd.f32 %v96, %v1123
    %v1125 = vpop.f32.mrb[0].mxu0
    %1126 = vmatprep.mubr.f32.mxu0 0.0
    %1127 = vmatmul.mubr.f32.gmra.mrb[0].mxu0 %v1051
    %v1128 = vpop.f32.mrb[0].mxu0
    %v1129 = vadd.f32 %v97, %v1128
    %v1130 = vpop.f32.mrb[0].mxu0
    %1131 = vdwg.mxu0
    %v1132 = vsel %vm286, %v1124, -inf
    %1133 = vmax.xlane.f32.xlu0 %v1132
    %v1134 = vpop.xlane.xlu0 %1133
    %v1135 = vsel %vm286, %v1129, -inf
    %1136 = vmax.xlane.f32.xlu0 %v1135
    %v1137 = vpop.xlane.xlu0 %1136
    %v1138 = vsub.f32 %v1124, %v1134
    %v1139 = vsub.f32 %v1129, %v1137
    %v1140 = vmul.f32 %v1138, 1.442695
    %v1141 = vpow.pop %v1140
    %v1142 = vmul.f32 %v1139, 1.442695
    %v1143 = vpow.pop %v1142
    %v1144 = vsel %vm286, %v1141, 0.0
    %1145 = vadd.xlane.f32.xlu0 %v1144
    %v1146 = vpop.xlane.xlu0 %1145
    %v1147 = vsel %vm286, %v1143, 0.0
    %1148 = vadd.xlane.f32.xlu0 %v1147
    %v1149 = vpop.xlane.xlu0 %1148
    %v1150 = vrcp.pop %v1146
    %v1151 = vmul.f32 %v1141, %v1150
    %v1152 = vrcp.pop %v1149
    %v1153 = vmul.f32 %v1143, %v1152
    %1154 = vrot.lane.b32.xlu0 %v183, 40
    %v1155 = vpop.permute.xlu0 %1154
    %1156 = vrot.lane.b32.xlu0 %v188, 40
    %v1157 = vpop.permute.xlu0 %1156
    %v1161 = vsel %vm286, %v1151, 0
    %v1164 = vsel %vm286, %v1153, 0
    %1166 = vmatprep.subr.mxu0 0.0
    %1167 = vmatpush1.msra.mxu0 %v1155
    %1168 = vmatprep.subr.mxu0 0.0
    %1169 = vmatpush1.msra.mxu0 %v1157
    %1170 = vmatprep.subr.mxu0 0.0
    %1171 = vmatpush1.msra.mxu0 0.0
    %1172 = vmatprep.subr.mxu0 0.0
    %1173 = vmatpush1.msra.mxu0 0.0
    %1174 = vmatprep.subr.mxu0 0.0
    %1175 = vmatpush1.msra.mxu0 0.0
    %1176 = vmatprep.subr.mxu0 0.0
    %1177 = vmatpush1.msra.mxu0 0.0
    %1178 = vmatprep.subr.mxu0 0.0
    %1179 = vmatpush1.msra.mxu0 0.0
    %1180 = vmatprep.subr.mxu0 0.0
    %1181 = vmatpush1.msra.mxu0 0.0
    %1182 = vmatprep.subr.mxu0 0.0
    %1183 = vmatpush1.msra.mxu0 0.0
    %1184 = vmatprep.subr.mxu0 0.0
    %1185 = vmatpush1.msra.mxu0 0.0
    %1186 = vmatprep.subr.mxu0 0.0
    %1187 = vmatpush1.msra.mxu0 0.0
    %1188 = vmatprep.subr.mxu0 0.0
    %1189 = vmatpush1.msra.mxu0 0.0
    %1190 = vmatprep.subr.mxu0 0.0
    %1191 = vmatpush1.msra.mxu0 0.0
    %1192 = vmatprep.subr.mxu0 0.0
    %1193 = vmatpush1.msra.mxu0 0.0
    %1194 = vmatprep.subr.mxu0 0.0
    %1195 = vmatpush1.msra.mxu0 0.0
    %1196 = vmatprep.subr.mxu0 0.0
    %1197 = vmatpush1.msra.mxu0 0.0
    %1198 = vmatprep.subr.mxu0 0.0
    %1199 = vmatpush1.msra.mxu0 0.0
    %1200 = vmatprep.subr.mxu0 0.0
    %1201 = vmatpush1.msra.mxu0 0.0
    %1202 = vmatprep.subr.mxu0 0.0
    %1203 = vmatpush1.msra.mxu0 0.0
    %1204 = vmatprep.subr.mxu0 0.0
    %1205 = vmatpush1.msra.mxu0 0.0
    %1206 = vmatprep.subr.mxu0 0.0
    %1207 = vmatpush1.msra.mxu0 0.0
    %1208 = vmatprep.subr.mxu0 0.0
    %1209 = vmatpush1.msra.mxu0 0.0
    %1210 = vmatprep.subr.mxu0 0.0
    %1211 = vmatpush1.msra.mxu0 0.0
    %1212 = vmatprep.subr.mxu0 0.0
    %1213 = vmatpush1.msra.mxu0 0.0
    %1214 = vmatprep.subr.mxu0 0.0
    %1215 = vmatpush1.msra.mxu0 0.0
    %1216 = vmatprep.subr.mxu0 0.0
    %1217 = vmatpush1.msra.mxu0 0.0
    %1218 = vmatprep.subr.mxu0 0.0
    %1219 = vmatpush1.msra.mxu0 0.0
    %1220 = vmatprep.subr.mxu0 0.0
    %1221 = vmatpush1.msra.mxu0 0.0
    %1222 = vmatprep.subr.mxu0 0.0
    %1223 = vmatpush1.msra.mxu0 0.0
    %1224 = vmatprep.subr.mxu0 0.0
    %1225 = vmatpush1.msra.mxu0 0.0
    %1226 = vmatprep.subr.mxu0 0.0
    %1227 = vmatpush1.msra.mxu0 0.0
    %1228 = vmatprep.subr.mxu0 0.0
    %1229 = vmatpush1.msra.mxu0 0.0
    %1230 = vmatprep.mubr.f32.mxu0 0.0
    %1231 = vmatmul.mubr.f32.gmra.mrb[0].mxu0 %v1161
    %v1232 = vpop.f32.mrb[0].mxu0
    %v1233 = vadd.f32 0.0, %v1232
    %v1234 = vpop.f32.mrb[0].mxu0
    %1235 = vmatprep.mubr.f32.mxu0 0.0
    %1236 = vmatmul.mubr.f32.gmra.mrb[0].mxu0 %v1164
    %v1237 = vpop.f32.mrb[0].mxu0
    %v1238 = vadd.f32 0.0, %v1237
    %v1239 = vpop.f32.mrb[0].mxu0
    %1240 = vdwg.mxu0
    %v1242 = vsel %vm202, %v1233, 0
    %v1245 = vsel %vm202, %v1238, 0
    %1247 = vmatprep.subr.mxu0 0.0
    %1248 = vmatpush1.msra.mxu0 %v194
    %1249 = vmatprep.subr.mxu0 0.0
    %1250 = vmatpush1.msra.mxu0 0.0
    %1251 = vmatprep.subr.mxu0 0.0
    %1252 = vmatpush1.msra.mxu0 0.0
    %1253 = vmatprep.subr.mxu0 0.0
    %1254 = vmatpush1.msra.mxu0 0.0
    %1255 = vmatprep.subr.mxu0 0.0
    %1256 = vmatpush1.msra.mxu0 0.0
    %1257 = vmatprep.subr.mxu0 0.0
    %1258 = vmatpush1.msra.mxu0 0.0
    %1259 = vmatprep.subr.mxu0 0.0
    %1260 = vmatpush1.msra.mxu0 0.0
    %1261 = vmatprep.subr.mxu0 0.0
    %1262 = vmatpush1.msra.mxu0 0.0
    %1263 = vmatprep.subr.mxu0 0.0
    %1264 = vmatpush1.msra.mxu0 0.0
    %1265 = vmatprep.subr.mxu0 0.0
    %1266 = vmatpush1.msra.mxu0 0.0
    %1267 = vmatprep.subr.mxu0 0.0
    %1268 = vmatpush1.msra.mxu0 0.0
    %1269 = vmatprep.subr.mxu0 0.0
    %1270 = vmatpush1.msra.mxu0 0.0
    %1271 = vmatprep.subr.mxu0 0.0
    %1272 = vmatpush1.msra.mxu0 0.0
    %1273 = vmatprep.subr.mxu0 0.0
    %1274 = vmatpush1.msra.mxu0 0.0
    %1275 = vmatprep.subr.mxu0 0.0
    %1276 = vmatpush1.msra.mxu0 0.0
    %1277 = vmatprep.subr.mxu0 0.0
    %1278 = vmatpush1.msra.mxu0 0.0
    %1279 = vmatprep.subr.mxu0 0.0
    %1280 = vmatpush1.msra.mxu0 0.0
    %1281 = vmatprep.subr.mxu0 0.0
    %1282 = vmatpush1.msra.mxu0 0.0
    %1283 = vmatprep.subr.mxu0 0.0
    %1284 = vmatpush1.msra.mxu0 0.0
    %1285 = vmatprep.subr.mxu0 0.0
    %1286 = vmatpush1.msra.mxu0 0.0
    %1287 = vmatprep.subr.mxu0 0.0
    %1288 = vmatpush1.msra.mxu0 0.0
    %1289 = vmatprep.subr.mxu0 0.0
    %1290 = vmatpush1.msra.mxu0 0.0
    %1291 = vmatprep.subr.mxu0 0.0
    %1292 = vmatpush1.msra.mxu0 0.0
    %1293 = vmatprep.subr.mxu0 0.0
    %1294 = vmatpush1.msra.mxu0 0.0
    %1295 = vmatprep.subr.mxu0 0.0
    %1296 = vmatpush1.msra.mxu0 0.0
    %1297 = vmatprep.subr.mxu0 0.0
    %1298 = vmatpush1.msra.mxu0 0.0
    %1299 = vmatprep.subr.mxu0 0.0
    %1300 = vmatpush1.msra.mxu0 0.0
    %1301 = vmatprep.subr.mxu0 0.0
    %1302 = vmatpush1.msra.mxu0 0.0
    %1303 = vmatprep.subr.mxu0 0.0
    %1304 = vmatpush1.msra.mxu0 0.0
    %1305 = vmatprep.subr.mxu0 0.0
    %1306 = vmatpush1.msra.mxu0 0.0
    %1307 = vmatprep.subr.mxu0 0.0
    %1308 = vmatpush1.msra.mxu0 0.0
    %1309 = vmatprep.subr.mxu0 0.0
    %1310 = vmatpush1.msra.mxu0 0.0
    %1311 = vmatprep.mubr.f32.mxu0 0.0
    %1312 = vmatmul.mubr.f32.gmra.mrb[0].mxu0 %v1242
    %v1313 = vpop.f32.mrb[0].mxu0
    %v1314 = vadd.f32 0.0, %v1313
    %v1315 = vpop.f32.mrb[0].mxu0
    %1316 = vmatprep.mubr.f32.mxu0 0.0
    %1317 = vmatmul.mubr.f32.gmra.mrb[0].mxu0 %v1245
    %v1318 = vpop.f32.mrb[0].mxu0
    %v1319 = vadd.f32 0.0, %v1318
    %v1320 = vpop.f32.mrb[0].mxu0
    %1321 = vdwg.mxu0
    %v1322 = vadd.f32 %v1039, %v1314
    %v1323 = vadd.f32 %v1040, %v1319
    %v1324 = vlaneseq
    %v1325 = vshrl.u32 %v1324, 7
    %v1326 = vsub.s32 0, %v1325
    %v1327 = vrot.slane %v195, %v1326
    %v1328 = vadd.f32 %v1322, %v1327
    %v1329 = vadd.f32 %v1323, %v1327
    %v1330 = vadd.f32 %v92, %v1328
    %v1331 = vadd.f32 %v93, %v1329
    %v1332 = vld [vmem:[%s5 + $0x2] sm:$0x1]
    %v1333 = vld [vmem:[%s5 + $0x3] sm:$0x1]
    %v1334 = vsel %vm109, %v1330, 0.0
    %1335 = vadd.xlane.f32.xlu0 %v1334
    %v1336 = vpop.xlane.xlu0 %1335
    %v1337 = vsel %vm109, %v1331, 0.0
    %1338 = vadd.xlane.f32.xlu0 %v1337
    %v1339 = vpop.xlane.xlu0 %1338
    %v1340 = vrcp.pop 32.0
    %v1341 = vmul.f32 %v1336, %v1340
    %v1342 = vmul.f32 %v1339, %v1340
    %v1343 = vsub.f32 %v1330, %v1341
    %v1344 = vsub.f32 %v1331, %v1342
    %v1345 = vmul.f32 %v1343, %v1343
    %v1346 = vmul.f32 %v1344, %v1344
    %v1347 = vsel %vm109, %v1345, 0.0
    %1348 = vadd.xlane.f32.xlu0 %v1347
    %v1349 = vpop.xlane.xlu0 %1348
    %v1350 = vsel %vm109, %v1346, 0.0
    %1351 = vadd.xlane.f32.xlu0 %v1350
    %v1352 = vpop.xlane.xlu0 %1351
    %v1353 = vmul.f32 %v1349, %v1340
    %v1354 = vmul.f32 %v1352, %v1340
    %v1355 = vadd.f32 %v1353, 1e-05
    %v1356 = vadd.f32 %v1354, 1e-05
    %v1357 = vrsqrt.pop %v1355
    %v1358 = vrsqrt.pop %v1356
    %v1359 = vmul.f32 %v1343, %v1357
    %v1360 = vmul.f32 %v1344, %v1358
    %v1361 = vlaneseq
    %v1362 = vshrl.u32 %v1361, 7
    %v1363 = vsub.s32 0, %v1362
    %v1364 = vrot.slane %v1332, %v1363
    %v1365 = vmul.f32 %v1359, %v1364
    %v1366 = vmul.f32 %v1360, %v1364
    %v1367 = vlaneseq
    %v1368 = vshrl.u32 %v1367, 7
    %v1369 = vsub.s32 0, %v1368
    %v1370 = vrot.slane %v1333, %v1369
    %v1371 = vadd.f32 %v1365, %v1370
    %v1372 = vadd.f32 %v1366, %v1370
    %v1373 = vld [vmem:[#allocation10 + $0x40] sm:$0xff]
    %v1374 = vld [vmem:[#allocation10 + $0x48] sm:$0xff]
    %v1375 = vld [vmem:[#allocation10 + $0x50] sm:$0xff]
    %v1376 = vld [vmem:[#allocation10 + $0x58] sm:$0xff]
    %v1377 = vld [vmem:[%s5 + $0x4] sm:$0x1]
    %v1378 = vlaneseq
    %v1379 = vshrl.u32 %v1378, 7
    %v1380 = vsub.s32 0, %v1379
    %v1381 = vrot.slane %v1377, %v1380
    %v1383 = vsel %vm109, %v1371, 0
    %v1386 = vsel %vm109, %v1372, 0
    %1388 = vmatprep.subr.mxu0 0.0
    %1389 = vmatpush1.msra.mxu0 %v1373
    %1390 = vmatprep.subr.mxu0 0.0
    %1391 = vmatpush1.msra.mxu0 %v1374
    %1392 = vmatprep.subr.mxu0 0.0
    %1393 = vmatpush1.msra.mxu0 %v1375
    %1394 = vmatprep.subr.mxu0 0.0
    %1395 = vmatpush1.msra.mxu0 %v1376
    %1396 = vmatprep.subr.mxu0 0.0
    %1397 = vmatpush1.msra.mxu0 0.0
    %1398 = vmatprep.subr.mxu0 0.0
    %1399 = vmatpush1.msra.mxu0 0.0
    %1400 = vmatprep.subr.mxu0 0.0
    %1401 = vmatpush1.msra.mxu0 0.0
    %1402 = vmatprep.subr.mxu0 0.0
    %1403 = vmatpush1.msra.mxu0 0.0
    %1404 = vmatprep.subr.mxu0 0.0
    %1405 = vmatpush1.msra.mxu0 0.0
    %1406 = vmatprep.subr.mxu0 0.0
    %1407 = vmatpush1.msra.mxu0 0.0
    %1408 = vmatprep.subr.mxu0 0.0
    %1409 = vmatpush1.msra.mxu0 0.0
    %1410 = vmatprep.subr.mxu0 0.0
    %1411 = vmatpush1.msra.mxu0 0.0
    %1412 = vmatprep.subr.mxu0 0.0
    %1413 = vmatpush1.msra.mxu0 0.0
    %1414 = vmatprep.subr.mxu0 0.0
    %1415 = vmatpush1.msra.mxu0 0.0
    %1416 = vmatprep.subr.mxu0 0.0
    %1417 = vmatpush1.msra.mxu0 0.0
    %1418 = vmatprep.subr.mxu0 0.0
    %1419 = vmatpush1.msra.mxu0 0.0
    %1420 = vmatprep.subr.mxu0 0.0
    %1421 = vmatpush1.msra.mxu0 0.0
    %1422 = vmatprep.subr.mxu0 0.0
    %1423 = vmatpush1.msra.mxu0 0.0
    %1424 = vmatprep.subr.mxu0 0.0
    %1425 = vmatpush1.msra.mxu0 0.0
    %1426 = vmatprep.subr.mxu0 0.0
    %1427 = vmatpush1.msra.mxu0 0.0
    %1428 = vmatprep.subr.mxu0 0.0
    %1429 = vmatpush1.msra.mxu0 0.0
    %1430 = vmatprep.subr.mxu0 0.0
    %1431 = vmatpush1.msra.mxu0 0.0
    %1432 = vmatprep.subr.mxu0 0.0
    %1433 = vmatpush1.msra.mxu0 0.0
    %1434 = vmatprep.subr.mxu0 0.0
    %1435 = vmatpush1.msra.mxu0 0.0
    %1436 = vmatprep.subr.mxu0 0.0
    %1437 = vmatpush1.msra.mxu0 0.0
    %1438 = vmatprep.subr.mxu0 0.0
    %1439 = vmatpush1.msra.mxu0 0.0
    %1440 = vmatprep.subr.mxu0 0.0
    %1441 = vmatpush1.msra.mxu0 0.0
    %1442 = vmatprep.subr.mxu0 0.0
    %1443 = vmatpush1.msra.mxu0 0.0
    %1444 = vmatprep.subr.mxu0 0.0
    %1445 = vmatpush1.msra.mxu0 0.0
    %1446 = vmatprep.subr.mxu0 0.0
    %1447 = vmatpush1.msra.mxu0 0.0
    %1448 = vmatprep.subr.mxu0 0.0
    %1449 = vmatpush1.msra.mxu0 0.0
    %1450 = vmatprep.subr.mxu0 0.0
    %1451 = vmatpush1.msra.mxu0 0.0
    %1452 = vmatprep.mubr.f32.mxu0 0.0
    %1453 = vmatmul.mubr.f32.gmra.mrb[0].mxu0 %v1383
    %v1454 = vpop.f32.mrb[0].mxu0
    %v1455 = vadd.f32 %v1381, %v1454
    %v1456 = vpop.f32.mrb[0].mxu0
    %1457 = vmatprep.mubr.f32.mxu0 0.0
    %1458 = vmatmul.mubr.f32.gmra.mrb[0].mxu0 %v1386
    %v1459 = vpop.f32.mrb[0].mxu0
    %v1460 = vadd.f32 %v1381, %v1459
    %v1461 = vpop.f32.mrb[0].mxu0
    %1462 = vdwg.mxu0
    %v1463 = vld [vmem:[#allocation10 + $0x60] sm:$0xff]
    %v1464 = vld [vmem:[#allocation10 + $0x68] sm:$0xff]
    %v1465 = vld [vmem:[#allocation10 + $0x70] sm:$0xff]
    %v1466 = vld [vmem:[#allocation10 + $0x78] sm:$0xff]
    %v1467 = vld [vmem:[%s5 + $0x5] sm:$0x1]
    %v1468 = vlaneseq
    %v1469 = vshrl.u32 %v1468, 7
    %v1470 = vsub.s32 0, %v1469
    %v1471 = vrot.slane %v1467, %v1470
    %v1473 = vsel %vm109, %v94, 0
    %v1476 = vsel %vm109, %v95, 0
    %1478 = vmatprep.subr.mxu0 0.0
    %1479 = vmatpush1.msra.mxu0 %v1463
    %1480 = vmatprep.subr.mxu0 0.0
    %1481 = vmatpush1.msra.mxu0 %v1464
    %1482 = vmatprep.subr.mxu0 0.0
    %1483 = vmatpush1.msra.mxu0 %v1465
    %1484 = vmatprep.subr.mxu0 0.0
    %1485 = vmatpush1.msra.mxu0 %v1466
    %1486 = vmatprep.subr.mxu0 0.0
    %1487 = vmatpush1.msra.mxu0 0.0
    %1488 = vmatprep.subr.mxu0 0.0
    %1489 = vmatpush1.msra.mxu0 0.0
    %1490 = vmatprep.subr.mxu0 0.0
    %1491 = vmatpush1.msra.mxu0 0.0
    %1492 = vmatprep.subr.mxu0 0.0
    %1493 = vmatpush1.msra.mxu0 0.0
    %1494 = vmatprep.subr.mxu0 0.0
    %1495 = vmatpush1.msra.mxu0 0.0
    %1496 = vmatprep.subr.mxu0 0.0
    %1497 = vmatpush1.msra.mxu0 0.0
    %1498 = vmatprep.subr.mxu0 0.0
    %1499 = vmatpush1.msra.mxu0 0.0
    %1500 = vmatprep.subr.mxu0 0.0
    %1501 = vmatpush1.msra.mxu0 0.0
    %1502 = vmatprep.subr.mxu0 0.0
    %1503 = vmatpush1.msra.mxu0 0.0
    %1504 = vmatprep.subr.mxu0 0.0
    %1505 = vmatpush1.msra.mxu0 0.0
    %1506 = vmatprep.subr.mxu0 0.0
    %1507 = vmatpush1.msra.mxu0 0.0
    %1508 = vmatprep.subr.mxu0 0.0
    %1509 = vmatpush1.msra.mxu0 0.0
    %1510 = vmatprep.subr.mxu0 0.0
    %1511 = vmatpush1.msra.mxu0 0.0
    %1512 = vmatprep.subr.mxu0 0.0
    %1513 = vmatpush1.msra.mxu0 0.0
    %1514 = vmatprep.subr.mxu0 0.0
    %1515 = vmatpush1.msra.mxu0 0.0
    %1516 = vmatprep.subr.mxu0 0.0
    %1517 = vmatpush1.msra.mxu0 0.0
    %1518 = vmatprep.subr.mxu0 0.0
    %1519 = vmatpush1.msra.mxu0 0.0
    %1520 = vmatprep.subr.mxu0 0.0
    %1521 = vmatpush1.msra.mxu0 0.0
    %1522 = vmatprep.subr.mxu0 0.0
    %1523 = vmatpush1.msra.mxu0 0.0
    %1524 = vmatprep.subr.mxu0 0.0
    %1525 = vmatpush1.msra.mxu0 0.0
    %1526 = vmatprep.subr.mxu0 0.0
    %1527 = vmatpush1.msra.mxu0 0.0
    %1528 = vmatprep.subr.mxu0 0.0
    %1529 = vmatpush1.msra.mxu0 0.0
    %1530 = vmatprep.subr.mxu0 0.0
    %1531 = vmatpush1.msra.mxu0 0.0
    %1532 = vmatprep.subr.mxu0 0.0
    %1533 = vmatpush1.msra.mxu0 0.0
    %1534 = vmatprep.subr.mxu0 0.0
    %1535 = vmatpush1.msra.mxu0 0.0
    %1536 = vmatprep.subr.mxu0 0.0
    %1537 = vmatpush1.msra.mxu0 0.0
    %1538 = vmatprep.subr.mxu0 0.0
    %1539 = vmatpush1.msra.mxu0 0.0
    %1540 = vmatprep.subr.mxu0 0.0
    %1541 = vmatpush1.msra.mxu0 0.0
    %1542 = vmatprep.mubr.f32.mxu0 0.0
    %1543 = vmatmul.mubr.f32.gmra.mrb[0].mxu0 %v1473
    %v1544 = vpop.f32.mrb[0].mxu0
    %v1545 = vadd.f32 %v1471, %v1544
    %v1546 = vpop.f32.mrb[0].mxu0
    %1547 = vmatprep.mubr.f32.mxu0 0.0
    %1548 = vmatmul.mubr.f32.gmra.mrb[0].mxu0 %v1476
    %v1549 = vpop.f32.mrb[0].mxu0
    %v1550 = vadd.f32 %v1471, %v1549
    %v1551 = vpop.f32.mrb[0].mxu0
    %1552 = vdwg.mxu0
    %v1553 = vld [vmem:[#allocation10 + $0x80] sm:$0xff]
    %v1554 = vld [vmem:[#allocation10 + $0x88] sm:$0xff]
    %v1555 = vld [vmem:[#allocation10 + $0x90] sm:$0xff]
    %v1556 = vld [vmem:[#allocation10 + $0x98] sm:$0xff]
    %v1557 = vld [vmem:[%s5 + $0x6] sm:$0x1]
    %v1559 = vsel %vm202, %v1455, 0
    %v1562 = vsel %vm202, %v1460, 0
    %v1565 = vsel %vm202, %v1545, 0
    %v1568 = vsel %vm202, %v1550, 0
    %1570 = vmatprep.subr.mxu0 0.0
    %1571 = vmatpush1.xpose.msra.mxu0 %v1565
    %1572 = vmatprep.subr.mxu0 0.0
    %1573 = vmatpush1.xpose.msra.mxu0 %v1568
    %1574 = vmatprep.subr.mxu0 0.0
    %1575 = vmatpush1.xpose.msra.mxu0 0.0
    %1576 = vmatprep.subr.mxu0 0.0
    %1577 = vmatpush1.xpose.msra.mxu0 0.0
    %1578 = vmatprep.subr.mxu0 0.0
    %1579 = vmatpush1.xpose.msra.mxu0 0.0
    %1580 = vmatprep.subr.mxu0 0.0
    %1581 = vmatpush1.xpose.msra.mxu0 0.0
    %1582 = vmatprep.subr.mxu0 0.0
    %1583 = vmatpush1.xpose.msra.mxu0 0.0
    %1584 = vmatprep.subr.mxu0 0.0
    %1585 = vmatpush1.xpose.msra.mxu0 0.0
    %1586 = vmatprep.subr.mxu0 0.0
    %1587 = vmatpush1.xpose.msra.mxu0 0.0
    %1588 = vmatprep.subr.mxu0 0.0
    %1589 = vmatpush1.xpose.msra.mxu0 0.0
    %1590 = vmatprep.subr.mxu0 0.0
    %1591 = vmatpush1.xpose.msra.mxu0 0.0
    %1592 = vmatprep.subr.mxu0 0.0
    %1593 = vmatpush1.xpose.msra.mxu0 0.0
    %1594 = vmatprep.subr.mxu0 0.0
    %1595 = vmatpush1.xpose.msra.mxu0 0.0
    %1596 = vmatprep.subr.mxu0 0.0
    %1597 = vmatpush1.xpose.msra.mxu0 0.0
    %1598 = vmatprep.subr.mxu0 0.0
    %1599 = vmatpush1.xpose.msra.mxu0 0.0
    %1600 = vmatprep.subr.mxu0 0.0
    %1601 = vmatpush1.xpose.msra.mxu0 0.0
    %1602 = vmatprep.subr.mxu0 0.0
    %1603 = vmatpush1.xpose.msra.mxu0 0.0
    %1604 = vmatprep.subr.mxu0 0.0
    %1605 = vmatpush1.xpose.msra.mxu0 0.0
    %1606 = vmatprep.subr.mxu0 0.0
    %1607 = vmatpush1.xpose.msra.mxu0 0.0
    %1608 = vmatprep.subr.mxu0 0.0
    %1609 = vmatpush1.xpose.msra.mxu0 0.0
    %1610 = vmatprep.subr.mxu0 0.0
    %1611 = vmatpush1.xpose.msra.mxu0 0.0
    %1612 = vmatprep.subr.mxu0 0.0
    %1613 = vmatpush1.xpose.msra.mxu0 0.0
    %1614 = vmatprep.subr.mxu0 0.0
    %1615 = vmatpush1.xpose.msra.mxu0 0.0
    %1616 = vmatprep.subr.mxu0 0.0
    %1617 = vmatpush1.xpose.msra.mxu0 0.0
    %1618 = vmatprep.subr.mxu0 0.0
    %1619 = vmatpush1.xpose.msra.mxu0 0.0
    %1620 = vmatprep.subr.mxu0 0.0
    %1621 = vmatpush1.xpose.msra.mxu0 0.0
    %1622 = vmatprep.subr.mxu0 0.0
    %1623 = vmatpush1.xpose.msra.mxu0 0.0
    %1624 = vmatprep.subr.mxu0 0.0
    %1625 = vmatpush1.xpose.msra.mxu0 0.0
    %1626 = vmatprep.subr.mxu0 0.0
    %1627 = vmatpush1.xpose.msra.mxu0 0.0
    %1628 = vmatprep.subr.mxu0 0.0
    %1629 = vmatpush1.xpose.msra.mxu0 0.0
    %1630 = vmatprep.subr.mxu0 0.0
    %1631 = vmatpush1.xpose.msra.mxu0 0.0
    %1632 = vmatprep.subr.mxu0 0.0
    %1633 = vmatpush1.xpose.msra.mxu0 0.0
    %1634 = vmatprep.mubr.f32.mxu0 0.0
    %1635 = vmatmul.mubr.f32.gmra.mrb[0].mxu0 %v1559
    %v1636 = vpop.f32.mrb[0].mxu0
    %v1637 = vadd.f32 %v98, %v1636
    %v1638 = vpop.f32.mrb[0].mxu0
    %1639 = vmatprep.mubr.f32.mxu0 0.0
    %1640 = vmatmul.mubr.f32.gmra.mrb[0].mxu0 %v1562
    %v1641 = vpop.f32.mrb[0].mxu0
    %v1642 = vadd.f32 %v99, %v1641
    %v1643 = vpop.f32.mrb[0].mxu0
    %1644 = vdwg.mxu0
    %v1645 = vsel %vm286, %v1637, -inf
    %1646 = vmax.xlane.f32.xlu0 %v1645
    %v1647 = vpop.xlane.xlu0 %1646
    %v1648 = vsel %vm286, %v1642, -inf
    %1649 = vmax.xlane.f32.xlu0 %v1648
    %v1650 = vpop.xlane.xlu0 %1649
    %v1651 = vsub.f32 %v1637, %v1647
    %v1652 = vsub.f32 %v1642, %v1650
    %v1653 = vmul.f32 %v1651, 1.442695
    %v1654 = vpow.pop %v1653
    %v1655 = vmul.f32 %v1652, 1.442695
    %v1656 = vpow.pop %v1655
    %v1657 = vsel %vm286, %v1654, 0.0
    %1658 = vadd.xlane.f32.xlu0 %v1657
    %v1659 = vpop.xlane.xlu0 %1658
    %v1660 = vsel %vm286, %v1656, 0.0
    %1661 = vadd.xlane.f32.xlu0 %v1660
    %v1662 = vpop.xlane.xlu0 %1661
    %v1663 = vrcp.pop %v1659
    %v1664 = vmul.f32 %v1654, %v1663
    %v1665 = vrcp.pop %v1662
    %v1666 = vmul.f32 %v1656, %v1665
    %1669 = vrot.lane.b32.xlu0 %v1664, 32
    %v1670 = vpop.permute.xlu0 %1669
    %1671 = vrot.lane.b32.xlu0 %v1666, 32
    %v1672 = vpop.permute.xlu0 %1671
    %vm1675 = vcmask 392448
    %1676 = vst.msk [vmem:[#allocation11] sm:$0xff] %vm1675, %v1670
    %1677 = vst.msk [vmem:[#allocation11 + $0x8] sm:$0xff] %vm1675, %v1672
    %1678 = vrot.lane.b32.xlu0 %v1545, 96
    %v1679 = vpop.permute.xlu0 %1678
    %1680 = vrot.lane.b32.xlu0 %v1550, 96
    %v1681 = vpop.permute.xlu0 %1680
    %v1684 = vsel %vm286, %v1664, 0
    %v1686 = vsel %vm286, %v1666, 0
    %1688 = vmatprep.subr.mxu0 0.0
    %1689 = vmatpush1.msra.mxu0 %v1679
    %1690 = vmatprep.subr.mxu0 0.0
    %1691 = vmatpush1.msra.mxu0 %v1681
    %1692 = vmatprep.subr.mxu0 0.0
    %1693 = vmatpush1.msra.mxu0 0.0
    %1694 = vmatprep.subr.mxu0 0.0
    %1695 = vmatpush1.msra.mxu0 0.0
    %1696 = vmatprep.subr.mxu0 0.0
    %1697 = vmatpush1.msra.mxu0 0.0
    %1698 = vmatprep.subr.mxu0 0.0
    %1699 = vmatpush1.msra.mxu0 0.0
    %1700 = vmatprep.subr.mxu0 0.0
    %1701 = vmatpush1.msra.mxu0 0.0
    %1702 = vmatprep.subr.mxu0 0.0
    %1703 = vmatpush1.msra.mxu0 0.0
    %1704 = vmatprep.subr.mxu0 0.0
    %1705 = vmatpush1.msra.mxu0 0.0
    %1706 = vmatprep.subr.mxu0 0.0
    %1707 = vmatpush1.msra.mxu0 0.0
    %1708 = vmatprep.subr.mxu0 0.0
    %1709 = vmatpush1.msra.mxu0 0.0
    %1710 = vmatprep.subr.mxu0 0.0
    %1711 = vmatpush1.msra.mxu0 0.0
    %1712 = vmatprep.subr.mxu0 0.0
    %1713 = vmatpush1.msra.mxu0 0.0
    %1714 = vmatprep.subr.mxu0 0.0
    %1715 = vmatpush1.msra.mxu0 0.0
    %1716 = vmatprep.subr.mxu0 0.0
    %1717 = vmatpush1.msra.mxu0 0.0
    %1718 = vmatprep.subr.mxu0 0.0
    %1719 = vmatpush1.msra.mxu0 0.0
    %1720 = vmatprep.subr.mxu0 0.0
    %1721 = vmatpush1.msra.mxu0 0.0
    %1722 = vmatprep.subr.mxu0 0.0
    %1723 = vmatpush1.msra.mxu0 0.0
    %1724 = vmatprep.subr.mxu0 0.0
    %1725 = vmatpush1.msra.mxu0 0.0
    %1726 = vmatprep.subr.mxu0 0.0
    %1727 = vmatpush1.msra.mxu0 0.0
    %1728 = vmatprep.subr.mxu0 0.0
    %1729 = vmatpush1.msra.mxu0 0.0
    %1730 = vmatprep.subr.mxu0 0.0
    %1731 = vmatpush1.msra.mxu0 0.0
    %1732 = vmatprep.subr.mxu0 0.0
    %1733 = vmatpush1.msra.mxu0 0.0
    %1734 = vmatprep.subr.mxu0 0.0
    %1735 = vmatpush1.msra.mxu0 0.0
    %1736 = vmatprep.subr.mxu0 0.0
    %1737 = vmatpush1.msra.mxu0 0.0
    %1738 = vmatprep.subr.mxu0 0.0
    %1739 = vmatpush1.msra.mxu0 0.0
    %1740 = vmatprep.subr.mxu0 0.0
    %1741 = vmatpush1.msra.mxu0 0.0
    %1742 = vmatprep.subr.mxu0 0.0
    %1743 = vmatpush1.msra.mxu0 0.0
    %1744 = vmatprep.subr.mxu0 0.0
    %1745 = vmatpush1.msra.mxu0 0.0
    %1746 = vmatprep.subr.mxu0 0.0
    %1747 = vmatpush1.msra.mxu0 0.0
    %1748 = vmatprep.subr.mxu0 0.0
    %1749 = vmatpush1.msra.mxu0 0.0
    %1750 = vmatprep.subr.mxu0 0.0
    %1751 = vmatpush1.msra.mxu0 0.0
    %1752 = vmatprep.mubr.f32.mxu0 0.0
    %1753 = vmatmul.mubr.f32.gmra.mrb[0].mxu0 %v1684
    %v1754 = vpop.f32.mrb[0].mxu0
    %v1755 = vadd.f32 0.0, %v1754
    %v1756 = vpop.f32.mrb[0].mxu0
    %1757 = vmatprep.mubr.f32.mxu0 0.0
    %1758 = vmatmul.mubr.f32.gmra.mrb[0].mxu0 %v1686
    %v1759 = vpop.f32.mrb[0].mxu0
    %v1760 = vadd.f32 0.0, %v1759
    %v1761 = vpop.f32.mrb[0].mxu0
    %1762 = vdwg.mxu0
    %1763 = vrot.lane.b32.xlu0 %v1455, 120
    %v1764 = vpop.permute.xlu0 %1763
    %1765 = vrot.lane.b32.xlu0 %v1460, 120
    %v1766 = vpop.permute.xlu0 %1765
    %1767 = vrot.lane.b32.xlu0 %v1545, 120
    %v1768 = vpop.permute.xlu0 %1767
    %1769 = vrot.lane.b32.xlu0 %v1550, 120
    %v1770 = vpop.permute.xlu0 %1769
    %v1771 = vsel %vm202, %v1764, 0
    %v1773 = vsel %vm202, %v1766, 0
    %v1775 = vsel %vm202, %v1768, 0
    %v1777 = vsel %vm202, %v1770, 0
    %1779 = vmatprep.subr.mxu0 0.0
    %1780 = vmatpush1.xpose.msra.mxu0 %v1775
    %1781 = vmatprep.subr.mxu0 0.0
    %1782 = vmatpush1.xpose.msra.mxu0 %v1777
    %1783 = vmatprep.subr.mxu0 0.0
    %1784 = vmatpush1.xpose.msra.mxu0 0.0
    %1785 = vmatprep.subr.mxu0 0.0
    %1786 = vmatpush1.xpose.msra.mxu0 0.0
    %1787 = vmatprep.subr.mxu0 0.0
    %1788 = vmatpush1.xpose.msra.mxu0 0.0
    %1789 = vmatprep.subr.mxu0 0.0
    %1790 = vmatpush1.xpose.msra.mxu0 0.0
    %1791 = vmatprep.subr.mxu0 0.0
    %1792 = vmatpush1.xpose.msra.mxu0 0.0
    %1793 = vmatprep.subr.mxu0 0.0
    %1794 = vmatpush1.xpose.msra.mxu0 0.0
    %1795 = vmatprep.subr.mxu0 0.0
    %1796 = vmatpush1.xpose.msra.mxu0 0.0
    %1797 = vmatprep.subr.mxu0 0.0
    %1798 = vmatpush1.xpose.msra.mxu0 0.0
    %1799 = vmatprep.subr.mxu0 0.0
    %1800 = vmatpush1.xpose.msra.mxu0 0.0
    %1801 = vmatprep.subr.mxu0 0.0
    %1802 = vmatpush1.xpose.msra.mxu0 0.0
    %1803 = vmatprep.subr.mxu0 0.0
    %1804 = vmatpush1.xpose.msra.mxu0 0.0
    %1805 = vmatprep.subr.mxu0 0.0
    %1806 = vmatpush1.xpose.msra.mxu0 0.0
    %1807 = vmatprep.subr.mxu0 0.0
    %1808 = vmatpush1.xpose.msra.mxu0 0.0
    %1809 = vmatprep.subr.mxu0 0.0
    %1810 = vmatpush1.xpose.msra.mxu0 0.0
    %1811 = vmatprep.subr.mxu0 0.0
    %1812 = vmatpush1.xpose.msra.mxu0 0.0
    %1813 = vmatprep.subr.mxu0 0.0
    %1814 = vmatpush1.xpose.msra.mxu0 0.0
    %1815 = vmatprep.subr.mxu0 0.0
    %1816 = vmatpush1.xpose.msra.mxu0 0.0
    %1817 = vmatprep.subr.mxu0 0.0
    %1818 = vmatpush1.xpose.msra.mxu0 0.0
    %1819 = vmatprep.subr.mxu0 0.0
    %1820 = vmatpush1.xpose.msra.mxu0 0.0
    %1821 = vmatprep.subr.mxu0 0.0
    %1822 = vmatpush1.xpose.msra.mxu0 0.0
    %1823 = vmatprep.subr.mxu0 0.0
    %1824 = vmatpush1.xpose.msra.mxu0 0.0
    %1825 = vmatprep.subr.mxu0 0.0
    %1826 = vmatpush1.xpose.msra.mxu0 0.0
    %1827 = vmatprep.subr.mxu0 0.0
    %1828 = vmatpush1.xpose.msra.mxu0 0.0
    %1829 = vmatprep.subr.mxu0 0.0
    %1830 = vmatpush1.xpose.msra.mxu0 0.0
    %1831 = vmatprep.subr.mxu0 0.0
    %1832 = vmatpush1.xpose.msra.mxu0 0.0
    %1833 = vmatprep.subr.mxu0 0.0
    %1834 = vmatpush1.xpose.msra.mxu0 0.0
    %1835 = vmatprep.subr.mxu0 0.0
    %1836 = vmatpush1.xpose.msra.mxu0 0.0
    %1837 = vmatprep.subr.mxu0 0.0
    %1838 = vmatpush1.xpose.msra.mxu0 0.0
    %1839 = vmatprep.subr.mxu0 0.0
    %1840 = vmatpush1.xpose.msra.mxu0 0.0
    %1841 = vmatprep.subr.mxu0 0.0
    %1842 = vmatpush1.xpose.msra.mxu0 0.0
    %1843 = vmatprep.mubr.f32.mxu0 0.0
    %1844 = vmatmul.mubr.f32.gmra.mrb[0].mxu0 %v1771
    %v1845 = vpop.f32.mrb[0].mxu0
    %v1846 = vadd.f32 %v98, %v1845
    %v1847 = vpop.f32.mrb[0].mxu0
    %1848 = vmatprep.mubr.f32.mxu0 0.0
    %1849 = vmatmul.mubr.f32.gmra.mrb[0].mxu0 %v1773
    %v1850 = vpop.f32.mrb[0].mxu0
    %v1851 = vadd.f32 %v99, %v1850
    %v1852 = vpop.f32.mrb[0].mxu0
    %1853 = vdwg.mxu0
    %v1854 = vsel %vm286, %v1846, -inf
    %1855 = vmax.xlane.f32.xlu0 %v1854
    %v1856 = vpop.xlane.xlu0 %1855
    %v1857 = vsel %vm286, %v1851, -inf
    %1858 = vmax.xlane.f32.xlu0 %v1857
    %v1859 = vpop.xlane.xlu0 %1858
    %v1860 = vsub.f32 %v1846, %v1856
    %v1861 = vsub.f32 %v1851, %v1859
    %v1862 = vmul.f32 %v1860, 1.442695
    %v1863 = vpow.pop %v1862
    %v1864 = vmul.f32 %v1861, 1.442695
    %v1865 = vpow.pop %v1864
    %v1866 = vsel %vm286, %v1863, 0.0
    %1867 = vadd.xlane.f32.xlu0 %v1866
    %v1868 = vpop.xlane.xlu0 %1867
    %v1869 = vsel %vm286, %v1865, 0.0
    %1870 = vadd.xlane.f32.xlu0 %v1869
    %v1871 = vpop.xlane.xlu0 %1870
    %v1872 = vrcp.pop %v1868
    %v1873 = vmul.f32 %v1863, %v1872
    %v1874 = vrcp.pop %v1871
    %v1875 = vmul.f32 %v1865, %v1874
    %1878 = vrot.lane.b32.xlu0 %v1873, 48
    %v1879 = vpop.permute.xlu0 %1878
    %1880 = vrot.lane.b32.xlu0 %v1875, 48
    %v1881 = vpop.permute.xlu0 %1880
    %vm1884 = vcmask 523648
    %1885 = vst.msk [vmem:[#allocation11] sm:$0xff] %vm1884, %v1879
    %1886 = vst.msk [vmem:[#allocation11 + $0x8] sm:$0xff] %vm1884, %v1881
    %1887 = vrot.lane.b32.xlu0 %v1545, 88
    %v1888 = vpop.permute.xlu0 %1887
    %1889 = vrot.lane.b32.xlu0 %v1550, 88
    %v1890 = vpop.permute.xlu0 %1889
    %v1893 = vsel %vm286, %v1873, 0
    %v1895 = vsel %vm286, %v1875, 0
    %1897 = vmatprep.subr.mxu0 0.0
    %1898 = vmatpush1.msra.mxu0 %v1888
    %1899 = vmatprep.subr.mxu0 0.0
    %1900 = vmatpush1.msra.mxu0 %v1890
    %1901 = vmatprep.subr.mxu0 0.0
    %1902 = vmatpush1.msra.mxu0 0.0
    %1903 = vmatprep.subr.mxu0 0.0
    %1904 = vmatpush1.msra.mxu0 0.0
    %1905 = vmatprep.subr.mxu0 0.0
    %1906 = vmatpush1.msra.mxu0 0.0
    %1907 = vmatprep.subr.mxu0 0.0
    %1908 = vmatpush1.msra.mxu0 0.0
    %1909 = vmatprep.subr.mxu0 0.0
    %1910 = vmatpush1.msra.mxu0 0.0
    %1911 = vmatprep.subr.mxu0 0.0
    %1912 = vmatpush1.msra.mxu0 0.0
    %1913 = vmatprep.subr.mxu0 0.0
    %1914 = vmatpush1.msra.mxu0 0.0
    %1915 = vmatprep.subr.mxu0 0.0
    %1916 = vmatpush1.msra.mxu0 0.0
    %1917 = vmatprep.subr.mxu0 0.0
    %1918 = vmatpush1.msra.mxu0 0.0
    %1919 = vmatprep.subr.mxu0 0.0
    %1920 = vmatpush1.msra.mxu0 0.0
    %1921 = vmatprep.subr.mxu0 0.0
    %1922 = vmatpush1.msra.mxu0 0.0
    %1923 = vmatprep.subr.mxu0 0.0
    %1924 = vmatpush1.msra.mxu0 0.0
    %1925 = vmatprep.subr.mxu0 0.0
    %1926 = vmatpush1.msra.mxu0 0.0
    %1927 = vmatprep.subr.mxu0 0.0
    %1928 = vmatpush1.msra.mxu0 0.0
    %1929 = vmatprep.subr.mxu0 0.0
    %1930 = vmatpush1.msra.mxu0 0.0
    %1931 = vmatprep.subr.mxu0 0.0
    %1932 = vmatpush1.msra.mxu0 0.0
    %1933 = vmatprep.subr.mxu0 0.0
    %1934 = vmatpush1.msra.mxu0 0.0
    %1935 = vmatprep.subr.mxu0 0.0
    %1936 = vmatpush1.msra.mxu0 0.0
    %1937 = vmatprep.subr.mxu0 0.0
    %1938 = vmatpush1.msra.mxu0 0.0
    %1939 = vmatprep.subr.mxu0 0.0
    %1940 = vmatpush1.msra.mxu0 0.0
    %1941 = vmatprep.subr.mxu0 0.0
    %1942 = vmatpush1.msra.mxu0 0.0
    %1943 = vmatprep.subr.mxu0 0.0
    %1944 = vmatpush1.msra.mxu0 0.0
    %1945 = vmatprep.subr.mxu0 0.0
    %1946 = vmatpush1.msra.mxu0 0.0
    %1947 = vmatprep.subr.mxu0 0.0
    %1948 = vmatpush1.msra.mxu0 0.0
    %1949 = vmatprep.subr.mxu0 0.0
    %1950 = vmatpush1.msra.mxu0 0.0
    %1951 = vmatprep.subr.mxu0 0.0
    %1952 = vmatpush1.msra.mxu0 0.0
    %1953 = vmatprep.subr.mxu0 0.0
    %1954 = vmatpush1.msra.mxu0 0.0
    %1955 = vmatprep.subr.mxu0 0.0
    %1956 = vmatpush1.msra.mxu0 0.0
    %1957 = vmatprep.subr.mxu0 0.0
    %1958 = vmatpush1.msra.mxu0 0.0
    %1959 = vmatprep.subr.mxu0 0.0
    %1960 = vmatpush1.msra.mxu0 0.0
    %1961 = vmatprep.mubr.f32.mxu0 0.0
    %1962 = vmatmul.mubr.f32.gmra.mrb[0].mxu0 %v1893
    %v1963 = vpop.f32.mrb[0].mxu0
    %v1964 = vadd.f32 0.0, %v1963
    %v1965 = vpop.f32.mrb[0].mxu0
    %1966 = vmatprep.mubr.f32.mxu0 0.0
    %1967 = vmatmul.mubr.f32.gmra.mrb[0].mxu0 %v1895
    %v1968 = vpop.f32.mrb[0].mxu0
    %v1969 = vadd.f32 0.0, %v1968
    %v1970 = vpop.f32.mrb[0].mxu0
    %1971 = vdwg.mxu0
    %v1973 = vsel %vm202, %v1964, 0
    %v1976 = vsel %vm202, %v1969, 0
    %1978 = vmatprep.subr.mxu0 0.0
    %1979 = vmatpush1.msra.mxu0 %v1554
    %1980 = vmatprep.subr.mxu0 0.0
    %1981 = vmatpush1.msra.mxu0 0.0
    %1982 = vmatprep.subr.mxu0 0.0
    %1983 = vmatpush1.msra.mxu0 0.0
    %1984 = vmatprep.subr.mxu0 0.0
    %1985 = vmatpush1.msra.mxu0 0.0
    %1986 = vmatprep.subr.mxu0 0.0
    %1987 = vmatpush1.msra.mxu0 0.0
    %1988 = vmatprep.subr.mxu0 0.0
    %1989 = vmatpush1.msra.mxu0 0.0
    %1990 = vmatprep.subr.mxu0 0.0
    %1991 = vmatpush1.msra.mxu0 0.0
    %1992 = vmatprep.subr.mxu0 0.0
    %1993 = vmatpush1.msra.mxu0 0.0
    %1994 = vmatprep.subr.mxu0 0.0
    %1995 = vmatpush1.msra.mxu0 0.0
    %1996 = vmatprep.subr.mxu0 0.0
    %1997 = vmatpush1.msra.mxu0 0.0
    %1998 = vmatprep.subr.mxu0 0.0
    %1999 = vmatpush1.msra.mxu0 0.0
    %2000 = vmatprep.subr.mxu0 0.0
    %2001 = vmatpush1.msra.mxu0 0.0
    %2002 = vmatprep.subr.mxu0 0.0
    %2003 = vmatpush1.msra.mxu0 0.0
    %2004 = vmatprep.subr.mxu0 0.0
    %2005 = vmatpush1.msra.mxu0 0.0
    %2006 = vmatprep.subr.mxu0 0.0
    %2007 = vmatpush1.msra.mxu0 0.0
    %2008 = vmatprep.subr.mxu0 0.0
    %2009 = vmatpush1.msra.mxu0 0.0
    %2010 = vmatprep.subr.mxu0 0.0
    %2011 = vmatpush1.msra.mxu0 0.0
    %2012 = vmatprep.subr.mxu0 0.0
    %2013 = vmatpush1.msra.mxu0 0.0
    %2014 = vmatprep.subr.mxu0 0.0
    %2015 = vmatpush1.msra.mxu0 0.0
    %2016 = vmatprep.subr.mxu0 0.0
    %2017 = vmatpush1.msra.mxu0 0.0
    %2018 = vmatprep.subr.mxu0 0.0
    %2019 = vmatpush1.msra.mxu0 0.0
    %2020 = vmatprep.subr.mxu0 0.0
    %2021 = vmatpush1.msra.mxu0 0.0
    %2022 = vmatprep.subr.mxu0 0.0
    %2023 = vmatpush1.msra.mxu0 0.0
    %2024 = vmatprep.subr.mxu0 0.0
    %2025 = vmatpush1.msra.mxu0 0.0
    %2026 = vmatprep.subr.mxu0 0.0
    %2027 = vmatpush1.msra.mxu0 0.0
    %2028 = vmatprep.subr.mxu0 0.0
    %2029 = vmatpush1.msra.mxu0 0.0
    %2030 = vmatprep.subr.mxu0 0.0
    %2031 = vmatpush1.msra.mxu0 0.0
    %2032 = vmatprep.subr.mxu0 0.0
    %2033 = vmatpush1.msra.mxu0 0.0
    %2034 = vmatprep.subr.mxu0 0.0
    %2035 = vmatpush1.msra.mxu0 0.0
    %2036 = vmatprep.subr.mxu0 0.0
    %2037 = vmatpush1.msra.mxu0 0.0
    %2038 = vmatprep.subr.mxu0 0.0
    %2039 = vmatpush1.msra.mxu0 0.0
    %2040 = vmatprep.subr.mxu0 0.0
    %2041 = vmatpush1.msra.mxu0 0.0
    %2042 = vmatprep.mubr.f32.mxu0 0.0
    %2043 = vmatmul.mubr.f32.gmra.mrb[0].mxu0 %v1973
    %v2044 = vpop.f32.mrb[0].mxu0
    %v2045 = vadd.f32 0.0, %v2044
    %v2046 = vpop.f32.mrb[0].mxu0
    %2047 = vmatprep.mubr.f32.mxu0 0.0
    %2048 = vmatmul.mubr.f32.gmra.mrb[0].mxu0 %v1976
    %v2049 = vpop.f32.mrb[0].mxu0
    %v2050 = vadd.f32 0.0, %v2049
    %v2051 = vpop.f32.mrb[0].mxu0
    %2052 = vdwg.mxu0
    %v2054 = vsel %vm202, %v1755, 0
    %v2057 = vsel %vm202, %v1760, 0
    %2059 = vmatprep.subr.mxu0 0.0
    %2060 = vmatpush1.msra.mxu0 %v1553
    %2061 = vmatprep.subr.mxu0 0.0
    %2062 = vmatpush1.msra.mxu0 0.0
    %2063 = vmatprep.subr.mxu0 0.0
    %2064 = vmatpush1.msra.mxu0 0.0
    %2065 = vmatprep.subr.mxu0 0.0
    %2066 = vmatpush1.msra.mxu0 0.0
    %2067 = vmatprep.subr.mxu0 0.0
    %2068 = vmatpush1.msra.mxu0 0.0
    %2069 = vmatprep.subr.mxu0 0.0
    %2070 = vmatpush1.msra.mxu0 0.0
    %2071 = vmatprep.subr.mxu0 0.0
    %2072 = vmatpush1.msra.mxu0 0.0
    %2073 = vmatprep.subr.mxu0 0.0
    %2074 = vmatpush1.msra.mxu0 0.0
    %2075 = vmatprep.subr.mxu0 0.0
    %2076 = vmatpush1.msra.mxu0 0.0
    %2077 = vmatprep.subr.mxu0 0.0
    %2078 = vmatpush1.msra.mxu0 0.0
    %2079 = vmatprep.subr.mxu0 0.0
    %2080 = vmatpush1.msra.mxu0 0.0
    %2081 = vmatprep.subr.mxu0 0.0
    %2082 = vmatpush1.msra.mxu0 0.0
    %2083 = vmatprep.subr.mxu0 0.0
    %2084 = vmatpush1.msra.mxu0 0.0
    %2085 = vmatprep.subr.mxu0 0.0
    %2086 = vmatpush1.msra.mxu0 0.0
    %2087 = vmatprep.subr.mxu0 0.0
    %2088 = vmatpush1.msra.mxu0 0.0
    %2089 = vmatprep.subr.mxu0 0.0
    %2090 = vmatpush1.msra.mxu0 0.0
    %2091 = vmatprep.subr.mxu0 0.0
    %2092 = vmatpush1.msra.mxu0 0.0
    %2093 = vmatprep.subr.mxu0 0.0
    %2094 = vmatpush1.msra.mxu0 0.0
    %2095 = vmatprep.subr.mxu0 0.0
    %2096 = vmatpush1.msra.mxu0 0.0
    %2097 = vmatprep.subr.mxu0 0.0
    %2098 = vmatpush1.msra.mxu0 0.0
    %2099 = vmatprep.subr.mxu0 0.0
    %2100 = vmatpush1.msra.mxu0 0.0
    %2101 = vmatprep.subr.mxu0 0.0
    %2102 = vmatpush1.msra.mxu0 0.0
    %2103 = vmatprep.subr.mxu0 0.0
    %2104 = vmatpush1.msra.mxu0 0.0
    %2105 = vmatprep.subr.mxu0 0.0
    %2106 = vmatpush1.msra.mxu0 0.0
    %2107 = vmatprep.subr.mxu0 0.0
    %2108 = vmatpush1.msra.mxu0 0.0
    %2109 = vmatprep.subr.mxu0 0.0
    %2110 = vmatpush1.msra.mxu0 0.0
    %2111 = vmatprep.subr.mxu0 0.0
    %2112 = vmatpush1.msra.mxu0 0.0
    %2113 = vmatprep.subr.mxu0 0.0
    %2114 = vmatpush1.msra.mxu0 0.0
    %2115 = vmatprep.subr.mxu0 0.0
    %2116 = vmatpush1.msra.mxu0 0.0
    %2117 = vmatprep.subr.mxu0 0.0
    %2118 = vmatpush1.msra.mxu0 0.0
    %2119 = vmatprep.subr.mxu0 0.0
    %2120 = vmatpush1.msra.mxu0 0.0
    %2121 = vmatprep.subr.mxu0 0.0
    %2122 = vmatpush1.msra.mxu0 0.0
    %2123 = vmatprep.mubr.f32.mxu0 0.0
    %2124 = vmatmul.mubr.f32.gmra.mrb[0].mxu0 %v2054
    %v2125 = vpop.f32.mrb[0].mxu0
    %v2126 = vadd.f32 %v2045, %v2125
    %v2127 = vpop.f32.mrb[0].mxu0
    %2128 = vmatprep.mubr.f32.mxu0 0.0
    %2129 = vmatmul.mubr.f32.gmra.mrb[0].mxu0 %v2057
    %v2130 = vpop.f32.mrb[0].mxu0
    %v2131 = vadd.f32 %v2050, %v2130
    %v2132 = vpop.f32.mrb[0].mxu0
    %2133 = vdwg.mxu0
    %2134 = vrot.lane.b32.xlu0 %v1455, 112
    %v2135 = vpop.permute.xlu0 %2134
    %2136 = vrot.lane.b32.xlu0 %v1460, 112
    %v2137 = vpop.permute.xlu0 %2136
    %2138 = vrot.lane.b32.xlu0 %v1545, 112
    %v2139 = vpop.permute.xlu0 %2138
    %2140 = vrot.lane.b32.xlu0 %v1550, 112
    %v2141 = vpop.permute.xlu0 %2140
    %v2142 = vsel %vm202, %v2135, 0
    %v2144 = vsel %vm202, %v2137, 0
    %v2146 = vsel %vm202, %v2139, 0
    %v2148 = vsel %vm202, %v2141, 0
    %2150 = vmatprep.subr.mxu0 0.0
    %2151 = vmatpush1.xpose.msra.mxu0 %v2146
    %2152 = vmatprep.subr.mxu0 0.0
    %2153 = vmatpush1.xpose.msra.mxu0 %v2148
    %2154 = vmatprep.subr.mxu0 0.0
    %2155 = vmatpush1.xpose.msra.mxu0 0.0
    %2156 = vmatprep.subr.mxu0 0.0
    %2157 = vmatpush1.xpose.msra.mxu0 0.0
    %2158 = vmatprep.subr.mxu0 0.0
    %2159 = vmatpush1.xpose.msra.mxu0 0.0
    %2160 = vmatprep.subr.mxu0 0.0
    %2161 = vmatpush1.xpose.msra.mxu0 0.0
    %2162 = vmatprep.subr.mxu0 0.0
    %2163 = vmatpush1.xpose.msra.mxu0 0.0
    %2164 = vmatprep.subr.mxu0 0.0
    %2165 = vmatpush1.xpose.msra.mxu0 0.0
    %2166 = vmatprep.subr.mxu0 0.0
    %2167 = vmatpush1.xpose.msra.mxu0 0.0
    %2168 = vmatprep.subr.mxu0 0.0
    %2169 = vmatpush1.xpose.msra.mxu0 0.0
    %2170 = vmatprep.subr.mxu0 0.0
    %2171 = vmatpush1.xpose.msra.mxu0 0.0
    %2172 = vmatprep.subr.mxu0 0.0
    %2173 = vmatpush1.xpose.msra.mxu0 0.0
    %2174 = vmatprep.subr.mxu0 0.0
    %2175 = vmatpush1.xpose.msra.mxu0 0.0
    %2176 = vmatprep.subr.mxu0 0.0
    %2177 = vmatpush1.xpose.msra.mxu0 0.0
    %2178 = vmatprep.subr.mxu0 0.0
    %2179 = vmatpush1.xpose.msra.mxu0 0.0
    %2180 = vmatprep.subr.mxu0 0.0
    %2181 = vmatpush1.xpose.msra.mxu0 0.0
    %2182 = vmatprep.subr.mxu0 0.0
    %2183 = vmatpush1.xpose.msra.mxu0 0.0
    %2184 = vmatprep.subr.mxu0 0.0
    %2185 = vmatpush1.xpose.msra.mxu0 0.0
    %2186 = vmatprep.subr.mxu0 0.0
    %2187 = vmatpush1.xpose.msra.mxu0 0.0
    %2188 = vmatprep.subr.mxu0 0.0
    %2189 = vmatpush1.xpose.msra.mxu0 0.0
    %2190 = vmatprep.subr.mxu0 0.0
    %2191 = vmatpush1.xpose.msra.mxu0 0.0
    %2192 = vmatprep.subr.mxu0 0.0
    %2193 = vmatpush1.xpose.msra.mxu0 0.0
    %2194 = vmatprep.subr.mxu0 0.0
    %2195 = vmatpush1.xpose.msra.mxu0 0.0
    %2196 = vmatprep.subr.mxu0 0.0
    %2197 = vmatpush1.xpose.msra.mxu0 0.0
    %2198 = vmatprep.subr.mxu0 0.0
    %2199 = vmatpush1.xpose.msra.mxu0 0.0
    %2200 = vmatprep.subr.mxu0 0.0
    %2201 = vmatpush1.xpose.msra.mxu0 0.0
    %2202 = vmatprep.subr.mxu0 0.0
    %2203 = vmatpush1.xpose.msra.mxu0 0.0
    %2204 = vmatprep.subr.mxu0 0.0
    %2205 = vmatpush1.xpose.msra.mxu0 0.0
    %2206 = vmatprep.subr.mxu0 0.0
    %2207 = vmatpush1.xpose.msra.mxu0 0.0
    %2208 = vmatprep.subr.mxu0 0.0
    %2209 = vmatpush1.xpose.msra.mxu0 0.0
    %2210 = vmatprep.subr.mxu0 0.0
    %2211 = vmatpush1.xpose.msra.mxu0 0.0
    %2212 = vmatprep.subr.mxu0 0.0
    %2213 = vmatpush1.xpose.msra.mxu0 0.0
    %2214 = vmatprep.mubr.f32.mxu0 0.0
    %2215 = vmatmul.mubr.f32.gmra.mrb[0].mxu0 %v2142
    %v2216 = vpop.f32.mrb[0].mxu0
    %v2217 = vadd.f32 %v98, %v2216
    %v2218 = vpop.f32.mrb[0].mxu0
    %2219 = vmatprep.mubr.f32.mxu0 0.0
    %2220 = vmatmul.mubr.f32.gmra.mrb[0].mxu0 %v2144
    %v2221 = vpop.f32.mrb[0].mxu0
    %v2222 = vadd.f32 %v99, %v2221
    %v2223 = vpop.f32.mrb[0].mxu0
    %2224 = vdwg.mxu0
    %v2225 = vsel %vm286, %v2217, -inf
    %2226 = vmax.xlane.f32.xlu0 %v2225
    %v2227 = vpop.xlane.xlu0 %2226
    %v2228 = vsel %vm286, %v2222, -inf
    %2229 = vmax.xlane.f32.xlu0 %v2228
    %v2230 = vpop.xlane.xlu0 %2229
    %v2231 = vsub.f32 %v2217, %v2227
    %v2232 = vsub.f32 %v2222, %v2230
    %v2233 = vmul.f32 %v2231, 1.442695
    %v2234 = vpow.pop %v2233
    %v2235 = vmul.f32 %v2232, 1.442695
    %v2236 = vpow.pop %v2235
    %v2237 = vsel %vm286, %v2234, 0.0
    %2238 = vadd.xlane.f32.xlu0 %v2237
    %v2239 = vpop.xlane.xlu0 %2238
    %v2240 = vsel %vm286, %v2236, 0.0
    %2241 = vadd.xlane.f32.xlu0 %v2240
    %v2242 = vpop.xlane.xlu0 %2241
    %v2243 = vrcp.pop %v2239
    %v2244 = vmul.f32 %v2234, %v2243
    %v2245 = vrcp.pop %v2242
    %v2246 = vmul.f32 %v2236, %v2245
    %2249 = vrot.lane.b32.xlu0 %v2244, 64
    %v2250 = vpop.permute.xlu0 %2249
    %2251 = vrot.lane.b32.xlu0 %v2246, 64
    %v2252 = vpop.permute.xlu0 %2251
    %vm2255 = vcmask 654848
    %2256 = vst.msk [vmem:[#allocation11] sm:$0xff] %vm2255, %v2250
    %2257 = vst.msk [vmem:[#allocation11 + $0x8] sm:$0xff] %vm2255, %v2252
    %2258 = vrot.lane.b32.xlu0 %v1545, 80
    %v2259 = vpop.permute.xlu0 %2258
    %2260 = vrot.lane.b32.xlu0 %v1550, 80
    %v2261 = vpop.permute.xlu0 %2260
    %v2264 = vsel %vm286, %v2244, 0
    %v2266 = vsel %vm286, %v2246, 0
    %2268 = vmatprep.subr.mxu0 0.0
    %2269 = vmatpush1.msra.mxu0 %v2259
    %2270 = vmatprep.subr.mxu0 0.0
    %2271 = vmatpush1.msra.mxu0 %v2261
    %2272 = vmatprep.subr.mxu0 0.0
    %2273 = vmatpush1.msra.mxu0 0.0
    %2274 = vmatprep.subr.mxu0 0.0
    %2275 = vmatpush1.msra.mxu0 0.0
    %2276 = vmatprep.subr.mxu0 0.0
    %2277 = vmatpush1.msra.mxu0 0.0
    %2278 = vmatprep.subr.mxu0 0.0
    %2279 = vmatpush1.msra.mxu0 0.0
    %2280 = vmatprep.subr.mxu0 0.0
    %2281 = vmatpush1.msra.mxu0 0.0
    %2282 = vmatprep.subr.mxu0 0.0
    %2283 = vmatpush1.msra.mxu0 0.0
    %2284 = vmatprep.subr.mxu0 0.0
    %2285 = vmatpush1.msra.mxu0 0.0
    %2286 = vmatprep.subr.mxu0 0.0
    %2287 = vmatpush1.msra.mxu0 0.0
    %2288 = vmatprep.subr.mxu0 0.0
    %2289 = vmatpush1.msra.mxu0 0.0
    %2290 = vmatprep.subr.mxu0 0.0
    %2291 = vmatpush1.msra.mxu0 0.0
    %2292 = vmatprep.subr.mxu0 0.0
    %2293 = vmatpush1.msra.mxu0 0.0
    %2294 = vmatprep.subr.mxu0 0.0
    %2295 = vmatpush1.msra.mxu0 0.0
    %2296 = vmatprep.subr.mxu0 0.0
    %2297 = vmatpush1.msra.mxu0 0.0
    %2298 = vmatprep.subr.mxu0 0.0
    %2299 = vmatpush1.msra.mxu0 0.0
    %2300 = vmatprep.subr.mxu0 0.0
    %2301 = vmatpush1.msra.mxu0 0.0
    %2302 = vmatprep.subr.mxu0 0.0
    %2303 = vmatpush1.msra.mxu0 0.0
    %2304 = vmatprep.subr.mxu0 0.0
    %2305 = vmatpush1.msra.mxu0 0.0
    %2306 = vmatprep.subr.mxu0 0.0
    %2307 = vmatpush1.msra.mxu0 0.0
    %2308 = vmatprep.subr.mxu0 0.0
    %2309 = vmatpush1.msra.mxu0 0.0
    %2310 = vmatprep.subr.mxu0 0.0
    %2311 = vmatpush1.msra.mxu0 0.0
    %2312 = vmatprep.subr.mxu0 0.0
    %2313 = vmatpush1.msra.mxu0 0.0
    %2314 = vmatprep.subr.mxu0 0.0
    %2315 = vmatpush1.msra.mxu0 0.0
    %2316 = vmatprep.subr.mxu0 0.0
    %2317 = vmatpush1.msra.mxu0 0.0
    %2318 = vmatprep.subr.mxu0 0.0
    %2319 = vmatpush1.msra.mxu0 0.0
    %2320 = vmatprep.subr.mxu0 0.0
    %2321 = vmatpush1.msra.mxu0 0.0
    %2322 = vmatprep.subr.mxu0 0.0
    %2323 = vmatpush1.msra.mxu0 0.0
    %2324 = vmatprep.subr.mxu0 0.0
    %2325 = vmatpush1.msra.mxu0 0.0
    %2326 = vmatprep.subr.mxu0 0.0
    %2327 = vmatpush1.msra.mxu0 0.0
    %2328 = vmatprep.subr.mxu0 0.0
    %2329 = vmatpush1.msra.mxu0 0.0
    %2330 = vmatprep.subr.mxu0 0.0
    %2331 = vmatpush1.msra.mxu0 0.0
    %2332 = vmatprep.mubr.f32.mxu0 0.0
    %2333 = vmatmul.mubr.f32.gmra.mrb[0].mxu0 %v2264
    %v2334 = vpop.f32.mrb[0].mxu0
    %v2335 = vadd.f32 0.0, %v2334
    %v2336 = vpop.f32.mrb[0].mxu0
    %2337 = vmatprep.mubr.f32.mxu0 0.0
    %2338 = vmatmul.mubr.f32.gmra.mrb[0].mxu0 %v2266
    %v2339 = vpop.f32.mrb[0].mxu0
    %v2340 = vadd.f32 0.0, %v2339
    %v2341 = vpop.f32.mrb[0].mxu0
    %2342 = vdwg.mxu0
    %v2344 = vsel %vm202, %v2335, 0
    %v2347 = vsel %vm202, %v2340, 0
    %2349 = vmatprep.subr.mxu0 0.0
    %2350 = vmatpush1.msra.mxu0 %v1555
    %2351 = vmatprep.subr.mxu0 0.0
    %2352 = vmatpush1.msra.mxu0 0.0
    %2353 = vmatprep.subr.mxu0 0.0
    %2354 = vmatpush1.msra.mxu0 0.0
    %2355 = vmatprep.subr.mxu0 0.0
    %2356 = vmatpush1.msra.mxu0 0.0
    %2357 = vmatprep.subr.mxu0 0.0
    %2358 = vmatpush1.msra.mxu0 0.0
    %2359 = vmatprep.subr.mxu0 0.0
    %2360 = vmatpush1.msra.mxu0 0.0
    %2361 = vmatprep.subr.mxu0 0.0
    %2362 = vmatpush1.msra.mxu0 0.0
    %2363 = vmatprep.subr.mxu0 0.0
    %2364 = vmatpush1.msra.mxu0 0.0
    %2365 = vmatprep.subr.mxu0 0.0
    %2366 = vmatpush1.msra.mxu0 0.0
    %2367 = vmatprep.subr.mxu0 0.0
    %2368 = vmatpush1.msra.mxu0 0.0
    %2369 = vmatprep.subr.mxu0 0.0
    %2370 = vmatpush1.msra.mxu0 0.0
    %2371 = vmatprep.subr.mxu0 0.0
    %2372 = vmatpush1.msra.mxu0 0.0
    %2373 = vmatprep.subr.mxu0 0.0
    %2374 = vmatpush1.msra.mxu0 0.0
    %2375 = vmatprep.subr.mxu0 0.0
    %2376 = vmatpush1.msra.mxu0 0.0
    %2377 = vmatprep.subr.mxu0 0.0
    %2378 = vmatpush1.msra.mxu0 0.0
    %2379 = vmatprep.subr.mxu0 0.0
    %2380 = vmatpush1.msra.mxu0 0.0
    %2381 = vmatprep.subr.mxu0 0.0
    %2382 = vmatpush1.msra.mxu0 0.0
    %2383 = vmatprep.subr.mxu0 0.0
    %2384 = vmatpush1.msra.mxu0 0.0
    %2385 = vmatprep.subr.mxu0 0.0
    %2386 = vmatpush1.msra.mxu0 0.0
    %2387 = vmatprep.subr.mxu0 0.0
    %2388 = vmatpush1.msra.mxu0 0.0
    %2389 = vmatprep.subr.mxu0 0.0
    %2390 = vmatpush1.msra.mxu0 0.0
    %2391 = vmatprep.subr.mxu0 0.0
    %2392 = vmatpush1.msra.mxu0 0.0
    %2393 = vmatprep.subr.mxu0 0.0
    %2394 = vmatpush1.msra.mxu0 0.0
    %2395 = vmatprep.subr.mxu0 0.0
    %2396 = vmatpush1.msra.mxu0 0.0
    %2397 = vmatprep.subr.mxu0 0.0
    %2398 = vmatpush1.msra.mxu0 0.0
    %2399 = vmatprep.subr.mxu0 0.0
    %2400 = vmatpush1.msra.mxu0 0.0
    %2401 = vmatprep.subr.mxu0 0.0
    %2402 = vmatpush1.msra.mxu0 0.0
    %2403 = vmatprep.subr.mxu0 0.0
    %2404 = vmatpush1.msra.mxu0 0.0
    %2405 = vmatprep.subr.mxu0 0.0
    %2406 = vmatpush1.msra.mxu0 0.0
    %2407 = vmatprep.subr.mxu0 0.0
    %2408 = vmatpush1.msra.mxu0 0.0
    %2409 = vmatprep.subr.mxu0 0.0
    %2410 = vmatpush1.msra.mxu0 0.0
    %2411 = vmatprep.subr.mxu0 0.0
    %2412 = vmatpush1.msra.mxu0 0.0
    %2413 = vmatprep.mubr.f32.mxu0 0.0
    %2414 = vmatmul.mubr.f32.gmra.mrb[0].mxu0 %v2344
    %v2415 = vpop.f32.mrb[0].mxu0
    %v2416 = vadd.f32 0.0, %v2415
    %v2417 = vpop.f32.mrb[0].mxu0
    %2418 = vmatprep.mubr.f32.mxu0 0.0
    %2419 = vmatmul.mubr.f32.gmra.mrb[0].mxu0 %v2347
    %v2420 = vpop.f32.mrb[0].mxu0
    %v2421 = vadd.f32 0.0, %v2420
    %v2422 = vpop.f32.mrb[0].mxu0
    %2423 = vdwg.mxu0
    %v2424 = vadd.f32 %v2126, %v2416
    %v2425 = vadd.f32 %v2131, %v2421
    %2426 = vrot.lane.b32.xlu0 %v1455, 104
    %v2427 = vpop.permute.xlu0 %2426
    %2428 = vrot.lane.b32.xlu0 %v1460, 104
    %v2429 = vpop.permute.xlu0 %2428
    %2430 = vrot.lane.b32.xlu0 %v1545, 104
    %v2431 = vpop.permute.xlu0 %2430
    %2432 = vrot.lane.b32.xlu0 %v1550, 104
    %v2433 = vpop.permute.xlu0 %2432
    %v2434 = vsel %vm202, %v2427, 0
    %v2436 = vsel %vm202, %v2429, 0
    %v2438 = vsel %vm202, %v2431, 0
    %v2440 = vsel %vm202, %v2433, 0
    %2442 = vmatprep.subr.mxu0 0.0
    %2443 = vmatpush1.xpose.msra.mxu0 %v2438
    %2444 = vmatprep.subr.mxu0 0.0
    %2445 = vmatpush1.xpose.msra.mxu0 %v2440
    %2446 = vmatprep.subr.mxu0 0.0
    %2447 = vmatpush1.xpose.msra.mxu0 0.0
    %2448 = vmatprep.subr.mxu0 0.0
    %2449 = vmatpush1.xpose.msra.mxu0 0.0
    %2450 = vmatprep.subr.mxu0 0.0
    %2451 = vmatpush1.xpose.msra.mxu0 0.0
    %2452 = vmatprep.subr.mxu0 0.0
    %2453 = vmatpush1.xpose.msra.mxu0 0.0
    %2454 = vmatprep.subr.mxu0 0.0
    %2455 = vmatpush1.xpose.msra.mxu0 0.0
    %2456 = vmatprep.subr.mxu0 0.0
    %2457 = vmatpush1.xpose.msra.mxu0 0.0
    %2458 = vmatprep.subr.mxu0 0.0
    %2459 = vmatpush1.xpose.msra.mxu0 0.0
    %2460 = vmatprep.subr.mxu0 0.0
    %2461 = vmatpush1.xpose.msra.mxu0 0.0
    %2462 = vmatprep.subr.mxu0 0.0
    %2463 = vmatpush1.xpose.msra.mxu0 0.0
    %2464 = vmatprep.subr.mxu0 0.0
    %2465 = vmatpush1.xpose.msra.mxu0 0.0
    %2466 = vmatprep.subr.mxu0 0.0
    %2467 = vmatpush1.xpose.msra.mxu0 0.0
    %2468 = vmatprep.subr.mxu0 0.0
    %2469 = vmatpush1.xpose.msra.mxu0 0.0
    %2470 = vmatprep.subr.mxu0 0.0
    %2471 = vmatpush1.xpose.msra.mxu0 0.0
    %2472 = vmatprep.subr.mxu0 0.0
    %2473 = vmatpush1.xpose.msra.mxu0 0.0
    %2474 = vmatprep.subr.mxu0 0.0
    %2475 = vmatpush1.xpose.msra.mxu0 0.0
    %2476 = vmatprep.subr.mxu0 0.0
    %2477 = vmatpush1.xpose.msra.mxu0 0.0
    %2478 = vmatprep.subr.mxu0 0.0
    %2479 = vmatpush1.xpose.msra.mxu0 0.0
    %2480 = vmatprep.subr.mxu0 0.0
    %2481 = vmatpush1.xpose.msra.mxu0 0.0
    %2482 = vmatprep.subr.mxu0 0.0
    %2483 = vmatpush1.xpose.msra.mxu0 0.0
    %2484 = vmatprep.subr.mxu0 0.0
    %2485 = vmatpush1.xpose.msra.mxu0 0.0
    %2486 = vmatprep.subr.mxu0 0.0
    %2487 = vmatpush1.xpose.msra.mxu0 0.0
    %2488 = vmatprep.subr.mxu0 0.0
    %2489 = vmatpush1.xpose.msra.mxu0 0.0
    %2490 = vmatprep.subr.mxu0 0.0
    %2491 = vmatpush1.xpose.msra.mxu0 0.0
    %2492 = vmatprep.subr.mxu0 0.0
    %2493 = vmatpush1.xpose.msra.mxu0 0.0
    %2494 = vmatprep.subr.mxu0 0.0
    %2495 = vmatpush1.xpose.msra.mxu0 0.0
    %2496 = vmatprep.subr.mxu0 0.0
    %2497 = vmatpush1.xpose.msra.mxu0 0.0
    %2498 = vmatprep.subr.mxu0 0.0
    %2499 = vmatpush1.xpose.msra.mxu0 0.0
    %2500 = vmatprep.subr.mxu0 0.0
    %2501 = vmatpush1.xpose.msra.mxu0 0.0
    %2502 = vmatprep.subr.mxu0 0.0
    %2503 = vmatpush1.xpose.msra.mxu0 0.0
    %2504 = vmatprep.subr.mxu0 0.0
    %2505 = vmatpush1.xpose.msra.mxu0 0.0
    %2506 = vmatprep.mubr.f32.mxu0 0.0
    %2507 = vmatmul.mubr.f32.gmra.mrb[0].mxu0 %v2434
    %v2508 = vpop.f32.mrb[0].mxu0
    %v2509 = vadd.f32 %v98, %v2508
    %v2510 = vpop.f32.mrb[0].mxu0
    %2511 = vmatprep.mubr.f32.mxu0 0.0
    %2512 = vmatmul.mubr.f32.gmra.mrb[0].mxu0 %v2436
    %v2513 = vpop.f32.mrb[0].mxu0
    %v2514 = vadd.f32 %v99, %v2513
    %v2515 = vpop.f32.mrb[0].mxu0
    %2516 = vdwg.mxu0
    %v2517 = vsel %vm286, %v2509, -inf
    %2518 = vmax.xlane.f32.xlu0 %v2517
    %v2519 = vpop.xlane.xlu0 %2518
    %v2520 = vsel %vm286, %v2514, -inf
    %2521 = vmax.xlane.f32.xlu0 %v2520
    %v2522 = vpop.xlane.xlu0 %2521
    %v2523 = vsub.f32 %v2509, %v2519
    %v2524 = vsub.f32 %v2514, %v2522
    %v2525 = vmul.f32 %v2523, 1.442695
    %v2526 = vpow.pop %v2525
    %v2527 = vmul.f32 %v2524, 1.442695
    %v2528 = vpow.pop %v2527
    %v2529 = vsel %vm286, %v2526, 0.0
    %2530 = vadd.xlane.f32.xlu0 %v2529
    %v2531 = vpop.xlane.xlu0 %2530
    %v2532 = vsel %vm286, %v2528, 0.0
    %2533 = vadd.xlane.f32.xlu0 %v2532
    %v2534 = vpop.xlane.xlu0 %2533
    %v2535 = vrcp.pop %v2531
    %v2536 = vmul.f32 %v2526, %v2535
    %v2537 = vrcp.pop %v2534
    %v2538 = vmul.f32 %v2528, %v2537
    %2541 = vrot.lane.b32.xlu0 %v2536, 80
    %v2542 = vpop.permute.xlu0 %2541
    %2543 = vrot.lane.b32.xlu0 %v2538, 80
    %v2544 = vpop.permute.xlu0 %2543
    %vm2547 = vcmask 786048
    %2548 = vst.msk [vmem:[#allocation11] sm:$0xff] %vm2547, %v2542
    %2549 = vst.msk [vmem:[#allocation11 + $0x8] sm:$0xff] %vm2547, %v2544
    %2550 = vrot.lane.b32.xlu0 %v1545, 72
    %v2551 = vpop.permute.xlu0 %2550
    %2552 = vrot.lane.b32.xlu0 %v1550, 72
    %v2553 = vpop.permute.xlu0 %2552
    %v2556 = vsel %vm286, %v2536, 0
    %v2558 = vsel %vm286, %v2538, 0
    %2560 = vmatprep.subr.mxu0 0.0
    %2561 = vmatpush1.msra.mxu0 %v2551
    %2562 = vmatprep.subr.mxu0 0.0
    %2563 = vmatpush1.msra.mxu0 %v2553
    %2564 = vmatprep.subr.mxu0 0.0
    %2565 = vmatpush1.msra.mxu0 0.0
    %2566 = vmatprep.subr.mxu0 0.0
    %2567 = vmatpush1.msra.mxu0 0.0
    %2568 = vmatprep.subr.mxu0 0.0
    %2569 = vmatpush1.msra.mxu0 0.0
    %2570 = vmatprep.subr.mxu0 0.0
    %2571 = vmatpush1.msra.mxu0 0.0
    %2572 = vmatprep.subr.mxu0 0.0
    %2573 = vmatpush1.msra.mxu0 0.0
    %2574 = vmatprep.subr.mxu0 0.0
    %2575 = vmatpush1.msra.mxu0 0.0
    %2576 = vmatprep.subr.mxu0 0.0
    %2577 = vmatpush1.msra.mxu0 0.0
    %2578 = vmatprep.subr.mxu0 0.0
    %2579 = vmatpush1.msra.mxu0 0.0
    %2580 = vmatprep.subr.mxu0 0.0
    %2581 = vmatpush1.msra.mxu0 0.0
    %2582 = vmatprep.subr.mxu0 0.0
    %2583 = vmatpush1.msra.mxu0 0.0
    %2584 = vmatprep.subr.mxu0 0.0
    %2585 = vmatpush1.msra.mxu0 0.0
    %2586 = vmatprep.subr.mxu0 0.0
    %2587 = vmatpush1.msra.mxu0 0.0
    %2588 = vmatprep.subr.mxu0 0.0
    %2589 = vmatpush1.msra.mxu0 0.0
    %2590 = vmatprep.subr.mxu0 0.0
    %2591 = vmatpush1.msra.mxu0 0.0
    %2592 = vmatprep.subr.mxu0 0.0
    %2593 = vmatpush1.msra.mxu0 0.0
    %2594 = vmatprep.subr.mxu0 0.0
    %2595 = vmatpush1.msra.mxu0 0.0
    %2596 = vmatprep.subr.mxu0 0.0
    %2597 = vmatpush1.msra.mxu0 0.0
    %2598 = vmatprep.subr.mxu0 0.0
    %2599 = vmatpush1.msra.mxu0 0.0
    %2600 = vmatprep.subr.mxu0 0.0
    %2601 = vmatpush1.msra.mxu0 0.0
    %2602 = vmatprep.subr.mxu0 0.0
    %2603 = vmatpush1.msra.mxu0 0.0
    %2604 = vmatprep.subr.mxu0 0.0
    %2605 = vmatpush1.msra.mxu0 0.0
    %2606 = vmatprep.subr.mxu0 0.0
    %2607 = vmatpush1.msra.mxu0 0.0
    %2608 = vmatprep.subr.mxu0 0.0
    %2609 = vmatpush1.msra.mxu0 0.0
    %2610 = vmatprep.subr.mxu0 0.0
    %2611 = vmatpush1.msra.mxu0 0.0
    %2612 = vmatprep.subr.mxu0 0.0
    %2613 = vmatpush1.msra.mxu0 0.0
    %2614 = vmatprep.subr.mxu0 0.0
    %2615 = vmatpush1.msra.mxu0 0.0
    %2616 = vmatprep.subr.mxu0 0.0
    %2617 = vmatpush1.msra.mxu0 0.0
    %2618 = vmatprep.subr.mxu0 0.0
    %2619 = vmatpush1.msra.mxu0 0.0
    %2620 = vmatprep.subr.mxu0 0.0
    %2621 = vmatpush1.msra.mxu0 0.0
    %2622 = vmatprep.subr.mxu0 0.0
    %2623 = vmatpush1.msra.mxu0 0.0
    %2624 = vmatprep.mubr.f32.mxu0 0.0
    %2625 = vmatmul.mubr.f32.gmra.mrb[0].mxu0 %v2556
    %v2626 = vpop.f32.mrb[0].mxu0
    %v2627 = vadd.f32 0.0, %v2626
    %v2628 = vpop.f32.mrb[0].mxu0
    %2629 = vmatprep.mubr.f32.mxu0 0.0
    %2630 = vmatmul.mubr.f32.gmra.mrb[0].mxu0 %v2558
    %v2631 = vpop.f32.mrb[0].mxu0
    %v2632 = vadd.f32 0.0, %v2631
    %v2633 = vpop.f32.mrb[0].mxu0
    %2634 = vdwg.mxu0
    %v2636 = vsel %vm202, %v2627, 0
    %v2639 = vsel %vm202, %v2632, 0
    %2641 = vmatprep.subr.mxu0 0.0
    %2642 = vmatpush1.msra.mxu0 %v1556
    %2643 = vmatprep.subr.mxu0 0.0
    %2644 = vmatpush1.msra.mxu0 0.0
    %2645 = vmatprep.subr.mxu0 0.0
    %2646 = vmatpush1.msra.mxu0 0.0
    %2647 = vmatprep.subr.mxu0 0.0
    %2648 = vmatpush1.msra.mxu0 0.0
    %2649 = vmatprep.subr.mxu0 0.0
    %2650 = vmatpush1.msra.mxu0 0.0
    %2651 = vmatprep.subr.mxu0 0.0
    %2652 = vmatpush1.msra.mxu0 0.0
    %2653 = vmatprep.subr.mxu0 0.0
    %2654 = vmatpush1.msra.mxu0 0.0
    %2655 = vmatprep.subr.mxu0 0.0
    %2656 = vmatpush1.msra.mxu0 0.0
    %2657 = vmatprep.subr.mxu0 0.0
    %2658 = vmatpush1.msra.mxu0 0.0
    %2659 = vmatprep.subr.mxu0 0.0
    %2660 = vmatpush1.msra.mxu0 0.0
    %2661 = vmatprep.subr.mxu0 0.0
    %2662 = vmatpush1.msra.mxu0 0.0
    %2663 = vmatprep.subr.mxu0 0.0
    %2664 = vmatpush1.msra.mxu0 0.0
    %2665 = vmatprep.subr.mxu0 0.0
    %2666 = vmatpush1.msra.mxu0 0.0
    %2667 = vmatprep.subr.mxu0 0.0
    %2668 = vmatpush1.msra.mxu0 0.0
    %2669 = vmatprep.subr.mxu0 0.0
    %2670 = vmatpush1.msra.mxu0 0.0
    %2671 = vmatprep.subr.mxu0 0.0
    %2672 = vmatpush1.msra.mxu0 0.0
    %2673 = vmatprep.subr.mxu0 0.0
    %2674 = vmatpush1.msra.mxu0 0.0
    %2675 = vmatprep.subr.mxu0 0.0
    %2676 = vmatpush1.msra.mxu0 0.0
    %2677 = vmatprep.subr.mxu0 0.0
    %2678 = vmatpush1.msra.mxu0 0.0
    %2679 = vmatprep.subr.mxu0 0.0
    %2680 = vmatpush1.msra.mxu0 0.0
    %2681 = vmatprep.subr.mxu0 0.0
    %2682 = vmatpush1.msra.mxu0 0.0
    %2683 = vmatprep.subr.mxu0 0.0
    %2684 = vmatpush1.msra.mxu0 0.0
    %2685 = vmatprep.subr.mxu0 0.0
    %2686 = vmatpush1.msra.mxu0 0.0
    %2687 = vmatprep.subr.mxu0 0.0
    %2688 = vmatpush1.msra.mxu0 0.0
    %2689 = vmatprep.subr.mxu0 0.0
    %2690 = vmatpush1.msra.mxu0 0.0
    %2691 = vmatprep.subr.mxu0 0.0
    %2692 = vmatpush1.msra.mxu0 0.0
    %2693 = vmatprep.subr.mxu0 0.0
    %2694 = vmatpush1.msra.mxu0 0.0
    %2695 = vmatprep.subr.mxu0 0.0
    %2696 = vmatpush1.msra.mxu0 0.0
    %2697 = vmatprep.subr.mxu0 0.0
    %2698 = vmatpush1.msra.mxu0 0.0
    %2699 = vmatprep.subr.mxu0 0.0
    %2700 = vmatpush1.msra.mxu0 0.0
    %2701 = vmatprep.subr.mxu0 0.0
    %2702 = vmatpush1.msra.mxu0 0.0
    %2703 = vmatprep.subr.mxu0 0.0
    %2704 = vmatpush1.msra.mxu0 0.0
    %2705 = vmatprep.mubr.f32.mxu0 0.0
    %2706 = vmatmul.mubr.f32.gmra.mrb[0].mxu0 %v2636
    %v2707 = vpop.f32.mrb[0].mxu0
    %v2708 = vadd.f32 0.0, %v2707
    %v2709 = vpop.f32.mrb[0].mxu0
    %2710 = vmatprep.mubr.f32.mxu0 0.0
    %2711 = vmatmul.mubr.f32.gmra.mrb[0].mxu0 %v2639
    %v2712 = vpop.f32.mrb[0].mxu0
    %v2713 = vadd.f32 0.0, %v2712
    %v2714 = vpop.f32.mrb[0].mxu0
    %2715 = vdwg.mxu0
    %v2716 = vadd.f32 %v2424, %v2708
    %v2717 = vadd.f32 %v2425, %v2713
    %v2718 = vlaneseq
    %v2719 = vshrl.u32 %v2718, 7
    %v2720 = vsub.s32 0, %v2719
    %v2721 = vrot.slane %v1557, %v2720
    %v2722 = vadd.f32 %v2716, %v2721
    %v2723 = vadd.f32 %v2717, %v2721
    %v2724 = vadd.f32 %v1371, %v2722
    %v2725 = vadd.f32 %v1372, %v2723
    %v2726 = vld [vmem:[%s5 + $0x7] sm:$0x1]
    %v2727 = vld [vmem:[%s5 + $0x8] sm:$0x1]
    %v2728 = vsel %vm109, %v2724, 0.0
    %2729 = vadd.xlane.f32.xlu0 %v2728
    %v2730 = vpop.xlane.xlu0 %2729
    %v2731 = vsel %vm109, %v2725, 0.0
    %2732 = vadd.xlane.f32.xlu0 %v2731
    %v2733 = vpop.xlane.xlu0 %2732
    %v2734 = vmul.f32 %v2730, %v1340
    %v2735 = vmul.f32 %v2733, %v1340
    %v2736 = vsub.f32 %v2724, %v2734
    %v2737 = vsub.f32 %v2725, %v2735
    %v2738 = vmul.f32 %v2736, %v2736
    %v2739 = vmul.f32 %v2737, %v2737
    %v2740 = vsel %vm109, %v2738, 0.0
    %2741 = vadd.xlane.f32.xlu0 %v2740
    %v2742 = vpop.xlane.xlu0 %2741
    %v2743 = vsel %vm109, %v2739, 0.0
    %2744 = vadd.xlane.f32.xlu0 %v2743
    %v2745 = vpop.xlane.xlu0 %2744
    %v2746 = vmul.f32 %v2742, %v1340
    %v2747 = vmul.f32 %v2745, %v1340
    %v2748 = vadd.f32 %v2746, 1e-05
    %v2749 = vadd.f32 %v2747, 1e-05
    %v2750 = vrsqrt.pop %v2748
    %v2751 = vrsqrt.pop %v2749
    %v2752 = vmul.f32 %v2736, %v2750
    %v2753 = vmul.f32 %v2737, %v2751
    %v2754 = vlaneseq
    %v2755 = vshrl.u32 %v2754, 7
    %v2756 = vsub.s32 0, %v2755
    %v2757 = vrot.slane %v2726, %v2756
    %v2758 = vmul.f32 %v2752, %v2757
    %v2759 = vmul.f32 %v2753, %v2757
    %v2760 = vlaneseq
    %v2761 = vshrl.u32 %v2760, 7
    %v2762 = vsub.s32 0, %v2761
    %v2763 = vrot.slane %v2727, %v2762
    %v2764 = vadd.f32 %v2758, %v2763
    %v2765 = vadd.f32 %v2759, %v2763
    %v2766 = vld [vmem:[#allocation10 + $0xa0] sm:$0xff]
    %v2767 = vld [vmem:[#allocation10 + $0xa8] sm:$0xff]
    %v2768 = vld [vmem:[#allocation10 + $0xb0] sm:$0xff]
    %v2769 = vld [vmem:[#allocation10 + $0xb8] sm:$0xff]
    %v2770 = vld [vmem:[%s5 + $0x9] sm:$0x1]
    %v2771 = vlaneseq
    %v2772 = vshrl.u32 %v2771, 7
    %v2773 = vsub.s32 0, %v2772
    %v2774 = vrot.slane %v2770, %v2773
    %v2776 = vsel %vm109, %v2764, 0
    %v2779 = vsel %vm109, %v2765, 0
    %2781 = vmatprep.subr.mxu0 0.0
    %2782 = vmatpush1.msra.mxu0 %v2766
    %2783 = vmatprep.subr.mxu0 0.0
    %2784 = vmatpush1.msra.mxu0 %v2767
    %2785 = vmatprep.subr.mxu0 0.0
    %2786 = vmatpush1.msra.mxu0 %v2768
    %2787 = vmatprep.subr.mxu0 0.0
    %2788 = vmatpush1.msra.mxu0 %v2769
    %2789 = vmatprep.subr.mxu0 0.0
    %2790 = vmatpush1.msra.mxu0 0.0
    %2791 = vmatprep.subr.mxu0 0.0
    %2792 = vmatpush1.msra.mxu0 0.0
    %2793 = vmatprep.subr.mxu0 0.0
    %2794 = vmatpush1.msra.mxu0 0.0
    %2795 = vmatprep.subr.mxu0 0.0
    %2796 = vmatpush1.msra.mxu0 0.0
    %2797 = vmatprep.subr.mxu0 0.0
    %2798 = vmatpush1.msra.mxu0 0.0
    %2799 = vmatprep.subr.mxu0 0.0
    %2800 = vmatpush1.msra.mxu0 0.0
    %2801 = vmatprep.subr.mxu0 0.0
    %2802 = vmatpush1.msra.mxu0 0.0
    %2803 = vmatprep.subr.mxu0 0.0
    %2804 = vmatpush1.msra.mxu0 0.0
    %2805 = vmatprep.subr.mxu0 0.0
    %2806 = vmatpush1.msra.mxu0 0.0
    %2807 = vmatprep.subr.mxu0 0.0
    %2808 = vmatpush1.msra.mxu0 0.0
    %2809 = vmatprep.subr.mxu0 0.0
    %2810 = vmatpush1.msra.mxu0 0.0
    %2811 = vmatprep.subr.mxu0 0.0
    %2812 = vmatpush1.msra.mxu0 0.0
    %2813 = vmatprep.subr.mxu0 0.0
    %2814 = vmatpush1.msra.mxu0 0.0
    %2815 = vmatprep.subr.mxu0 0.0
    %2816 = vmatpush1.msra.mxu0 0.0
    %2817 = vmatprep.subr.mxu0 0.0
    %2818 = vmatpush1.msra.mxu0 0.0
    %2819 = vmatprep.subr.mxu0 0.0
    %2820 = vmatpush1.msra.mxu0 0.0
    %2821 = vmatprep.subr.mxu0 0.0
    %2822 = vmatpush1.msra.mxu0 0.0
    %2823 = vmatprep.subr.mxu0 0.0
    %2824 = vmatpush1.msra.mxu0 0.0
    %2825 = vmatprep.subr.mxu0 0.0
    %2826 = vmatpush1.msra.mxu0 0.0
    %2827 = vmatprep.subr.mxu0 0.0
    %2828 = vmatpush1.msra.mxu0 0.0
    %2829 = vmatprep.subr.mxu0 0.0
    %2830 = vmatpush1.msra.mxu0 0.0
    %2831 = vmatprep.subr.mxu0 0.0
    %2832 = vmatpush1.msra.mxu0 0.0
    %2833 = vmatprep.subr.mxu0 0.0
    %2834 = vmatpush1.msra.mxu0 0.0
    %2835 = vmatprep.subr.mxu0 0.0
    %2836 = vmatpush1.msra.mxu0 0.0
    %2837 = vmatprep.subr.mxu0 0.0
    %2838 = vmatpush1.msra.mxu0 0.0
    %2839 = vmatprep.subr.mxu0 0.0
    %2840 = vmatpush1.msra.mxu0 0.0
    %2841 = vmatprep.subr.mxu0 0.0
    %2842 = vmatpush1.msra.mxu0 0.0
    %2843 = vmatprep.subr.mxu0 0.0
    %2844 = vmatpush1.msra.mxu0 0.0
    %2845 = vmatprep.mubr.f32.mxu0 0.0
    %2846 = vmatmul.mubr.f32.gmra.mrb[0].mxu0 %v2776
    %v2847 = vpop.f32.mrb[0].mxu0
    %v2848 = vadd.f32 %v2774, %v2847
    %v2849 = vpop.f32.mrb[0].mxu0
    %2850 = vmatprep.mubr.f32.mxu0 0.0
    %2851 = vmatmul.mubr.f32.gmra.mrb[0].mxu0 %v2779
    %v2852 = vpop.f32.mrb[0].mxu0
    %v2853 = vadd.f32 %v2774, %v2852
    %v2854 = vpop.f32.mrb[0].mxu0
    %2855 = vdwg.mxu0
    %v2856 = vmax.f32 %v2848, 0.0
    %v2857 = vmax.f32 %v2853, 0.0
    %v2858 = vld [vmem:[#allocation10 + $0xc0] sm:$0xff]
    %v2859 = vld [vmem:[#allocation10 + $0xc8] sm:$0xff]
    %v2860 = vld [vmem:[#allocation10 + $0xd0] sm:$0xff]
    %v2861 = vld [vmem:[#allocation10 + $0xd8] sm:$0xff]
    %v2862 = vld [vmem:[#allocation10 + $0xe0] sm:$0xff]
    %v2863 = vld [vmem:[#allocation10 + $0xe8] sm:$0xff]
    %v2864 = vld [vmem:[#allocation10 + $0xf0] sm:$0xff]
    %v2865 = vld [vmem:[#allocation10 + $0xf8] sm:$0xff]
    %v2866 = vld [vmem:[%s5 + $0xa] sm:$0x1]
    %v2867 = vlaneseq
    %v2868 = vshrl.u32 %v2867, 7
    %v2869 = vsub.s32 0, %v2868
    %v2870 = vrot.slane %v2866, %v2869
    %vm2871 = vcmask 523264
    %v2873 = vsel %vm2871, %v2856, 0
    %v2876 = vsel %vm2871, %v2857, 0
    %2878 = vmatprep.subr.mxu0 0.0
    %2879 = vmatpush1.msra.mxu0 %v2858
    %2880 = vmatprep.subr.mxu0 0.0
    %2881 = vmatpush1.msra.mxu0 %v2859
    %2882 = vmatprep.subr.mxu0 0.0
    %2883 = vmatpush1.msra.mxu0 %v2860
    %2884 = vmatprep.subr.mxu0 0.0
    %2885 = vmatpush1.msra.mxu0 %v2861
    %2886 = vmatprep.subr.mxu0 0.0
    %2887 = vmatpush1.msra.mxu0 %v2862
    %2888 = vmatprep.subr.mxu0 0.0
    %2889 = vmatpush1.msra.mxu0 %v2863
    %2890 = vmatprep.subr.mxu0 0.0
    %2891 = vmatpush1.msra.mxu0 %v2864
    %2892 = vmatprep.subr.mxu0 0.0
    %2893 = vmatpush1.msra.mxu0 %v2865
    %2894 = vmatprep.subr.mxu0 0.0
    %2895 = vmatpush1.msra.mxu0 0.0
    %2896 = vmatprep.subr.mxu0 0.0
    %2897 = vmatpush1.msra.mxu0 0.0
    %2898 = vmatprep.subr.mxu0 0.0
    %2899 = vmatpush1.msra.mxu0 0.0
    %2900 = vmatprep.subr.mxu0 0.0
    %2901 = vmatpush1.msra.mxu0 0.0
    %2902 = vmatprep.subr.mxu0 0.0
    %2903 = vmatpush1.msra.mxu0 0.0
    %2904 = vmatprep.subr.mxu0 0.0
    %2905 = vmatpush1.msra.mxu0 0.0
    %2906 = vmatprep.subr.mxu0 0.0
    %2907 = vmatpush1.msra.mxu0 0.0
    %2908 = vmatprep.subr.mxu0 0.0
    %2909 = vmatpush1.msra.mxu0 0.0
    %2910 = vmatprep.subr.mxu0 0.0
    %2911 = vmatpush1.msra.mxu0 0.0
    %2912 = vmatprep.subr.mxu0 0.0
    %2913 = vmatpush1.msra.mxu0 0.0
    %2914 = vmatprep.subr.mxu0 0.0
    %2915 = vmatpush1.msra.mxu0 0.0
    %2916 = vmatprep.subr.mxu0 0.0
    %2917 = vmatpush1.msra.mxu0 0.0
    %2918 = vmatprep.subr.mxu0 0.0
    %2919 = vmatpush1.msra.mxu0 0.0
    %2920 = vmatprep.subr.mxu0 0.0
    %2921 = vmatpush1.msra.mxu0 0.0
    %2922 = vmatprep.subr.mxu0 0.0
    %2923 = vmatpush1.msra.mxu0 0.0
    %2924 = vmatprep.subr.mxu0 0.0
    %2925 = vmatpush1.msra.mxu0 0.0
    %2926 = vmatprep.subr.mxu0 0.0
    %2927 = vmatpush1.msra.mxu0 0.0
    %2928 = vmatprep.subr.mxu0 0.0
    %2929 = vmatpush1.msra.mxu0 0.0
    %2930 = vmatprep.subr.mxu0 0.0
    %2931 = vmatpush1.msra.mxu0 0.0
    %2932 = vmatprep.subr.mxu0 0.0
    %2933 = vmatpush1.msra.mxu0 0.0
    %2934 = vmatprep.subr.mxu0 0.0
    %2935 = vmatpush1.msra.mxu0 0.0
    %2936 = vmatprep.subr.mxu0 0.0
    %2937 = vmatpush1.msra.mxu0 0.0
    %2938 = vmatprep.subr.mxu0 0.0
    %2939 = vmatpush1.msra.mxu0 0.0
    %2940 = vmatprep.subr.mxu0 0.0
    %2941 = vmatpush1.msra.mxu0 0.0
    %2942 = vmatprep.mubr.f32.mxu0 0.0
    %2943 = vmatmul.mubr.f32.gmra.mrb[0].mxu0 %v2873
    %v2944 = vpop.f32.mrb[0].mxu0
    %v2945 = vadd.f32 %v2870, %v2944
    %v2946 = vpop.f32.mrb[0].mxu0
    %2947 = vmatprep.mubr.f32.mxu0 0.0
    %2948 = vmatmul.mubr.f32.gmra.mrb[0].mxu0 %v2876
    %v2949 = vpop.f32.mrb[0].mxu0
    %v2950 = vadd.f32 %v2870, %v2949
    %v2951 = vpop.f32.mrb[0].mxu0
    %2952 = vdwg.mxu0
    %v2953 = vadd.f32 %v2764, %v2945
    %v2954 = vadd.f32 %v2765, %v2950
    %v2955 = vld [vmem:[%s5 + $0xb] sm:$0x1]
    %v2956 = vld [vmem:[%s5 + $0xc] sm:$0x1]
    %v2957 = vsel %vm109, %v2953, 0.0
    %2958 = vadd.xlane.f32.xlu0 %v2957
    %v2959 = vpop.xlane.xlu0 %2958
    %v2960 = vsel %vm109, %v2954, 0.0
    %2961 = vadd.xlane.f32.xlu0 %v2960
    %v2962 = vpop.xlane.xlu0 %2961
    %v2963 = vmul.f32 %v2959, %v1340
    %v2964 = vmul.f32 %v2962, %v1340
    %v2965 = vsub.f32 %v2953, %v2963
    %v2966 = vsub.f32 %v2954, %v2964
    %v2967 = vmul.f32 %v2965, %v2965
    %v2968 = vmul.f32 %v2966, %v2966
    %v2969 = vsel %vm109, %v2967, 0.0
    %2970 = vadd.xlane.f32.xlu0 %v2969
    %v2971 = vpop.xlane.xlu0 %2970
    %v2972 = vsel %vm109, %v2968, 0.0
    %2973 = vadd.xlane.f32.xlu0 %v2972
    %v2974 = vpop.xlane.xlu0 %2973
    %v2975 = vmul.f32 %v2971, %v1340
    %v2976 = vmul.f32 %v2974, %v1340
    %v2977 = vadd.f32 %v2975, 1e-05
    %v2978 = vadd.f32 %v2976, 1e-05
    %v2979 = vrsqrt.pop %v2977
    %v2980 = vrsqrt.pop %v2978
    %v2981 = vmul.f32 %v2965, %v2979
    %v2982 = vmul.f32 %v2966, %v2980
    %v2983 = vlaneseq
    %v2984 = vshrl.u32 %v2983, 7
    %v2985 = vsub.s32 0, %v2984
    %v2986 = vrot.slane %v2955, %v2985
    %v2987 = vmul.f32 %v2981, %v2986
    %v2988 = vmul.f32 %v2982, %v2986
    %v2989 = vlaneseq
    %v2990 = vshrl.u32 %v2989, 7
    %v2991 = vsub.s32 0, %v2990
    %v2992 = vrot.slane %v2956, %v2991
    %v2993 = vadd.f32 %v2987, %v2992
    %v2994 = vadd.f32 %v2988, %v2992
    %2995 = vst.msk [vmem:[#allocation11] sm:$0xff] %vm109, %v2993
    %2996 = vst.msk [vmem:[#allocation11 + $0x8] sm:$0xff] %vm109, %v2994
    // Predicated region
    $region46: #{tpu_custom_call.1} parent=1 // pred_check
      _
    $region47: #{tpu_custom_call.1} parent=1 // pred_check_branch
      %2998 = sbr.rel (0) target = $region49
    $region48: #{tpu_custom_call.1} parent=1 // pred_region
      %s3000 = ssub.s32 256, 256
      %3001 = vsyncadd [#allocation4], %s3000
      %s3002 = sshll.u32 [#allocation11], 4
      %s3003 = int_to_ptr.vmem [resolvable:$true] %s3002
      %3008 = dma.vmem_to_hbm [thread:$0]  %s3003, 256, %s6, [#allocation4], 128, 128, 8
    $region49: #{tpu_custom_call.1} parent=1 // pred_fallthru
      _
    // Predicated region
    $region50: #{tpu_custom_call.1} parent=1 // pred_check
      _
    $region51: #{tpu_custom_call.1} parent=1 // pred_check_branch
      %3010 = sbr.rel (0) target = $region53
    $region52: #{tpu_custom_call.1} parent=1 // pred_region
      %3011 = dma.done [#allocation4], 256
    $region53: #{tpu_custom_call.1} parent=1 // pred_fallthru
      _
    %3012 = vsyncpa [#allocation3], 1
    %3013 = vsyncpa [#allocation6], 1
    %3014 = vsyncpa [#allocation9], 1
    %3015 = vsyncpa [#allocation4], 1

</llo_original>
